<compile_context>
chip_gen: v7x
topology: tpu7x:2x2x1
jax: 0.10.0
libtpu: 0.0.40
codegen_flags: <defaults>
</compile_context>

<pallas_src>
import math
import numpy as np
import jax
import jax.numpy as jnp
from jax.experimental import pallas as pl
from jax.experimental.pallas import tpu as pltpu

VMEM = pl.BlockSpec(memory_space=pltpu.MemorySpace.VMEM)


# ------------------------------ Pallas kernel ------------------------------ #

def _graphormer_kernel(x_ref, niw_ref, deg_ref, zaug_ref,
                       eattr_ref, ewT_ref, ebT_ref,
                       gathT_ref, evecT_ref, spatT_ref, bsp_ref,
                       asel_ref, bsel_ref,
                       wqkv_ref, bqkv_ref, wo_ref, vecs_ref, ffw_ref,
                       now_ref, nob_ref, o_ref):
    """Fully fused Graphormer forward: bias + every layer in one VMEM-resident call."""
    f32 = jnp.float32
    num_layers = wqkv_ref.shape[0]
    n = x_ref.shape[0]
    node_dim = ffw_ref.shape[1]
    hd = wo_ref.shape[1]                       # num_heads * node_dim (lane-dense 128)
    num_heads = hd // node_dim
    n_pos = gathT_ref.shape[0]                 # max_path_distance
    scale = 1.0 / math.sqrt(float(node_dim))   # reference: / query.size(-1) ** 0.5
    nt = (((1,), (1,)), ((), ()))              # dot_general dims for A @ B.T

    def layer_norm(v, g, b):                   # nn.LayerNorm(node_dim), eps=1e-5
        mu = jnp.mean(v, axis=-1, keepdims=True)
        var = jnp.mean(jnp.square(v - mu), axis=-1, keepdims=True)
        return (v - mu) * jax.lax.rsqrt(var + 1e-5) * g + b

    # ---- attention bias (edge encoding + spatial encoding), once, lane-dense ----
    # edge input projection, transposed: e^T = W^T @ edge_attr^T + b^T -> (De, E)
    e_t = jax.lax.dot_general(ewT_ref[...], eattr_ref[...], nt,
                              preferred_element_type=f32) + ebT_ref[...]
    lh = evecT_ref.shape[1]                    # num_layers * num_heads
    c_t = jnp.zeros((lh, n * n), f32)          # column s*n + d = bias of pair (s, d)
    for p in range(n_pos):                     # static unroll, P is tiny
        ge_t = jnp.dot(e_t, gathT_ref[p], preferred_element_type=f32)        # (De, N*N)
        c_t = c_t + jnp.dot(evecT_ref[p], ge_t, preferred_element_type=f32)  # (LH, N*N)
    # spatial encoding (shared by every layer & head): b @ distance-bucket one-hots
    c_t = c_t + jnp.dot(bsp_ref[...], spatT_ref[...], preferred_element_type=f32)
    # NOTE: unreachable pairs keep bias 0 (not -inf), matching the reference's
    # zero-initialised spatial matrix / nan_to_num'd edge encoding.
    asel = asel_ref[...]                       # (N, N*N)   asel[s, k] = [k // N == s]
    bsel = bsel_ref[...]                       # (N*N, N)   bsel[k, d] = [k %  N == d]

    # per-head column masks built in-kernel (no operand): lane j belongs to head j//D
    lane = jax.lax.broadcasted_iota(jnp.int32, (1, hd), 1)
    hmask = [jnp.where((lane >= h * node_dim) & (lane < (h + 1) * node_dim), 1.0, 0.0)
             for h in range(num_heads)]

    # ---- node input projection + centrality encoding (node_in_b folded via ones col)
    x = jnp.dot(x_ref[...], niw_ref[...], preferred_element_type=f32)
    x = x + jnp.dot(deg_ref[...], zaug_ref[...], preferred_element_type=f32)

    for l in range(num_layers):                # static unroll (L = 2)
        sm = vecs_ref[l]                       # (8, D): ln1_g/b, ln2_g/b, ff_b, out_b
        xn = layer_norm(x, sm[0:1], sm[1:2])
        # fused lane-dense QKV: (N, D) @ (D, 3*H*D = 384)
        qkv = jnp.dot(xn, wqkv_ref[l], preferred_element_type=f32) + bqkv_ref[l]
        q = qkv[:, 0:hd]
        k = qkv[:, hd:2 * hd]
        v = qkv[:, 2 * hd:3 * hd]
        pv = jnp.zeros((n, hd), f32)           # concatenated per-head attention outputs
        for h in range(num_heads):             # static unroll (H = 4)
            # per-head scores via head-column mask (no 32-lane-offset slicing)
            a = jax.lax.dot_general(q * hmask[h], k, nt,
                                    preferred_element_type=f32) * scale
            # unflatten this head's bias row (1, N*N) -> (N, N) via 0/1 selectors
            row = c_t[l * num_heads + h:l * num_heads + h + 1, :]
            a = a + jnp.dot(asel * row, bsel, preferred_element_type=f32)
            # ptr is None (single graph) -> plain stable softmax over rows, exact
            a = a - jnp.max(a, axis=-1, keepdims=True)
            pexp = jnp.exp(a)
            prob = pexp / jnp.sum(pexp, axis=-1, keepdims=True)
            pv = pv + jnp.dot(prob, v * hmask[h], preferred_element_type=f32)
        # single UNmasked out-projection for all heads + attention residual
        x = jnp.dot(pv, wo_ref[l], preferred_element_type=f32) + sm[5:6] + x
        xn2 = layer_norm(x, sm[2:3], sm[3:4])
        x = jnp.dot(xn2, ffw_ref[l], preferred_element_type=f32) + sm[4:5] + x

    # global mean pool commutes with the affine output projection: pool first,
    # then (1, D) @ (D, out_dim)
    pooled = jnp.mean(x, axis=0, keepdims=True)
    o_ref[...] = jnp.dot(pooled, now_ref[...], preferred_element_type=f32) + nob_ref[...]


# ------------------------------- forward ----------------------------------- #

def graphormer_forward(packed, x, edge_attr, deg_aug, gath_t, spat_t, asel, bsel):
    out_dim = packed["node_out_w"].shape[1]
    return pl.pallas_call(
        _graphormer_kernel,
        out_shape=jax.ShapeDtypeStruct((1, out_dim), jnp.float32),
        in_specs=[VMEM] * 20,
        out_specs=VMEM,
    )(x, packed["node_in_w"], deg_aug, packed["z_aug"],
      edge_attr, packed["edge_in_wT"], packed["edge_in_bT"],
      gath_t, packed["evec_T"], spat_t, packed["b_sp_row"],
      asel, bsel,
      packed["wqkv"], packed["bqkv"], packed["wo"], packed["vecs"], packed["ff_w"],
      packed["node_out_w"], packed["node_out_b"])


# ------------------------------- parameters -------------------------------- #

def init_params(key, cfg):
    keys = iter(jax.random.split(key, 1024))

    def nrm(shape, scale=0.1):
        return scale * jax.random.normal(next(keys), shape, dtype=jnp.float32)

    D, De, P, H = cfg["node_dim"], cfg["edge_dim"], cfg["max_path_distance"], cfg["num_heads"]
    p = {
        "node_in_w": nrm((cfg["input_node_dim"], D)),
        "node_in_b": nrm((D,)),
        "edge_in_w": nrm((cfg["input_edge_dim"], De)),
        "edge_in_b": nrm((De,)),
        "z_in": nrm((cfg["max_in_degree"], D)),
        "z_out": nrm((cfg["max_out_degree"], D)),
        "b_spatial": nrm((P,)),
        "node_out_w": nrm((D, cfg["output_dim"])),
        "node_out_b": nrm((cfg["output_dim"],)),
        "layers": [],
    }
    for _ in range(cfg["num_layers"]):
        p["layers"].append({
            "wq": nrm((H, D, D)), "bq": nrm((H, 1, D)),
            "wk": nrm((H, D, D)), "bk": nrm((H, 1, D)),
            "wv": nrm((H, D, D)), "bv": nrm((H, 1, D)),
            "edge_vec": nrm((H, P, De)),
            "out_w": nrm((H * D, D)), "out_b": nrm((D,)),
            "ln1_g": jnp.ones((D,), jnp.float32), "ln1_b": jnp.zeros((D,), jnp.float32),
            "ln2_g": jnp.ones((D,), jnp.float32), "ln2_b": jnp.zeros((D,), jnp.float32),
            "ff_w": nrm((D, D)), "ff_b": nrm((D,)),
        })
    return p


def pack_params(params, cfg):
    """One-time host-side re-layout into the few lane-dense slabs the kernel reads."""
    D, H, L = cfg["node_dim"], cfg["num_heads"], cfg["num_layers"]
    P = cfg["max_path_distance"]
    HD = H * D
    layers = params["layers"]

    def fuse_heads(w):                         # (H, D, D) -> (D, H*D) lane-dense
        return jnp.transpose(w, (1, 0, 2)).reshape(D, HD)

    wqkv = jnp.stack([jnp.concatenate(
        [fuse_heads(lp["wq"]), fuse_heads(lp["wk"]), fuse_heads(lp["wv"])], axis=1)
        for lp in layers])                                             # (L, D, 3*H*D)
    bqkv = jnp.stack([jnp.concatenate(
        [lp["bq"].reshape(1, HD), lp["bk"].reshape(1, HD), lp["bv"].reshape(1, HD)],
        axis=1) for lp in layers])                                     # (L, 1, 3*H*D)

    wo = jnp.stack([lp["out_w"] for lp in layers])                     # (L, H*D, D), unmasked

    vecs = jnp.stack([jnp.concatenate(
        [lp["ln1_g"].reshape(1, D), lp["ln1_b"].reshape(1, D),
         lp["ln2_g"].reshape(1, D), lp["ln2_b"].reshape(1, D),
         lp["ff_b"].reshape(1, D), lp["out_b"].reshape(1, D),
         jnp.zeros((2, D), jnp.float32)], axis=0) for lp in layers])   # (L, 8, D)

    ev = jnp.stack([lp["edge_vec"] for lp in layers])                  # (L, H, P, De)
    evec_t = jnp.transpose(ev, (2, 0, 1, 3)).reshape(P, L * H, ev.shape[3])

    # node_in bias folded into the centrality table (consumed via a host ones column)
    z_aug = jnp.concatenate([params["z_in"], params["z_out"],
                             params["node_in_b"].reshape(1, D)], axis=0)

    return dict(
        node_in_w=params["node_in_w"], z_aug=z_aug,
        edge_in_wT=params["edge_in_w"].T,
        edge_in_bT=params["edge_in_b"].reshape(-1, 1),
        b_sp_row=params["b_spatial"].reshape(1, -1),
        node_out_w=params["node_out_w"],
        node_out_b=params["node_out_b"].reshape(1, -1),
        wqkv=wqkv, bqkv=bqkv, wo=wo, vecs=vecs,
        ff_w=jnp.stack([lp["ff_w"] for lp in layers]),
        evec_T=evec_t,
    )


# --------------------- host-side graph preprocessing (glue) ---------------- #
# TODO(synk): shortest-path BFS over Python dicts (floyd_warshall_source_to_all /
# all_pairs_shortest_path) has no Pallas equivalent; done on host like the reference.

def bfs_paths(source, adj, edge_id):
    nextlevel = {source: 1}
    node_paths = {source: [source]}
    edge_paths = {source: []}
    while nextlevel:
        thislevel = nextlevel
        nextlevel = {}
        for v in thislevel:
            for w in adj[v]:
                if w not in node_paths:
                    node_paths[w] = node_paths[v] + [w]
                    edge_paths[w] = edge_paths[v] + [edge_id[(node_paths[w][-2], w)]]
                    nextlevel[w] = 1
    return node_paths, edge_paths


def all_pairs_paths(edge_index, num_nodes):
    edge_id = {}
    adj = {i: [] for i in range(num_nodes)}
    for e in range(edge_index.shape[1]):
        u, v = int(edge_index[0, e]), int(edge_index[1, e])
        if (u, v) not in edge_id:
            edge_id[(u, v)] = e
        adj[u].append(v)
    node_paths, edge_paths = {}, {}
    for src in range(num_nodes):
        np_, ep_ = bfs_paths(src, adj, edge_id)
        node_paths[src] = np_
        edge_paths[src] = ep_
    return node_paths, edge_paths


# ---------------------------------- main ------------------------------------ #

if __name__ == "__main__":
    cfg = dict(
        num_layers=2, node_dim=32, edge_dim=16, output_dim=8, num_heads=4,
        max_in_degree=5, max_out_degree=5, max_path_distance=5,
        input_node_dim=8, input_edge_dim=4,
    )
    N = 16

    # synthetic directed graph: ring + even skip-2 chords
    src, dst = [], []
    for i in range(N):
        src.append(i); dst.append((i + 1) % N)
    for i in range(0, N, 2):
        src.append(i); dst.append((i + 2) % N)
    edge_index = np.asarray([src, dst], dtype=np.int64)
    E = edge_index.shape[1]

    key = jax.random.PRNGKey(0)
    kx, ke, kp = jax.random.split(key, 3)
    x = jax.random.normal(kx, (N, cfg["input_node_dim"]), dtype=jnp.float32)
    edge_attr = jax.random.normal(ke, (E, cfg["input_edge_dim"]), dtype=jnp.float32)

    params = init_params(kp, cfg)
    packed = pack_params(params, cfg)

    # ---- structural preprocessing (graph topology only, no learned params) ----
    # in/out degree one-hots (clamped to the embedding-table size, i.e. max-1,
    # as in the reference's decrease_to_max_value) + a constant ones column that
    # consumes node_in_b through z_aug's last row.
    in_deg = np.zeros(N, np.int64)
    out_deg = np.zeros(N, np.int64)
    for ei in range(E):
        out_deg[edge_index[0, ei]] += 1
        in_deg[edge_index[1, ei]] += 1
    deg_aug = np.zeros((N, cfg["max_in_degree"] + cfg["max_out_degree"] + 1), np.float32)
    for node in range(N):
        deg_aug[node, min(int(in_deg[node]), cfg["max_in_degree"] - 1)] = 1.0
        deg_aug[node, cfg["max_in_degree"]
                + min(int(out_deg[node]), cfg["max_out_degree"] - 1)] = 1.0
        deg_aug[node, -1] = 1.0

    node_paths, edge_paths = all_pairs_paths(edge_index, N)
    P = cfg["max_path_distance"]

    # spatial-encoding distance-bucket one-hots, transposed / lane-dense: (P, N*N).
    # Unreachable pairs stay zero (bias 0), matching the reference's zero-init b.
    spat_t = np.zeros((P, N * N), np.float32)
    for s, dd in node_paths.items():
        for d, path in dd.items():
            spat_t[min(len(path), P) - 1, s * N + d] = 1.0

    # edge-encoding gather matrices per path position, transposed / lane-dense:
    # gath_t[p, eid, s*N+d] = 1/len(trunc path) if eid is the p-th edge on s->d.
    gath_t = np.zeros((P, E, N * N), np.float32)
    for s, dd in edge_paths.items():
        for d, ep in dd.items():
            ep = ep[:P]
            if not ep:
                continue
            inv = 1.0 / float(len(ep))
            for t, eid in enumerate(ep):
                gath_t[t, eid, s * N + d] = inv

    # 0/1 selector matrices: unflatten a (1, N*N) bias row into (N, N) with two
    # MXU matmuls inside the kernel (no in-kernel reshape / lane gather).
    asel = np.zeros((N, N * N), np.float32)
    bsel = np.zeros((N * N, N), np.float32)
    for s in range(N):
        asel[s, s * N:(s + 1) * N] = 1.0
    for kk in range(N * N):
        bsel[kk, kk % N] = 1.0

    fwd = jax.jit(graphormer_forward)
    out = fwd(packed, x, edge_attr,
              jnp.asarray(deg_aug), jnp.asarray(gath_t), jnp.asarray(spat_t),
              jnp.asarray(asel), jnp.asarray(bsel))
    out = jax.block_until_ready(out)
    assert out.shape == (1, cfg["output_dim"])
    assert bool(jnp.all(jnp.isfinite(out)))
    print("KERNEL_OK")
</pallas_src>

<mosaic_0001>
module attributes {stable_mosaic.version = 11 : i64} {
  func.func @_graphormer_kernel(%arg0: memref<16x8xf32, #tpu.memory_space<vmem>>, %arg1: memref<8x32xf32, #tpu.memory_space<vmem>>, %arg2: memref<16x11xf32, #tpu.memory_space<vmem>>, %arg3: memref<11x32xf32, #tpu.memory_space<vmem>>, %arg4: memref<24x4xf32, #tpu.memory_space<vmem>>, %arg5: memref<16x4xf32, #tpu.memory_space<vmem>>, %arg6: memref<16x1xf32, #tpu.memory_space<vmem>>, %arg7: memref<5x24x256xf32, #tpu.memory_space<vmem>>, %arg8: memref<5x8x16xf32, #tpu.memory_space<vmem>>, %arg9: memref<5x256xf32, #tpu.memory_space<vmem>>, %arg10: memref<1x5xf32, #tpu.memory_space<vmem>>, %arg11: memref<16x256xf32, #tpu.memory_space<vmem>>, %arg12: memref<256x16xf32, #tpu.memory_space<vmem>>, %arg13: memref<2x32x384xf32, #tpu.memory_space<vmem>>, %arg14: memref<2x1x384xf32, #tpu.memory_space<vmem>>, %arg15: memref<2x128x32xf32, #tpu.memory_space<vmem>>, %arg16: memref<2x8x32xf32, #tpu.memory_space<vmem>>, %arg17: memref<2x32x32xf32, #tpu.memory_space<vmem>>, %arg18: memref<32x8xf32, #tpu.memory_space<vmem>>, %arg19: memref<1x8xf32, #tpu.memory_space<vmem>>, %arg20: memref<1x8xf32, #tpu.memory_space<vmem>>) attributes {dimension_semantics = [], scalar_prefetch = 0 : i64, scratch_operands = 0 : i64, tpu.core_type = #tpu.core_type<tc>} {
    %c0 = arith.constant 0 : index
    %c0_0 = arith.constant 0 : index
    %0 = vector.load %arg5[%c0, %c0_0] : memref<16x4xf32, #tpu.memory_space<vmem>>, vector<16x4xf32>
    %c0_1 = arith.constant 0 : index
    %c0_2 = arith.constant 0 : index
    %1 = vector.load %arg4[%c0_1, %c0_2] : memref<24x4xf32, #tpu.memory_space<vmem>>, vector<24x4xf32>
    %cst = arith.constant dense<0.000000e+00> : vector<16x24xf32>
    %2 = tpu.matmul %0, %1, %cst {dimension_numbers = #tpu.dot_dimension_numbers<[1], [1], [0], [0], [0, 0, 1, 0], [], []>} : vector<16x4xf32>, vector<24x4xf32>, vector<16x24xf32> -> vector<16x24xf32>
    %c0_3 = arith.constant 0 : index
    %c0_4 = arith.constant 0 : index
    %3 = vector.load %arg6[%c0_3, %c0_4] : memref<16x1xf32, #tpu.memory_space<vmem>>, vector<16x1xf32>
    %4 = vector.broadcast %3 : vector<16x1xf32> to vector<16x24xf32>
    %5 = arith.addf %2, %4 : vector<16x24xf32>
    %cst_5 = arith.constant 0.000000e+00 : f32
    %6 = vector.broadcast %cst_5 : f32 to vector<8x256xf32>
    %c0_6 = arith.constant 0 : index
    %c0_7 = arith.constant 0 : index
    %c0_8 = arith.constant 0 : index
    %7 = vector.load %arg7[%c0_6, %c0_7, %c0_8] : memref<5x24x256xf32, #tpu.memory_space<vmem>>, vector<1x24x256xf32>
    %8 = vector.shape_cast %7 : vector<1x24x256xf32> to vector<24x256xf32>
    %cst_9 = arith.constant dense<0.000000e+00> : vector<16x256xf32>
    %9 = tpu.matmul %5, %8, %cst_9 {dimension_numbers = #tpu.dot_dimension_numbers<[1], [0], [0], [1], [0, 0, 1, 1], [], []>} : vector<16x24xf32>, vector<24x256xf32>, vector<16x256xf32> -> vector<16x256xf32>
    %c0_10 = arith.constant 0 : index
    %c0_11 = arith.constant 0 : index
    %c0_12 = arith.constant 0 : index
    %10 = vector.load %arg8[%c0_10, %c0_11, %c0_12] : memref<5x8x16xf32, #tpu.memory_space<vmem>>, vector<1x8x16xf32>
    %11 = vector.shape_cast %10 : vector<1x8x16xf32> to vector<8x16xf32>
    %cst_13 = arith.constant dense<0.000000e+00> : vector<8x256xf32>
    %12 = tpu.matmul %11, %9, %cst_13 {dimension_numbers = #tpu.dot_dimension_numbers<[1], [0], [0], [1], [0, 0, 1, 1], [], []>} : vector<8x16xf32>, vector<16x256xf32>, vector<8x256xf32> -> vector<8x256xf32>
    %13 = arith.addf %6, %12 : vector<8x256xf32>
    %c1 = arith.constant 1 : index
    %c0_14 = arith.constant 0 : index
    %c0_15 = arith.constant 0 : index
    %14 = vector.load %arg7[%c1, %c0_14, %c0_15] : memref<5x24x256xf32, #tpu.memory_space<vmem>>, vector<1x24x256xf32>
    %15 = vector.shape_cast %14 : vector<1x24x256xf32> to vector<24x256xf32>
    %cst_16 = arith.constant dense<0.000000e+00> : vector<16x256xf32>
    %16 = tpu.matmul %5, %15, %cst_16 {dimension_numbers = #tpu.dot_dimension_numbers<[1], [0], [0], [1], [0, 0, 1, 1], [], []>} : vector<16x24xf32>, vector<24x256xf32>, vector<16x256xf32> -> vector<16x256xf32>
    %c1_17 = arith.constant 1 : index
    %c0_18 = arith.constant 0 : index
    %c0_19 = arith.constant 0 : index
    %17 = vector.load %arg8[%c1_17, %c0_18, %c0_19] : memref<5x8x16xf32, #tpu.memory_space<vmem>>, vector<1x8x16xf32>
    %18 = vector.shape_cast %17 : vector<1x8x16xf32> to vector<8x16xf32>
    %cst_20 = arith.constant dense<0.000000e+00> : vector<8x256xf32>
    %19 = tpu.matmul %18, %16, %cst_20 {dimension_numbers = #tpu.dot_dimension_numbers<[1], [0], [0], [1], [0, 0, 1, 1], [], []>} : vector<8x16xf32>, vector<16x256xf32>, vector<8x256xf32> -> vector<8x256xf32>
    %20 = arith.addf %13, %19 : vector<8x256xf32>
    %c2 = arith.constant 2 : index
    %c0_21 = arith.constant 0 : index
    %c0_22 = arith.constant 0 : index
    %21 = vector.load %arg7[%c2, %c0_21, %c0_22] : memref<5x24x256xf32, #tpu.memory_space<vmem>>, vector<1x24x256xf32>
    %22 = vector.shape_cast %21 : vector<1x24x256xf32> to vector<24x256xf32>
    %cst_23 = arith.constant dense<0.000000e+00> : vector<16x256xf32>
    %23 = tpu.matmul %5, %22, %cst_23 {dimension_numbers = #tpu.dot_dimension_numbers<[1], [0], [0], [1], [0, 0, 1, 1], [], []>} : vector<16x24xf32>, vector<24x256xf32>, vector<16x256xf32> -> vector<16x256xf32>
    %c2_24 = arith.constant 2 : index
    %c0_25 = arith.constant 0 : index
    %c0_26 = arith.constant 0 : index
    %24 = vector.load %arg8[%c2_24, %c0_25, %c0_26] : memref<5x8x16xf32, #tpu.memory_space<vmem>>, vector<1x8x16xf32>
    %25 = vector.shape_cast %24 : vector<1x8x16xf32> to vector<8x16xf32>
    %cst_27 = arith.constant dense<0.000000e+00> : vector<8x256xf32>
    %26 = tpu.matmul %25, %23, %cst_27 {dimension_numbers = #tpu.dot_dimension_numbers<[1], [0], [0], [1], [0, 0, 1, 1], [], []>} : vector<8x16xf32>, vector<16x256xf32>, vector<8x256xf32> -> vector<8x256xf32>
    %27 = arith.addf %20, %26 : vector<8x256xf32>
    %c3 = arith.constant 3 : index
    %c0_28 = arith.constant 0 : index
    %c0_29 = arith.constant 0 : index
    %28 = vector.load %arg7[%c3, %c0_28, %c0_29] : memref<5x24x256xf32, #tpu.memory_space<vmem>>, vector<1x24x256xf32>
    %29 = vector.shape_cast %28 : vector<1x24x256xf32> to vector<24x256xf32>
    %cst_30 = arith.constant dense<0.000000e+00> : vector<16x256xf32>
    %30 = tpu.matmul %5, %29, %cst_30 {dimension_numbers = #tpu.dot_dimension_numbers<[1], [0], [0], [1], [0, 0, 1, 1], [], []>} : vector<16x24xf32>, vector<24x256xf32>, vector<16x256xf32> -> vector<16x256xf32>
    %c3_31 = arith.constant 3 : index
    %c0_32 = arith.constant 0 : index
    %c0_33 = arith.constant 0 : index
    %31 = vector.load %arg8[%c3_31, %c0_32, %c0_33] : memref<5x8x16xf32, #tpu.memory_space<vmem>>, vector<1x8x16xf32>
    %32 = vector.shape_cast %31 : vector<1x8x16xf32> to vector<8x16xf32>
    %cst_34 = arith.constant dense<0.000000e+00> : vector<8x256xf32>
    %33 = tpu.matmul %32, %30, %cst_34 {dimension_numbers = #tpu.dot_dimension_numbers<[1], [0], [0], [1], [0, 0, 1, 1], [], []>} : vector<8x16xf32>, vector<16x256xf32>, vector<8x256xf32> -> vector<8x256xf32>
    %34 = arith.addf %27, %33 : vector<8x256xf32>
    %c4 = arith.constant 4 : index
    %c0_35 = arith.constant 0 : index
    %c0_36 = arith.constant 0 : index
    %35 = vector.load %arg7[%c4, %c0_35, %c0_36] : memref<5x24x256xf32, #tpu.memory_space<vmem>>, vector<1x24x256xf32>
    %36 = vector.shape_cast %35 : vector<1x24x256xf32> to vector<24x256xf32>
    %cst_37 = arith.constant dense<0.000000e+00> : vector<16x256xf32>
    %37 = tpu.matmul %5, %36, %cst_37 {dimension_numbers = #tpu.dot_dimension_numbers<[1], [0], [0], [1], [0, 0, 1, 1], [], []>} : vector<16x24xf32>, vector<24x256xf32>, vector<16x256xf32> -> vector<16x256xf32>
    %c4_38 = arith.constant 4 : index
    %c0_39 = arith.constant 0 : index
    %c0_40 = arith.constant 0 : index
    %38 = vector.load %arg8[%c4_38, %c0_39, %c0_40] : memref<5x8x16xf32, #tpu.memory_space<vmem>>, vector<1x8x16xf32>
    %39 = vector.shape_cast %38 : vector<1x8x16xf32> to vector<8x16xf32>
    %cst_41 = arith.constant dense<0.000000e+00> : vector<8x256xf32>
    %40 = tpu.matmul %39, %37, %cst_41 {dimension_numbers = #tpu.dot_dimension_numbers<[1], [0], [0], [1], [0, 0, 1, 1], [], []>} : vector<8x16xf32>, vector<16x256xf32>, vector<8x256xf32> -> vector<8x256xf32>
    %41 = arith.addf %34, %40 : vector<8x256xf32>
    %c0_42 = arith.constant 0 : index
    %c0_43 = arith.constant 0 : index
    %42 = vector.load %arg10[%c0_42, %c0_43] : memref<1x5xf32, #tpu.memory_space<vmem>>, vector<1x5xf32>
    %c0_44 = arith.constant 0 : index
    %c0_45 = arith.constant 0 : index
    %43 = vector.load %arg9[%c0_44, %c0_45] : memref<5x256xf32, #tpu.memory_space<vmem>>, vector<5x256xf32>
    %cst_46 = arith.constant dense<0.000000e+00> : vector<1x256xf32>
    %44 = tpu.matmul %42, %43, %cst_46 {dimension_numbers = #tpu.dot_dimension_numbers<[1], [0], [0], [1], [0, 0, 1, 1], [], []>} : vector<1x5xf32>, vector<5x256xf32>, vector<1x256xf32> -> vector<1x256xf32>
    %45 = vector.broadcast %44 : vector<1x256xf32> to vector<8x256xf32>
    %46 = arith.addf %41, %45 : vector<8x256xf32>
    %c0_47 = arith.constant 0 : index
    %c0_48 = arith.constant 0 : index
    %47 = vector.load %arg11[%c0_47, %c0_48] : memref<16x256xf32, #tpu.memory_space<vmem>>, vector<16x256xf32>
    %c0_49 = arith.constant 0 : index
    %c0_50 = arith.constant 0 : index
    %48 = vector.load %arg12[%c0_49, %c0_50] : memref<256x16xf32, #tpu.memory_space<vmem>>, vector<256x16xf32>
    %49 = tpu.iota {dimensions = array<i32: 1>} : vector<1x128xi32>
    %c0_i32 = arith.constant 0 : i32
    %50 = vector.broadcast %c0_i32 : i32 to vector<1x128xi32>
    %51 = arith.cmpi sge, %49, %50 : vector<1x128xi32>
    %c32_i32 = arith.constant 32 : i32
    %52 = vector.broadcast %c32_i32 : i32 to vector<1x128xi32>
    %53 = arith.cmpi slt, %49, %52 : vector<1x128xi32>
    %54 = arith.andi %51, %53 : vector<1x128xi1>
    %cst_51 = arith.constant 1.000000e+00 : f32
    %cst_52 = arith.constant 0.000000e+00 : f32
    %55 = vector.broadcast %cst_51 : f32 to vector<1x128xf32>
    %56 = vector.broadcast %cst_52 : f32 to vector<1x128xf32>
    %57 = arith.select %54, %55, %56 : vector<1x128xi1>, vector<1x128xf32>
    %c32_i32_53 = arith.constant 32 : i32
    %58 = vector.broadcast %c32_i32_53 : i32 to vector<1x128xi32>
    %59 = arith.cmpi sge, %49, %58 : vector<1x128xi32>
    %c64_i32 = arith.constant 64 : i32
    %60 = vector.broadcast %c64_i32 : i32 to vector<1x128xi32>
    %61 = arith.cmpi slt, %49, %60 : vector<1x128xi32>
    %62 = arith.andi %59, %61 : vector<1x128xi1>
    %cst_54 = arith.constant 1.000000e+00 : f32
    %cst_55 = arith.constant 0.000000e+00 : f32
    %63 = vector.broadcast %cst_54 : f32 to vector<1x128xf32>
    %64 = vector.broadcast %cst_55 : f32 to vector<1x128xf32>
    %65 = arith.select %62, %63, %64 : vector<1x128xi1>, vector<1x128xf32>
    %c64_i32_56 = arith.constant 64 : i32
    %66 = vector.broadcast %c64_i32_56 : i32 to vector<1x128xi32>
    %67 = arith.cmpi sge, %49, %66 : vector<1x128xi32>
    %c96_i32 = arith.constant 96 : i32
    %68 = vector.broadcast %c96_i32 : i32 to vector<1x128xi32>
    %69 = arith.cmpi slt, %49, %68 : vector<1x128xi32>
    %70 = arith.andi %67, %69 : vector<1x128xi1>
    %cst_57 = arith.constant 1.000000e+00 : f32
    %cst_58 = arith.constant 0.000000e+00 : f32
    %71 = vector.broadcast %cst_57 : f32 to vector<1x128xf32>
    %72 = vector.broadcast %cst_58 : f32 to vector<1x128xf32>
    %73 = arith.select %70, %71, %72 : vector<1x128xi1>, vector<1x128xf32>
    %c96_i32_59 = arith.constant 96 : i32
    %74 = vector.broadcast %c96_i32_59 : i32 to vector<1x128xi32>
    %75 = arith.cmpi sge, %49, %74 : vector<1x128xi32>
    %c128_i32 = arith.constant 128 : i32
    %76 = vector.broadcast %c128_i32 : i32 to vector<1x128xi32>
    %77 = arith.cmpi slt, %49, %76 : vector<1x128xi32>
    %78 = arith.andi %75, %77 : vector<1x128xi1>
    %cst_60 = arith.constant 1.000000e+00 : f32
    %cst_61 = arith.constant 0.000000e+00 : f32
    %79 = vector.broadcast %cst_60 : f32 to vector<1x128xf32>
    %80 = vector.broadcast %cst_61 : f32 to vector<1x128xf32>
    %81 = arith.select %78, %79, %80 : vector<1x128xi1>, vector<1x128xf32>
    %c0_62 = arith.constant 0 : index
    %c0_63 = arith.constant 0 : index
    %82 = vector.load %arg0[%c0_62, %c0_63] : memref<16x8xf32, #tpu.memory_space<vmem>>, vector<16x8xf32>
    %c0_64 = arith.constant 0 : index
    %c0_65 = arith.constant 0 : index
    %83 = vector.load %arg1[%c0_64, %c0_65] : memref<8x32xf32, #tpu.memory_space<vmem>>, vector<8x32xf32>
    %cst_66 = arith.constant dense<0.000000e+00> : vector<16x32xf32>
    %84 = tpu.matmul %82, %83, %cst_66 {dimension_numbers = #tpu.dot_dimension_numbers<[1], [0], [0], [1], [0, 0, 1, 1], [], []>} : vector<16x8xf32>, vector<8x32xf32>, vector<16x32xf32> -> vector<16x32xf32>
    %c0_67 = arith.constant 0 : index
    %c0_68 = arith.constant 0 : index
    %85 = vector.load %arg2[%c0_67, %c0_68] : memref<16x11xf32, #tpu.memory_space<vmem>>, vector<16x11xf32>
    %c0_69 = arith.constant 0 : index
    %c0_70 = arith.constant 0 : index
    %86 = vector.load %arg3[%c0_69, %c0_70] : memref<11x32xf32, #tpu.memory_space<vmem>>, vector<11x32xf32>
    %cst_71 = arith.constant dense<0.000000e+00> : vector<16x32xf32>
    %87 = tpu.matmul %85, %86, %cst_71 {dimension_numbers = #tpu.dot_dimension_numbers<[1], [0], [0], [1], [0, 0, 1, 1], [], []>} : vector<16x11xf32>, vector<11x32xf32>, vector<16x32xf32> -> vector<16x32xf32>
    %88 = arith.addf %84, %87 : vector<16x32xf32>
    %c0_72 = arith.constant 0 : index
    %c0_73 = arith.constant 0 : index
    %c0_74 = arith.constant 0 : index
    %89 = vector.load %arg16[%c0_72, %c0_73, %c0_74] : memref<2x8x32xf32, #tpu.memory_space<vmem>>, vector<1x8x32xf32>
    %90 = vector.shape_cast %89 : vector<1x8x32xf32> to vector<8x32xf32>
    %91 = vector.extract_strided_slice %90 {offsets = [0, 0], sizes = [1, 32], strides = [1, 1]} : vector<8x32xf32> to vector<1x32xf32>
    %92 = vector.extract_strided_slice %90 {offsets = [1, 0], sizes = [1, 32], strides = [1, 1]} : vector<8x32xf32> to vector<1x32xf32>
    %cst_75 = arith.constant dense<0.000000e+00> : vector<16xf32>
    %93 = vector.multi_reduction <add>, %88, %cst_75 [1] : vector<16x32xf32> to vector<16xf32>
    %94 = vector.shape_cast %93 : vector<16xf32> to vector<16x1xf32>
    %cst_76 = arith.constant 3.200000e+01 : f32
    %95 = vector.broadcast %cst_76 : f32 to vector<16x1xf32>
    %96 = arith.divf %94, %95 : vector<16x1xf32>
    %97 = vector.broadcast %96 : vector<16x1xf32> to vector<16x32xf32>
    %98 = arith.subf %88, %97 : vector<16x32xf32>
    %99 = arith.mulf %98, %98 : vector<16x32xf32>
    %cst_77 = arith.constant dense<0.000000e+00> : vector<16xf32>
    %100 = vector.multi_reduction <add>, %99, %cst_77 [1] : vector<16x32xf32> to vector<16xf32>
    %101 = vector.shape_cast %100 : vector<16xf32> to vector<16x1xf32>
    %cst_78 = arith.constant 3.200000e+01 : f32
    %102 = vector.broadcast %cst_78 : f32 to vector<16x1xf32>
    %103 = arith.divf %101, %102 : vector<16x1xf32>
    %104 = vector.broadcast %96 : vector<16x1xf32> to vector<16x32xf32>
    %105 = arith.subf %88, %104 : vector<16x32xf32>
    %cst_79 = arith.constant 9.99999974E-6 : f32
    %106 = vector.broadcast %cst_79 : f32 to vector<16x1xf32>
    %107 = arith.addf %103, %106 : vector<16x1xf32>
    %108 = math.rsqrt %107 : vector<16x1xf32>
    %109 = vector.broadcast %108 : vector<16x1xf32> to vector<16x32xf32>
    %110 = arith.mulf %105, %109 : vector<16x32xf32>
    %111 = vector.broadcast %91 : vector<1x32xf32> to vector<16x32xf32>
    %112 = arith.mulf %110, %111 : vector<16x32xf32>
    %113 = vector.broadcast %92 : vector<1x32xf32> to vector<16x32xf32>
    %114 = arith.addf %112, %113 : vector<16x32xf32>
    %c0_80 = arith.constant 0 : index
    %c0_81 = arith.constant 0 : index
    %c0_82 = arith.constant 0 : index
    %115 = vector.load %arg13[%c0_80, %c0_81, %c0_82] : memref<2x32x384xf32, #tpu.memory_space<vmem>>, vector<1x32x384xf32>
    %116 = vector.shape_cast %115 : vector<1x32x384xf32> to vector<32x384xf32>
    %cst_83 = arith.constant dense<0.000000e+00> : vector<16x384xf32>
    %117 = tpu.matmul %114, %116, %cst_83 {dimension_numbers = #tpu.dot_dimension_numbers<[1], [0], [0], [1], [0, 0, 1, 1], [], []>} : vector<16x32xf32>, vector<32x384xf32>, vector<16x384xf32> -> vector<16x384xf32>
    %c0_84 = arith.constant 0 : index
    %c0_85 = arith.constant 0 : index
    %c0_86 = arith.constant 0 : index
    %118 = vector.load %arg14[%c0_84, %c0_85, %c0_86] : memref<2x1x384xf32, #tpu.memory_space<vmem>>, vector<1x1x384xf32>
    %119 = vector.shape_cast %118 : vector<1x1x384xf32> to vector<1x384xf32>
    %120 = vector.broadcast %119 : vector<1x384xf32> to vector<16x384xf32>
    %121 = arith.addf %117, %120 : vector<16x384xf32>
    %122 = vector.extract_strided_slice %121 {offsets = [0, 0], sizes = [16, 128], strides = [1, 1]} : vector<16x384xf32> to vector<16x128xf32>
    %123 = vector.extract_strided_slice %121 {offsets = [0, 128], sizes = [16, 128], strides = [1, 1]} : vector<16x384xf32> to vector<16x128xf32>
    %124 = vector.extract_strided_slice %121 {offsets = [0, 256], sizes = [16, 128], strides = [1, 1]} : vector<16x384xf32> to vector<16x128xf32>
    %cst_87 = arith.constant 0.000000e+00 : f32
    %125 = vector.broadcast %cst_87 : f32 to vector<16x128xf32>
    %126 = vector.broadcast %57 : vector<1x128xf32> to vector<16x128xf32>
    %127 = arith.mulf %122, %126 : vector<16x128xf32>
    %cst_88 = arith.constant dense<0.000000e+00> : vector<16x16xf32>
    %128 = tpu.matmul %127, %123, %cst_88 {dimension_numbers = #tpu.dot_dimension_numbers<[1], [1], [0], [0], [0, 0, 1, 0], [], []>} : vector<16x128xf32>, vector<16x128xf32>, vector<16x16xf32> -> vector<16x16xf32>
    %cst_89 = arith.constant 0.176776692 : f32
    %129 = vector.broadcast %cst_89 : f32 to vector<16x16xf32>
    %130 = arith.mulf %128, %129 : vector<16x16xf32>
    %131 = vector.extract_strided_slice %46 {offsets = [0, 0], sizes = [1, 256], strides = [1, 1]} : vector<8x256xf32> to vector<1x256xf32>
    %132 = vector.broadcast %131 : vector<1x256xf32> to vector<16x256xf32>
    %133 = arith.mulf %47, %132 : vector<16x256xf32>
    %cst_90 = arith.constant dense<0.000000e+00> : vector<16x16xf32>
    %134 = tpu.matmul %133, %48, %cst_90 {dimension_numbers = #tpu.dot_dimension_numbers<[1], [0], [0], [1], [0, 0, 1, 1], [], []>} : vector<16x256xf32>, vector<256x16xf32>, vector<16x16xf32> -> vector<16x16xf32>
    %135 = arith.addf %130, %134 : vector<16x16xf32>
    %cst_91 = arith.constant dense<0xFF800000> : vector<16xf32>
    %136 = vector.multi_reduction <maximumf>, %135, %cst_91 [1] : vector<16x16xf32> to vector<16xf32>
    %137 = vector.shape_cast %136 : vector<16xf32> to vector<16x1xf32>
    %138 = vector.broadcast %137 : vector<16x1xf32> to vector<16x16xf32>
    %139 = arith.subf %135, %138 : vector<16x16xf32>
    %140 = math.exp %139 : vector<16x16xf32>
    %cst_92 = arith.constant dense<0.000000e+00> : vector<16xf32>
    %141 = vector.multi_reduction <add>, %140, %cst_92 [1] : vector<16x16xf32> to vector<16xf32>
    %142 = vector.shape_cast %141 : vector<16xf32> to vector<16x1xf32>
    %143 = vector.broadcast %142 : vector<16x1xf32> to vector<16x16xf32>
    %144 = arith.divf %140, %143 : vector<16x16xf32>
    %145 = vector.broadcast %57 : vector<1x128xf32> to vector<16x128xf32>
    %146 = arith.mulf %124, %145 : vector<16x128xf32>
    %cst_93 = arith.constant dense<0.000000e+00> : vector<16x128xf32>
    %147 = tpu.matmul %144, %146, %cst_93 {dimension_numbers = #tpu.dot_dimension_numbers<[1], [0], [0], [1], [0, 0, 1, 1], [], []>} : vector<16x16xf32>, vector<16x128xf32>, vector<16x128xf32> -> vector<16x128xf32>
    %148 = arith.addf %125, %147 : vector<16x128xf32>
    %149 = vector.broadcast %65 : vector<1x128xf32> to vector<16x128xf32>
    %150 = arith.mulf %122, %149 : vector<16x128xf32>
    %cst_94 = arith.constant dense<0.000000e+00> : vector<16x16xf32>
    %151 = tpu.matmul %150, %123, %cst_94 {dimension_numbers = #tpu.dot_dimension_numbers<[1], [1], [0], [0], [0, 0, 1, 0], [], []>} : vector<16x128xf32>, vector<16x128xf32>, vector<16x16xf32> -> vector<16x16xf32>
    %cst_95 = arith.constant 0.176776692 : f32
    %152 = vector.broadcast %cst_95 : f32 to vector<16x16xf32>
    %153 = arith.mulf %151, %152 : vector<16x16xf32>
    %154 = vector.extract_strided_slice %46 {offsets = [1, 0], sizes = [1, 256], strides = [1, 1]} : vector<8x256xf32> to vector<1x256xf32>
    %155 = vector.broadcast %154 : vector<1x256xf32> to vector<16x256xf32>
    %156 = arith.mulf %47, %155 : vector<16x256xf32>
    %cst_96 = arith.constant dense<0.000000e+00> : vector<16x16xf32>
    %157 = tpu.matmul %156, %48, %cst_96 {dimension_numbers = #tpu.dot_dimension_numbers<[1], [0], [0], [1], [0, 0, 1, 1], [], []>} : vector<16x256xf32>, vector<256x16xf32>, vector<16x16xf32> -> vector<16x16xf32>
    %158 = arith.addf %153, %157 : vector<16x16xf32>
    %cst_97 = arith.constant dense<0xFF800000> : vector<16xf32>
    %159 = vector.multi_reduction <maximumf>, %158, %cst_97 [1] : vector<16x16xf32> to vector<16xf32>
    %160 = vector.shape_cast %159 : vector<16xf32> to vector<16x1xf32>
    %161 = vector.broadcast %160 : vector<16x1xf32> to vector<16x16xf32>
    %162 = arith.subf %158, %161 : vector<16x16xf32>
    %163 = math.exp %162 : vector<16x16xf32>
    %cst_98 = arith.constant dense<0.000000e+00> : vector<16xf32>
    %164 = vector.multi_reduction <add>, %163, %cst_98 [1] : vector<16x16xf32> to vector<16xf32>
    %165 = vector.shape_cast %164 : vector<16xf32> to vector<16x1xf32>
    %166 = vector.broadcast %165 : vector<16x1xf32> to vector<16x16xf32>
    %167 = arith.divf %163, %166 : vector<16x16xf32>
    %168 = vector.broadcast %65 : vector<1x128xf32> to vector<16x128xf32>
    %169 = arith.mulf %124, %168 : vector<16x128xf32>
    %cst_99 = arith.constant dense<0.000000e+00> : vector<16x128xf32>
    %170 = tpu.matmul %167, %169, %cst_99 {dimension_numbers = #tpu.dot_dimension_numbers<[1], [0], [0], [1], [0, 0, 1, 1], [], []>} : vector<16x16xf32>, vector<16x128xf32>, vector<16x128xf32> -> vector<16x128xf32>
    %171 = arith.addf %148, %170 : vector<16x128xf32>
    %172 = vector.broadcast %73 : vector<1x128xf32> to vector<16x128xf32>
    %173 = arith.mulf %122, %172 : vector<16x128xf32>
    %cst_100 = arith.constant dense<0.000000e+00> : vector<16x16xf32>
    %174 = tpu.matmul %173, %123, %cst_100 {dimension_numbers = #tpu.dot_dimension_numbers<[1], [1], [0], [0], [0, 0, 1, 0], [], []>} : vector<16x128xf32>, vector<16x128xf32>, vector<16x16xf32> -> vector<16x16xf32>
    %cst_101 = arith.constant 0.176776692 : f32
    %175 = vector.broadcast %cst_101 : f32 to vector<16x16xf32>
    %176 = arith.mulf %174, %175 : vector<16x16xf32>
    %177 = vector.extract_strided_slice %46 {offsets = [2, 0], sizes = [1, 256], strides = [1, 1]} : vector<8x256xf32> to vector<1x256xf32>
    %178 = vector.broadcast %177 : vector<1x256xf32> to vector<16x256xf32>
    %179 = arith.mulf %47, %178 : vector<16x256xf32>
    %cst_102 = arith.constant dense<0.000000e+00> : vector<16x16xf32>
    %180 = tpu.matmul %179, %48, %cst_102 {dimension_numbers = #tpu.dot_dimension_numbers<[1], [0], [0], [1], [0, 0, 1, 1], [], []>} : vector<16x256xf32>, vector<256x16xf32>, vector<16x16xf32> -> vector<16x16xf32>
    %181 = arith.addf %176, %180 : vector<16x16xf32>
    %cst_103 = arith.constant dense<0xFF800000> : vector<16xf32>
    %182 = vector.multi_reduction <maximumf>, %181, %cst_103 [1] : vector<16x16xf32> to vector<16xf32>
    %183 = vector.shape_cast %182 : vector<16xf32> to vector<16x1xf32>
    %184 = vector.broadcast %183 : vector<16x1xf32> to vector<16x16xf32>
    %185 = arith.subf %181, %184 : vector<16x16xf32>
    %186 = math.exp %185 : vector<16x16xf32>
    %cst_104 = arith.constant dense<0.000000e+00> : vector<16xf32>
    %187 = vector.multi_reduction <add>, %186, %cst_104 [1] : vector<16x16xf32> to vector<16xf32>
    %188 = vector.shape_cast %187 : vector<16xf32> to vector<16x1xf32>
    %189 = vector.broadcast %188 : vector<16x1xf32> to vector<16x16xf32>
    %190 = arith.divf %186, %189 : vector<16x16xf32>
    %191 = vector.broadcast %73 : vector<1x128xf32> to vector<16x128xf32>
    %192 = arith.mulf %124, %191 : vector<16x128xf32>
    %cst_105 = arith.constant dense<0.000000e+00> : vector<16x128xf32>
    %193 = tpu.matmul %190, %192, %cst_105 {dimension_numbers = #tpu.dot_dimension_numbers<[1], [0], [0], [1], [0, 0, 1, 1], [], []>} : vector<16x16xf32>, vector<16x128xf32>, vector<16x128xf32> -> vector<16x128xf32>
    %194 = arith.addf %171, %193 : vector<16x128xf32>
    %195 = vector.broadcast %81 : vector<1x128xf32> to vector<16x128xf32>
    %196 = arith.mulf %122, %195 : vector<16x128xf32>
    %cst_106 = arith.constant dense<0.000000e+00> : vector<16x16xf32>
    %197 = tpu.matmul %196, %123, %cst_106 {dimension_numbers = #tpu.dot_dimension_numbers<[1], [1], [0], [0], [0, 0, 1, 0], [], []>} : vector<16x128xf32>, vector<16x128xf32>, vector<16x16xf32> -> vector<16x16xf32>
    %cst_107 = arith.constant 0.176776692 : f32
    %198 = vector.broadcast %cst_107 : f32 to vector<16x16xf32>
    %199 = arith.mulf %197, %198 : vector<16x16xf32>
    %200 = vector.extract_strided_slice %46 {offsets = [3, 0], sizes = [1, 256], strides = [1, 1]} : vector<8x256xf32> to vector<1x256xf32>
    %201 = vector.broadcast %200 : vector<1x256xf32> to vector<16x256xf32>
    %202 = arith.mulf %47, %201 : vector<16x256xf32>
    %cst_108 = arith.constant dense<0.000000e+00> : vector<16x16xf32>
    %203 = tpu.matmul %202, %48, %cst_108 {dimension_numbers = #tpu.dot_dimension_numbers<[1], [0], [0], [1], [0, 0, 1, 1], [], []>} : vector<16x256xf32>, vector<256x16xf32>, vector<16x16xf32> -> vector<16x16xf32>
    %204 = arith.addf %199, %203 : vector<16x16xf32>
    %cst_109 = arith.constant dense<0xFF800000> : vector<16xf32>
    %205 = vector.multi_reduction <maximumf>, %204, %cst_109 [1] : vector<16x16xf32> to vector<16xf32>
    %206 = vector.shape_cast %205 : vector<16xf32> to vector<16x1xf32>
    %207 = vector.broadcast %206 : vector<16x1xf32> to vector<16x16xf32>
    %208 = arith.subf %204, %207 : vector<16x16xf32>
    %209 = math.exp %208 : vector<16x16xf32>
    %cst_110 = arith.constant dense<0.000000e+00> : vector<16xf32>
    %210 = vector.multi_reduction <add>, %209, %cst_110 [1] : vector<16x16xf32> to vector<16xf32>
    %211 = vector.shape_cast %210 : vector<16xf32> to vector<16x1xf32>
    %212 = vector.broadcast %211 : vector<16x1xf32> to vector<16x16xf32>
    %213 = arith.divf %209, %212 : vector<16x16xf32>
    %214 = vector.broadcast %81 : vector<1x128xf32> to vector<16x128xf32>
    %215 = arith.mulf %124, %214 : vector<16x128xf32>
    %cst_111 = arith.constant dense<0.000000e+00> : vector<16x128xf32>
    %216 = tpu.matmul %213, %215, %cst_111 {dimension_numbers = #tpu.dot_dimension_numbers<[1], [0], [0], [1], [0, 0, 1, 1], [], []>} : vector<16x16xf32>, vector<16x128xf32>, vector<16x128xf32> -> vector<16x128xf32>
    %217 = arith.addf %194, %216 : vector<16x128xf32>
    %c0_112 = arith.constant 0 : index
    %c0_113 = arith.constant 0 : index
    %c0_114 = arith.constant 0 : index
    %218 = vector.load %arg15[%c0_112, %c0_113, %c0_114] : memref<2x128x32xf32, #tpu.memory_space<vmem>>, vector<1x128x32xf32>
    %219 = vector.shape_cast %218 : vector<1x128x32xf32> to vector<128x32xf32>
    %cst_115 = arith.constant dense<0.000000e+00> : vector<16x32xf32>
    %220 = tpu.matmul %217, %219, %cst_115 {dimension_numbers = #tpu.dot_dimension_numbers<[1], [0], [0], [1], [0, 0, 1, 1], [], []>} : vector<16x128xf32>, vector<128x32xf32>, vector<16x32xf32> -> vector<16x32xf32>
    %221 = vector.extract_strided_slice %90 {offsets = [5, 0], sizes = [1, 32], strides = [1, 1]} : vector<8x32xf32> to vector<1x32xf32>
    %222 = vector.broadcast %221 : vector<1x32xf32> to vector<16x32xf32>
    %223 = arith.addf %220, %222 : vector<16x32xf32>
    %224 = arith.addf %223, %88 : vector<16x32xf32>
    %225 = vector.extract_strided_slice %90 {offsets = [2, 0], sizes = [1, 32], strides = [1, 1]} : vector<8x32xf32> to vector<1x32xf32>
    %226 = vector.extract_strided_slice %90 {offsets = [3, 0], sizes = [1, 32], strides = [1, 1]} : vector<8x32xf32> to vector<1x32xf32>
    %cst_116 = arith.constant dense<0.000000e+00> : vector<16xf32>
    %227 = vector.multi_reduction <add>, %224, %cst_116 [1] : vector<16x32xf32> to vector<16xf32>
    %228 = vector.shape_cast %227 : vector<16xf32> to vector<16x1xf32>
    %cst_117 = arith.constant 3.200000e+01 : f32
    %229 = vector.broadcast %cst_117 : f32 to vector<16x1xf32>
    %230 = arith.divf %228, %229 : vector<16x1xf32>
    %231 = vector.broadcast %230 : vector<16x1xf32> to vector<16x32xf32>
    %232 = arith.subf %224, %231 : vector<16x32xf32>
    %233 = arith.mulf %232, %232 : vector<16x32xf32>
    %cst_118 = arith.constant dense<0.000000e+00> : vector<16xf32>
    %234 = vector.multi_reduction <add>, %233, %cst_118 [1] : vector<16x32xf32> to vector<16xf32>
    %235 = vector.shape_cast %234 : vector<16xf32> to vector<16x1xf32>
    %cst_119 = arith.constant 3.200000e+01 : f32
    %236 = vector.broadcast %cst_119 : f32 to vector<16x1xf32>
    %237 = arith.divf %235, %236 : vector<16x1xf32>
    %238 = vector.broadcast %230 : vector<16x1xf32> to vector<16x32xf32>
    %239 = arith.subf %224, %238 : vector<16x32xf32>
    %cst_120 = arith.constant 9.99999974E-6 : f32
    %240 = vector.broadcast %cst_120 : f32 to vector<16x1xf32>
    %241 = arith.addf %237, %240 : vector<16x1xf32>
    %242 = math.rsqrt %241 : vector<16x1xf32>
    %243 = vector.broadcast %242 : vector<16x1xf32> to vector<16x32xf32>
    %244 = arith.mulf %239, %243 : vector<16x32xf32>
    %245 = vector.broadcast %225 : vector<1x32xf32> to vector<16x32xf32>
    %246 = arith.mulf %244, %245 : vector<16x32xf32>
    %247 = vector.broadcast %226 : vector<1x32xf32> to vector<16x32xf32>
    %248 = arith.addf %246, %247 : vector<16x32xf32>
    %c0_121 = arith.constant 0 : index
    %c0_122 = arith.constant 0 : index
    %c0_123 = arith.constant 0 : index
    %249 = vector.load %arg17[%c0_121, %c0_122, %c0_123] : memref<2x32x32xf32, #tpu.memory_space<vmem>>, vector<1x32x32xf32>
    %250 = vector.shape_cast %249 : vector<1x32x32xf32> to vector<32x32xf32>
    %cst_124 = arith.constant dense<0.000000e+00> : vector<16x32xf32>
    %251 = tpu.matmul %248, %250, %cst_124 {dimension_numbers = #tpu.dot_dimension_numbers<[1], [0], [0], [1], [0, 0, 1, 1], [], []>} : vector<16x32xf32>, vector<32x32xf32>, vector<16x32xf32> -> vector<16x32xf32>
    %252 = vector.extract_strided_slice %90 {offsets = [4, 0], sizes = [1, 32], strides = [1, 1]} : vector<8x32xf32> to vector<1x32xf32>
    %253 = vector.broadcast %252 : vector<1x32xf32> to vector<16x32xf32>
    %254 = arith.addf %251, %253 : vector<16x32xf32>
    %255 = arith.addf %254, %224 : vector<16x32xf32>
    %c1_125 = arith.constant 1 : index
    %c0_126 = arith.constant 0 : index
    %c0_127 = arith.constant 0 : index
    %256 = vector.load %arg16[%c1_125, %c0_126, %c0_127] : memref<2x8x32xf32, #tpu.memory_space<vmem>>, vector<1x8x32xf32>
    %257 = vector.shape_cast %256 : vector<1x8x32xf32> to vector<8x32xf32>
    %258 = vector.extract_strided_slice %257 {offsets = [0, 0], sizes = [1, 32], strides = [1, 1]} : vector<8x32xf32> to vector<1x32xf32>
    %259 = vector.extract_strided_slice %257 {offsets = [1, 0], sizes = [1, 32], strides = [1, 1]} : vector<8x32xf32> to vector<1x32xf32>
    %cst_128 = arith.constant dense<0.000000e+00> : vector<16xf32>
    %260 = vector.multi_reduction <add>, %255, %cst_128 [1] : vector<16x32xf32> to vector<16xf32>
    %261 = vector.shape_cast %260 : vector<16xf32> to vector<16x1xf32>
    %cst_129 = arith.constant 3.200000e+01 : f32
    %262 = vector.broadcast %cst_129 : f32 to vector<16x1xf32>
    %263 = arith.divf %261, %262 : vector<16x1xf32>
    %264 = vector.broadcast %263 : vector<16x1xf32> to vector<16x32xf32>
    %265 = arith.subf %255, %264 : vector<16x32xf32>
    %266 = arith.mulf %265, %265 : vector<16x32xf32>
    %cst_130 = arith.constant dense<0.000000e+00> : vector<16xf32>
    %267 = vector.multi_reduction <add>, %266, %cst_130 [1] : vector<16x32xf32> to vector<16xf32>
    %268 = vector.shape_cast %267 : vector<16xf32> to vector<16x1xf32>
    %cst_131 = arith.constant 3.200000e+01 : f32
    %269 = vector.broadcast %cst_131 : f32 to vector<16x1xf32>
    %270 = arith.divf %268, %269 : vector<16x1xf32>
    %271 = vector.broadcast %263 : vector<16x1xf32> to vector<16x32xf32>
    %272 = arith.subf %255, %271 : vector<16x32xf32>
    %cst_132 = arith.constant 9.99999974E-6 : f32
    %273 = vector.broadcast %cst_132 : f32 to vector<16x1xf32>
    %274 = arith.addf %270, %273 : vector<16x1xf32>
    %275 = math.rsqrt %274 : vector<16x1xf32>
    %276 = vector.broadcast %275 : vector<16x1xf32> to vector<16x32xf32>
    %277 = arith.mulf %272, %276 : vector<16x32xf32>
    %278 = vector.broadcast %258 : vector<1x32xf32> to vector<16x32xf32>
    %279 = arith.mulf %277, %278 : vector<16x32xf32>
    %280 = vector.broadcast %259 : vector<1x32xf32> to vector<16x32xf32>
    %281 = arith.addf %279, %280 : vector<16x32xf32>
    %c1_133 = arith.constant 1 : index
    %c0_134 = arith.constant 0 : index
    %c0_135 = arith.constant 0 : index
    %282 = vector.load %arg13[%c1_133, %c0_134, %c0_135] : memref<2x32x384xf32, #tpu.memory_space<vmem>>, vector<1x32x384xf32>
    %283 = vector.shape_cast %282 : vector<1x32x384xf32> to vector<32x384xf32>
    %cst_136 = arith.constant dense<0.000000e+00> : vector<16x384xf32>
    %284 = tpu.matmul %281, %283, %cst_136 {dimension_numbers = #tpu.dot_dimension_numbers<[1], [0], [0], [1], [0, 0, 1, 1], [], []>} : vector<16x32xf32>, vector<32x384xf32>, vector<16x384xf32> -> vector<16x384xf32>
    %c1_137 = arith.constant 1 : index
    %c0_138 = arith.constant 0 : index
    %c0_139 = arith.constant 0 : index
    %285 = vector.load %arg14[%c1_137, %c0_138, %c0_139] : memref<2x1x384xf32, #tpu.memory_space<vmem>>, vector<1x1x384xf32>
    %286 = vector.shape_cast %285 : vector<1x1x384xf32> to vector<1x384xf32>
    %287 = vector.broadcast %286 : vector<1x384xf32> to vector<16x384xf32>
    %288 = arith.addf %284, %287 : vector<16x384xf32>
    %289 = vector.extract_strided_slice %288 {offsets = [0, 0], sizes = [16, 128], strides = [1, 1]} : vector<16x384xf32> to vector<16x128xf32>
    %290 = vector.extract_strided_slice %288 {offsets = [0, 128], sizes = [16, 128], strides = [1, 1]} : vector<16x384xf32> to vector<16x128xf32>
    %291 = vector.extract_strided_slice %288 {offsets = [0, 256], sizes = [16, 128], strides = [1, 1]} : vector<16x384xf32> to vector<16x128xf32>
    %cst_140 = arith.constant 0.000000e+00 : f32
    %292 = vector.broadcast %cst_140 : f32 to vector<16x128xf32>
    %293 = vector.broadcast %57 : vector<1x128xf32> to vector<16x128xf32>
    %294 = arith.mulf %289, %293 : vector<16x128xf32>
    %cst_141 = arith.constant dense<0.000000e+00> : vector<16x16xf32>
    %295 = tpu.matmul %294, %290, %cst_141 {dimension_numbers = #tpu.dot_dimension_numbers<[1], [1], [0], [0], [0, 0, 1, 0], [], []>} : vector<16x128xf32>, vector<16x128xf32>, vector<16x16xf32> -> vector<16x16xf32>
    %cst_142 = arith.constant 0.176776692 : f32
    %296 = vector.broadcast %cst_142 : f32 to vector<16x16xf32>
    %297 = arith.mulf %295, %296 : vector<16x16xf32>
    %298 = vector.extract_strided_slice %46 {offsets = [4, 0], sizes = [1, 256], strides = [1, 1]} : vector<8x256xf32> to vector<1x256xf32>
    %299 = vector.broadcast %298 : vector<1x256xf32> to vector<16x256xf32>
    %300 = arith.mulf %47, %299 : vector<16x256xf32>
    %cst_143 = arith.constant dense<0.000000e+00> : vector<16x16xf32>
    %301 = tpu.matmul %300, %48, %cst_143 {dimension_numbers = #tpu.dot_dimension_numbers<[1], [0], [0], [1], [0, 0, 1, 1], [], []>} : vector<16x256xf32>, vector<256x16xf32>, vector<16x16xf32> -> vector<16x16xf32>
    %302 = arith.addf %297, %301 : vector<16x16xf32>
    %cst_144 = arith.constant dense<0xFF800000> : vector<16xf32>
    %303 = vector.multi_reduction <maximumf>, %302, %cst_144 [1] : vector<16x16xf32> to vector<16xf32>
    %304 = vector.shape_cast %303 : vector<16xf32> to vector<16x1xf32>
    %305 = vector.broadcast %304 : vector<16x1xf32> to vector<16x16xf32>
    %306 = arith.subf %302, %305 : vector<16x16xf32>
    %307 = math.exp %306 : vector<16x16xf32>
    %cst_145 = arith.constant dense<0.000000e+00> : vector<16xf32>
    %308 = vector.multi_reduction <add>, %307, %cst_145 [1] : vector<16x16xf32> to vector<16xf32>
    %309 = vector.shape_cast %308 : vector<16xf32> to vector<16x1xf32>
    %310 = vector.broadcast %309 : vector<16x1xf32> to vector<16x16xf32>
    %311 = arith.divf %307, %310 : vector<16x16xf32>
    %312 = vector.broadcast %57 : vector<1x128xf32> to vector<16x128xf32>
    %313 = arith.mulf %291, %312 : vector<16x128xf32>
    %cst_146 = arith.constant dense<0.000000e+00> : vector<16x128xf32>
    %314 = tpu.matmul %311, %313, %cst_146 {dimension_numbers = #tpu.dot_dimension_numbers<[1], [0], [0], [1], [0, 0, 1, 1], [], []>} : vector<16x16xf32>, vector<16x128xf32>, vector<16x128xf32> -> vector<16x128xf32>
    %315 = arith.addf %292, %314 : vector<16x128xf32>
    %316 = vector.broadcast %65 : vector<1x128xf32> to vector<16x128xf32>
    %317 = arith.mulf %289, %316 : vector<16x128xf32>
    %cst_147 = arith.constant dense<0.000000e+00> : vector<16x16xf32>
    %318 = tpu.matmul %317, %290, %cst_147 {dimension_numbers = #tpu.dot_dimension_numbers<[1], [1], [0], [0], [0, 0, 1, 0], [], []>} : vector<16x128xf32>, vector<16x128xf32>, vector<16x16xf32> -> vector<16x16xf32>
    %cst_148 = arith.constant 0.176776692 : f32
    %319 = vector.broadcast %cst_148 : f32 to vector<16x16xf32>
    %320 = arith.mulf %318, %319 : vector<16x16xf32>
    %321 = vector.extract_strided_slice %46 {offsets = [5, 0], sizes = [1, 256], strides = [1, 1]} : vector<8x256xf32> to vector<1x256xf32>
    %322 = vector.broadcast %321 : vector<1x256xf32> to vector<16x256xf32>
    %323 = arith.mulf %47, %322 : vector<16x256xf32>
    %cst_149 = arith.constant dense<0.000000e+00> : vector<16x16xf32>
    %324 = tpu.matmul %323, %48, %cst_149 {dimension_numbers = #tpu.dot_dimension_numbers<[1], [0], [0], [1], [0, 0, 1, 1], [], []>} : vector<16x256xf32>, vector<256x16xf32>, vector<16x16xf32> -> vector<16x16xf32>
    %325 = arith.addf %320, %324 : vector<16x16xf32>
    %cst_150 = arith.constant dense<0xFF800000> : vector<16xf32>
    %326 = vector.multi_reduction <maximumf>, %325, %cst_150 [1] : vector<16x16xf32> to vector<16xf32>
    %327 = vector.shape_cast %326 : vector<16xf32> to vector<16x1xf32>
    %328 = vector.broadcast %327 : vector<16x1xf32> to vector<16x16xf32>
    %329 = arith.subf %325, %328 : vector<16x16xf32>
    %330 = math.exp %329 : vector<16x16xf32>
    %cst_151 = arith.constant dense<0.000000e+00> : vector<16xf32>
    %331 = vector.multi_reduction <add>, %330, %cst_151 [1] : vector<16x16xf32> to vector<16xf32>
    %332 = vector.shape_cast %331 : vector<16xf32> to vector<16x1xf32>
    %333 = vector.broadcast %332 : vector<16x1xf32> to vector<16x16xf32>
    %334 = arith.divf %330, %333 : vector<16x16xf32>
    %335 = vector.broadcast %65 : vector<1x128xf32> to vector<16x128xf32>
    %336 = arith.mulf %291, %335 : vector<16x128xf32>
    %cst_152 = arith.constant dense<0.000000e+00> : vector<16x128xf32>
    %337 = tpu.matmul %334, %336, %cst_152 {dimension_numbers = #tpu.dot_dimension_numbers<[1], [0], [0], [1], [0, 0, 1, 1], [], []>} : vector<16x16xf32>, vector<16x128xf32>, vector<16x128xf32> -> vector<16x128xf32>
    %338 = arith.addf %315, %337 : vector<16x128xf32>
    %339 = vector.broadcast %73 : vector<1x128xf32> to vector<16x128xf32>
    %340 = arith.mulf %289, %339 : vector<16x128xf32>
    %cst_153 = arith.constant dense<0.000000e+00> : vector<16x16xf32>
    %341 = tpu.matmul %340, %290, %cst_153 {dimension_numbers = #tpu.dot_dimension_numbers<[1], [1], [0], [0], [0, 0, 1, 0], [], []>} : vector<16x128xf32>, vector<16x128xf32>, vector<16x16xf32> -> vector<16x16xf32>
    %cst_154 = arith.constant 0.176776692 : f32
    %342 = vector.broadcast %cst_154 : f32 to vector<16x16xf32>
    %343 = arith.mulf %341, %342 : vector<16x16xf32>
    %344 = vector.extract_strided_slice %46 {offsets = [6, 0], sizes = [1, 256], strides = [1, 1]} : vector<8x256xf32> to vector<1x256xf32>
    %345 = vector.broadcast %344 : vector<1x256xf32> to vector<16x256xf32>
    %346 = arith.mulf %47, %345 : vector<16x256xf32>
    %cst_155 = arith.constant dense<0.000000e+00> : vector<16x16xf32>
    %347 = tpu.matmul %346, %48, %cst_155 {dimension_numbers = #tpu.dot_dimension_numbers<[1], [0], [0], [1], [0, 0, 1, 1], [], []>} : vector<16x256xf32>, vector<256x16xf32>, vector<16x16xf32> -> vector<16x16xf32>
    %348 = arith.addf %343, %347 : vector<16x16xf32>
    %cst_156 = arith.constant dense<0xFF800000> : vector<16xf32>
    %349 = vector.multi_reduction <maximumf>, %348, %cst_156 [1] : vector<16x16xf32> to vector<16xf32>
    %350 = vector.shape_cast %349 : vector<16xf32> to vector<16x1xf32>
    %351 = vector.broadcast %350 : vector<16x1xf32> to vector<16x16xf32>
    %352 = arith.subf %348, %351 : vector<16x16xf32>
    %353 = math.exp %352 : vector<16x16xf32>
    %cst_157 = arith.constant dense<0.000000e+00> : vector<16xf32>
    %354 = vector.multi_reduction <add>, %353, %cst_157 [1] : vector<16x16xf32> to vector<16xf32>
    %355 = vector.shape_cast %354 : vector<16xf32> to vector<16x1xf32>
    %356 = vector.broadcast %355 : vector<16x1xf32> to vector<16x16xf32>
    %357 = arith.divf %353, %356 : vector<16x16xf32>
    %358 = vector.broadcast %73 : vector<1x128xf32> to vector<16x128xf32>
    %359 = arith.mulf %291, %358 : vector<16x128xf32>
    %cst_158 = arith.constant dense<0.000000e+00> : vector<16x128xf32>
    %360 = tpu.matmul %357, %359, %cst_158 {dimension_numbers = #tpu.dot_dimension_numbers<[1], [0], [0], [1], [0, 0, 1, 1], [], []>} : vector<16x16xf32>, vector<16x128xf32>, vector<16x128xf32> -> vector<16x128xf32>
    %361 = arith.addf %338, %360 : vector<16x128xf32>
    %362 = vector.broadcast %81 : vector<1x128xf32> to vector<16x128xf32>
    %363 = arith.mulf %289, %362 : vector<16x128xf32>
    %cst_159 = arith.constant dense<0.000000e+00> : vector<16x16xf32>
    %364 = tpu.matmul %363, %290, %cst_159 {dimension_numbers = #tpu.dot_dimension_numbers<[1], [1], [0], [0], [0, 0, 1, 0], [], []>} : vector<16x128xf32>, vector<16x128xf32>, vector<16x16xf32> -> vector<16x16xf32>
    %cst_160 = arith.constant 0.176776692 : f32
    %365 = vector.broadcast %cst_160 : f32 to vector<16x16xf32>
    %366 = arith.mulf %364, %365 : vector<16x16xf32>
    %367 = vector.extract_strided_slice %46 {offsets = [7, 0], sizes = [1, 256], strides = [1, 1]} : vector<8x256xf32> to vector<1x256xf32>
    %368 = vector.broadcast %367 : vector<1x256xf32> to vector<16x256xf32>
    %369 = arith.mulf %47, %368 : vector<16x256xf32>
    %cst_161 = arith.constant dense<0.000000e+00> : vector<16x16xf32>
    %370 = tpu.matmul %369, %48, %cst_161 {dimension_numbers = #tpu.dot_dimension_numbers<[1], [0], [0], [1], [0, 0, 1, 1], [], []>} : vector<16x256xf32>, vector<256x16xf32>, vector<16x16xf32> -> vector<16x16xf32>
    %371 = arith.addf %366, %370 : vector<16x16xf32>
    %cst_162 = arith.constant dense<0xFF800000> : vector<16xf32>
    %372 = vector.multi_reduction <maximumf>, %371, %cst_162 [1] : vector<16x16xf32> to vector<16xf32>
    %373 = vector.shape_cast %372 : vector<16xf32> to vector<16x1xf32>
    %374 = vector.broadcast %373 : vector<16x1xf32> to vector<16x16xf32>
    %375 = arith.subf %371, %374 : vector<16x16xf32>
    %376 = math.exp %375 : vector<16x16xf32>
    %cst_163 = arith.constant dense<0.000000e+00> : vector<16xf32>
    %377 = vector.multi_reduction <add>, %376, %cst_163 [1] : vector<16x16xf32> to vector<16xf32>
    %378 = vector.shape_cast %377 : vector<16xf32> to vector<16x1xf32>
    %379 = vector.broadcast %378 : vector<16x1xf32> to vector<16x16xf32>
    %380 = arith.divf %376, %379 : vector<16x16xf32>
    %381 = vector.broadcast %81 : vector<1x128xf32> to vector<16x128xf32>
    %382 = arith.mulf %291, %381 : vector<16x128xf32>
    %cst_164 = arith.constant dense<0.000000e+00> : vector<16x128xf32>
    %383 = tpu.matmul %380, %382, %cst_164 {dimension_numbers = #tpu.dot_dimension_numbers<[1], [0], [0], [1], [0, 0, 1, 1], [], []>} : vector<16x16xf32>, vector<16x128xf32>, vector<16x128xf32> -> vector<16x128xf32>
    %384 = arith.addf %361, %383 : vector<16x128xf32>
    %c1_165 = arith.constant 1 : index
    %c0_166 = arith.constant 0 : index
    %c0_167 = arith.constant 0 : index
    %385 = vector.load %arg15[%c1_165, %c0_166, %c0_167] : memref<2x128x32xf32, #tpu.memory_space<vmem>>, vector<1x128x32xf32>
    %386 = vector.shape_cast %385 : vector<1x128x32xf32> to vector<128x32xf32>
    %cst_168 = arith.constant dense<0.000000e+00> : vector<16x32xf32>
    %387 = tpu.matmul %384, %386, %cst_168 {dimension_numbers = #tpu.dot_dimension_numbers<[1], [0], [0], [1], [0, 0, 1, 1], [], []>} : vector<16x128xf32>, vector<128x32xf32>, vector<16x32xf32> -> vector<16x32xf32>
    %388 = vector.extract_strided_slice %257 {offsets = [5, 0], sizes = [1, 32], strides = [1, 1]} : vector<8x32xf32> to vector<1x32xf32>
    %389 = vector.broadcast %388 : vector<1x32xf32> to vector<16x32xf32>
    %390 = arith.addf %387, %389 : vector<16x32xf32>
    %391 = arith.addf %390, %255 : vector<16x32xf32>
    %392 = vector.extract_strided_slice %257 {offsets = [2, 0], sizes = [1, 32], strides = [1, 1]} : vector<8x32xf32> to vector<1x32xf32>
    %393 = vector.extract_strided_slice %257 {offsets = [3, 0], sizes = [1, 32], strides = [1, 1]} : vector<8x32xf32> to vector<1x32xf32>
    %cst_169 = arith.constant dense<0.000000e+00> : vector<16xf32>
    %394 = vector.multi_reduction <add>, %391, %cst_169 [1] : vector<16x32xf32> to vector<16xf32>
    %395 = vector.shape_cast %394 : vector<16xf32> to vector<16x1xf32>
    %cst_170 = arith.constant 3.200000e+01 : f32
    %396 = vector.broadcast %cst_170 : f32 to vector<16x1xf32>
    %397 = arith.divf %395, %396 : vector<16x1xf32>
    %398 = vector.broadcast %397 : vector<16x1xf32> to vector<16x32xf32>
    %399 = arith.subf %391, %398 : vector<16x32xf32>
    %400 = arith.mulf %399, %399 : vector<16x32xf32>
    %cst_171 = arith.constant dense<0.000000e+00> : vector<16xf32>
    %401 = vector.multi_reduction <add>, %400, %cst_171 [1] : vector<16x32xf32> to vector<16xf32>
    %402 = vector.shape_cast %401 : vector<16xf32> to vector<16x1xf32>
    %cst_172 = arith.constant 3.200000e+01 : f32
    %403 = vector.broadcast %cst_172 : f32 to vector<16x1xf32>
    %404 = arith.divf %402, %403 : vector<16x1xf32>
    %405 = vector.broadcast %397 : vector<16x1xf32> to vector<16x32xf32>
    %406 = arith.subf %391, %405 : vector<16x32xf32>
    %cst_173 = arith.constant 9.99999974E-6 : f32
    %407 = vector.broadcast %cst_173 : f32 to vector<16x1xf32>
    %408 = arith.addf %404, %407 : vector<16x1xf32>
    %409 = math.rsqrt %408 : vector<16x1xf32>
    %410 = vector.broadcast %409 : vector<16x1xf32> to vector<16x32xf32>
    %411 = arith.mulf %406, %410 : vector<16x32xf32>
    %412 = vector.broadcast %392 : vector<1x32xf32> to vector<16x32xf32>
    %413 = arith.mulf %411, %412 : vector<16x32xf32>
    %414 = vector.broadcast %393 : vector<1x32xf32> to vector<16x32xf32>
    %415 = arith.addf %413, %414 : vector<16x32xf32>
    %c1_174 = arith.constant 1 : index
    %c0_175 = arith.constant 0 : index
    %c0_176 = arith.constant 0 : index
    %416 = vector.load %arg17[%c1_174, %c0_175, %c0_176] : memref<2x32x32xf32, #tpu.memory_space<vmem>>, vector<1x32x32xf32>
    %417 = vector.shape_cast %416 : vector<1x32x32xf32> to vector<32x32xf32>
    %cst_177 = arith.constant dense<0.000000e+00> : vector<16x32xf32>
    %418 = tpu.matmul %415, %417, %cst_177 {dimension_numbers = #tpu.dot_dimension_numbers<[1], [0], [0], [1], [0, 0, 1, 1], [], []>} : vector<16x32xf32>, vector<32x32xf32>, vector<16x32xf32> -> vector<16x32xf32>
    %419 = vector.extract_strided_slice %257 {offsets = [4, 0], sizes = [1, 32], strides = [1, 1]} : vector<8x32xf32> to vector<1x32xf32>
    %420 = vector.broadcast %419 : vector<1x32xf32> to vector<16x32xf32>
    %421 = arith.addf %418, %420 : vector<16x32xf32>
    %422 = arith.addf %421, %391 : vector<16x32xf32>
    %cst_178 = arith.constant dense<0.000000e+00> : vector<32xf32>
    %423 = vector.multi_reduction <add>, %422, %cst_178 [0] : vector<16x32xf32> to vector<32xf32>
    %424 = vector.shape_cast %423 : vector<32xf32> to vector<1x32xf32>
    %cst_179 = arith.constant 1.600000e+01 : f32
    %425 = vector.broadcast %cst_179 : f32 to vector<1x32xf32>
    %426 = arith.divf %424, %425 : vector<1x32xf32>
    %c0_180 = arith.constant 0 : index
    %c0_181 = arith.constant 0 : index
    %427 = vector.load %arg18[%c0_180, %c0_181] : memref<32x8xf32, #tpu.memory_space<vmem>>, vector<32x8xf32>
    %cst_182 = arith.constant dense<0.000000e+00> : vector<1x8xf32>
    %428 = tpu.matmul %426, %427, %cst_182 {dimension_numbers = #tpu.dot_dimension_numbers<[1], [0], [0], [1], [0, 0, 1, 1], [], []>} : vector<1x32xf32>, vector<32x8xf32>, vector<1x8xf32> -> vector<1x8xf32>
    %c0_183 = arith.constant 0 : index
    %c0_184 = arith.constant 0 : index
    %429 = vector.load %arg19[%c0_183, %c0_184] : memref<1x8xf32, #tpu.memory_space<vmem>>, vector<1x8xf32>
    %430 = arith.addf %428, %429 : vector<1x8xf32>
    %c0_185 = arith.constant 0 : index
    %c0_186 = arith.constant 0 : index
    %431 = vector.load %arg20[%c0_185, %c0_186] : memref<1x8xf32, #tpu.memory_space<vmem>>, vector<1x8xf32>
    tpu.vector_store %arg20[%c0_185, %c0_186], %430 {strides = array<i32>} : memref<1x8xf32, #tpu.memory_space<vmem>>, vector<1x8xf32>,
    return
  }
}

</mosaic_0001>

<llo_original>
// kernel: graphormer_forward.1
$region0: #{graphormer_forward.1}
  #allocation0 [shape = 'u32[]', space=smem, size = 0x4, offset = 0x4, fixed_abs, tag = 'smem constant byte address 0x4 - core index']
  #allocation1 [shape = 'u32[144,128]{1,0:T(1,128)}', space=vmem, size = 0x12000, scoped, tag = 'internal scratch']
  %s0 = inlined_call_operand.vmem [shape: f32[16,8], index: 0, kind: input, shape index: {}]
  %s1 = inlined_call_operand.vmem [shape: f32[8,32], index: 1, kind: input, shape index: {}]
  %s2 = inlined_call_operand.vmem [shape: f32[16,11], index: 2, kind: input, shape index: {}]
  %s3 = inlined_call_operand.vmem [shape: f32[11,32], index: 3, kind: input, shape index: {}]
  %s4 = inlined_call_operand.vmem [shape: f32[24,4], index: 4, kind: input, shape index: {}]
  %s5 = inlined_call_operand.vmem [shape: f32[16,4], index: 5, kind: input, shape index: {}]
  %s6 = inlined_call_operand.vmem [shape: f32[16,1], index: 6, kind: input, shape index: {}]
  %s7 = inlined_call_operand.vmem [shape: f32[5,24,256], index: 7, kind: input, shape index: {}]
  %s8 = inlined_call_operand.vmem [shape: f32[5,8,16], index: 8, kind: input, shape index: {}]
  %s9 = inlined_call_operand.vmem [shape: f32[5,256], index: 9, kind: input, shape index: {}]
  %s10 = inlined_call_operand.hbm [shape: f32[1,5], index: 10, kind: input, shape index: {}]
  %s11 = inlined_call_operand.vmem [shape: f32[16,256], index: 11, kind: input, shape index: {}]
  %s12 = inlined_call_operand.vmem [shape: f32[256,16], index: 12, kind: input, shape index: {}]
  %s13 = inlined_call_operand.vmem [shape: f32[2,32,384], index: 13, kind: input, shape index: {}]
  %s14 = inlined_call_operand.hbm [shape: f32[2,1,384], index: 14, kind: input, shape index: {}]
  %s15 = inlined_call_operand.vmem [shape: f32[2,128,32], index: 15, kind: input, shape index: {}]
  %s16 = inlined_call_operand.vmem [shape: f32[2,8,32], index: 16, kind: input, shape index: {}]
  %s17 = inlined_call_operand.vmem [shape: f32[2,32,32], index: 17, kind: input, shape index: {}]
  %s18 = inlined_call_operand.vmem [shape: f32[32,8], index: 18, kind: input, shape index: {}]
  %s19 = inlined_call_operand.vmem [shape: f32[1,8], index: 19, kind: input, shape index: {}]
  %s20 = inlined_call_operand.hbm [shape: f32[1,8], index: 20, kind: output, shape index: {}]
  %s21 = sld [smem:[#allocation0]]
  $region98: #{graphormer_forward.1} parent=0
    _
  %s23 = ssub.s32 1, %s21
  %s24 = scalar_select 0, %s23, %s21
  $region1: #{graphormer_forward.1} parent=0
    #allocation2 [shape = 'u8[512]{0}', space=vmem, size = 0x400, scoped, tag = 'input window, operand 10, single buffered']
    #allocation3 [shape = 's32[1]{0}', space=sflag, size = 0x4, scoped, tag = 'scoped memory for graphormer_forward.1']
    #allocation4 [shape = 's32[1]{0}', space=sflag, size = 0x4, scoped, tag = 'scoped memory for graphormer_forward.1']
    #allocation5 [shape = 'u8[3072]{0}', space=vmem, size = 0xc00, scoped, tag = 'input window, operand 14, single buffered']
    #allocation6 [shape = 's32[1]{0}', space=sflag, size = 0x4, scoped, tag = 'scoped memory for graphormer_forward.1']
    #allocation7 [shape = 'u8[512]{0}', space=vmem, size = 0x400, scoped, tag = 'output window, operand 0, single buffered']
    %25 = vsyncpa [#allocation3], 0
    %26 = vsyncpa [#allocation6], 0
    %27 = vsyncpa [#allocation4], 0
    // Predicated region
    $region2: #{graphormer_forward.1} parent=1 // pred_check
      _
    $region3: #{graphormer_forward.1} parent=1 // pred_check_branch
      %29 = sbr.rel (0) target = $region5
    $region4: #{graphormer_forward.1} parent=1 // pred_region
      _
    $region5: #{graphormer_forward.1} parent=1 // pred_fallthru
      _
    // Predicated region
    $region6: #{graphormer_forward.1} parent=1 // pred_check
      _
    $region7: #{graphormer_forward.1} parent=1 // pred_check_branch
      %31 = sbr.rel (0) target = $region9
    $region8: #{graphormer_forward.1} parent=1 // pred_region
      _
    $region9: #{graphormer_forward.1} parent=1 // pred_fallthru
      _
    // Predicated region
    $region10: #{graphormer_forward.1} parent=1 // pred_check
      _
    $region11: #{graphormer_forward.1} parent=1 // pred_check_branch
      %33 = sbr.rel (0) target = $region13
    $region12: #{graphormer_forward.1} parent=1 // pred_region
      _
    $region13: #{graphormer_forward.1} parent=1 // pred_fallthru
      _
    // Predicated region
    $region14: #{graphormer_forward.1} parent=1 // pred_check
      _
    $region15: #{graphormer_forward.1} parent=1 // pred_check_branch
      %35 = sbr.rel (0) target = $region17
    $region16: #{graphormer_forward.1} parent=1 // pred_region
      _
    $region17: #{graphormer_forward.1} parent=1 // pred_fallthru
      _
    // Predicated region
    $region18: #{graphormer_forward.1} parent=1 // pred_check
      _
    $region19: #{graphormer_forward.1} parent=1 // pred_check_branch
      %37 = sbr.rel (0) target = $region21
    $region20: #{graphormer_forward.1} parent=1 // pred_region
      _
    $region21: #{graphormer_forward.1} parent=1 // pred_fallthru
      _
    // Predicated region
    $region22: #{graphormer_forward.1} parent=1 // pred_check
      _
    $region23: #{graphormer_forward.1} parent=1 // pred_check_branch
      %39 = sbr.rel (0) target = $region25
    $region24: #{graphormer_forward.1} parent=1 // pred_region
      _
    $region25: #{graphormer_forward.1} parent=1 // pred_fallthru
      _
    // Predicated region
    $region26: #{graphormer_forward.1} parent=1 // pred_check
      _
    $region27: #{graphormer_forward.1} parent=1 // pred_check_branch
      %41 = sbr.rel (0) target = $region29
    $region28: #{graphormer_forward.1} parent=1 // pred_region
      _
    $region29: #{graphormer_forward.1} parent=1 // pred_fallthru
      _
    // Predicated region
    $region30: #{graphormer_forward.1} parent=1 // pred_check
      _
    $region31: #{graphormer_forward.1} parent=1 // pred_check_branch
      %43 = sbr.rel (0) target = $region33
    $region32: #{graphormer_forward.1} parent=1 // pred_region
      _
    $region33: #{graphormer_forward.1} parent=1 // pred_fallthru
      _
    // Predicated region
    $region34: #{graphormer_forward.1} parent=1 // pred_check
      _
    $region35: #{graphormer_forward.1} parent=1 // pred_check_branch
      %45 = sbr.rel (0) target = $region37
    $region36: #{graphormer_forward.1} parent=1 // pred_region
      _
    $region37: #{graphormer_forward.1} parent=1 // pred_fallthru
      _
    // Predicated region
    $region38: #{graphormer_forward.1} parent=1 // pred_check
      _
    $region39: #{graphormer_forward.1} parent=1 // pred_check_branch
      %47 = sbr.rel (0) target = $region41
    $region40: #{graphormer_forward.1} parent=1 // pred_region
      _
    $region41: #{graphormer_forward.1} parent=1 // pred_fallthru
      _
    // Predicated region
    $region42: #{graphormer_forward.1} parent=1 // pred_check
      _
    $region43: #{graphormer_forward.1} parent=1 // pred_check_branch
      %49 = sbr.rel (0) target = $region45
    $region44: #{graphormer_forward.1} parent=1 // pred_region
      %s51 = ssub.s32 16, 16
      %52 = vsyncadd [#allocation3], %s51
      %s54 = sshll.u32 [#allocation2], 4
      %s55 = int_to_ptr.vmem [resolvable:$true] %s54
      %57 = dma.hbm_to_vmem [thread:$0]  %s10, 16, %s55, [#allocation3]
    $region45: #{graphormer_forward.1} parent=1 // pred_fallthru
      _
    // Predicated region
    $region46: #{graphormer_forward.1} parent=1 // pred_check
      _
    $region47: #{graphormer_forward.1} parent=1 // pred_check_branch
      %59 = sbr.rel (0) target = $region49
    $region48: #{graphormer_forward.1} parent=1 // pred_region
      _
    $region49: #{graphormer_forward.1} parent=1 // pred_fallthru
      _
    // Predicated region
    $region50: #{graphormer_forward.1} parent=1 // pred_check
      _
    $region51: #{graphormer_forward.1} parent=1 // pred_check_branch
      %61 = sbr.rel (0) target = $region53
    $region52: #{graphormer_forward.1} parent=1 // pred_region
      _
    $region53: #{graphormer_forward.1} parent=1 // pred_fallthru
      _
    // Predicated region
    $region54: #{graphormer_forward.1} parent=1 // pred_check
      _
    $region55: #{graphormer_forward.1} parent=1 // pred_check_branch
      %63 = sbr.rel (0) target = $region57
    $region56: #{graphormer_forward.1} parent=1 // pred_region
      _
    $region57: #{graphormer_forward.1} parent=1 // pred_fallthru
      _
    // Predicated region
    $region58: #{graphormer_forward.1} parent=1 // pred_check
      _
    $region59: #{graphormer_forward.1} parent=1 // pred_check_branch
      %65 = sbr.rel (0) target = $region61
    $region60: #{graphormer_forward.1} parent=1 // pred_region
      %s67 = ssub.s32 96, 96
      %68 = vsyncadd [#allocation6], %s67
      %s69 = sshll.u32 [#allocation5], 4
      %s70 = int_to_ptr.vmem [resolvable:$true] %s69
      %75 = dma.hbm_to_vmem [thread:$0]  %s14, 96, %s70, [#allocation6], 48, 48, 3
    $region61: #{graphormer_forward.1} parent=1 // pred_fallthru
      _
    // Predicated region
    $region62: #{graphormer_forward.1} parent=1 // pred_check
      _
    $region63: #{graphormer_forward.1} parent=1 // pred_check_branch
      %77 = sbr.rel (0) target = $region65
    $region64: #{graphormer_forward.1} parent=1 // pred_region
      _
    $region65: #{graphormer_forward.1} parent=1 // pred_fallthru
      _
    // Predicated region
    $region66: #{graphormer_forward.1} parent=1 // pred_check
      _
    $region67: #{graphormer_forward.1} parent=1 // pred_check_branch
      %79 = sbr.rel (0) target = $region69
    $region68: #{graphormer_forward.1} parent=1 // pred_region
      _
    $region69: #{graphormer_forward.1} parent=1 // pred_fallthru
      _
    // Predicated region
    $region70: #{graphormer_forward.1} parent=1 // pred_check
      _
    $region71: #{graphormer_forward.1} parent=1 // pred_check_branch
      %81 = sbr.rel (0) target = $region73
    $region72: #{graphormer_forward.1} parent=1 // pred_region
      _
    $region73: #{graphormer_forward.1} parent=1 // pred_fallthru
      _
    // Predicated region
    $region74: #{graphormer_forward.1} parent=1 // pred_check
      _
    $region75: #{graphormer_forward.1} parent=1 // pred_check_branch
      %83 = sbr.rel (0) target = $region77
    $region76: #{graphormer_forward.1} parent=1 // pred_region
      _
    $region77: #{graphormer_forward.1} parent=1 // pred_fallthru
      _
    // Predicated region
    $region78: #{graphormer_forward.1} parent=1 // pred_check
      _
    $region79: #{graphormer_forward.1} parent=1 // pred_check_branch
      %85 = sbr.rel (0) target = $region81
    $region80: #{graphormer_forward.1} parent=1 // pred_region
      _
    $region81: #{graphormer_forward.1} parent=1 // pred_fallthru
      _
    // Predicated region
    $region82: #{graphormer_forward.1} parent=1 // pred_check
      _
    $region83: #{graphormer_forward.1} parent=1 // pred_check_branch
      %87 = sbr.rel (0) target = $region85
    $region84: #{graphormer_forward.1} parent=1 // pred_region
      %88 = dma.done [#allocation3], 16
    $region85: #{graphormer_forward.1} parent=1 // pred_fallthru
      _
    // Predicated region
    $region86: #{graphormer_forward.1} parent=1 // pred_check
      _
    $region87: #{graphormer_forward.1} parent=1 // pred_check_branch
      %90 = sbr.rel (0) target = $region89
    $region88: #{graphormer_forward.1} parent=1 // pred_region
      %91 = dma.done [#allocation6], 96
    $region89: #{graphormer_forward.1} parent=1 // pred_fallthru
      _
    %v92 = vld [vmem:[%s5] sm:$0xff]
    %v93 = vld [vmem:[%s5 + $0x8] sm:$0xff]
    %v94 = vld [vmem:[%s4] sm:$0xff]
    %v95 = vld [vmem:[%s4 + $0x8] sm:$0xff]
    %v96 = vld [vmem:[%s4 + $0x10] sm:$0xff]
    %v97 = vld [vmem:[%s6] sm:$0xff]
    %v98 = vld [vmem:[%s6 + $0x8] sm:$0xff]
    %100 = vset.pattern.permute.xlu0 0
    %101 = vperm.xlu0 %100, %v97
    %v102 = vpop.permute.xlu0 %101
    %105 = vset.pattern.permute.xlu0 0
    %106 = vperm.xlu0 %105, %v98
    %v107 = vpop.permute.xlu0 %106
    %vm109 = vcmask 31744
    %v111 = vsel %vm109, %v92, 0
    %v114 = vsel %vm109, %v93, 0
    %v117 = vsel %vm109, %v94, 0
    %v120 = vsel %vm109, %v95, 0
    %v123 = vsel %vm109, %v96, 0
    %125 = vmatprep.subr.mxu0 0.0
    %126 = vmatpush1.xpose.msra.mxu0 %v117
    %127 = vmatprep.subr.mxu0 0.0
    %128 = vmatpush1.xpose.msra.mxu0 %v120
    %129 = vmatprep.subr.mxu0 0.0
    %130 = vmatpush1.xpose.msra.mxu0 %v123
    %131 = vmatprep.subr.mxu0 0.0
    %132 = vmatpush1.xpose.msra.mxu0 0.0
    %133 = vmatprep.subr.mxu0 0.0
    %134 = vmatpush1.xpose.msra.mxu0 0.0
    %135 = vmatprep.subr.mxu0 0.0
    %136 = vmatpush1.xpose.msra.mxu0 0.0
    %137 = vmatprep.subr.mxu0 0.0
    %138 = vmatpush1.xpose.msra.mxu0 0.0
    %139 = vmatprep.subr.mxu0 0.0
    %140 = vmatpush1.xpose.msra.mxu0 0.0
    %141 = vmatprep.subr.mxu0 0.0
    %142 = vmatpush1.xpose.msra.mxu0 0.0
    %143 = vmatprep.subr.mxu0 0.0
    %144 = vmatpush1.xpose.msra.mxu0 0.0
    %145 = vmatprep.subr.mxu0 0.0
    %146 = vmatpush1.xpose.msra.mxu0 0.0
    %147 = vmatprep.subr.mxu0 0.0
    %148 = vmatpush1.xpose.msra.mxu0 0.0
    %149 = vmatprep.subr.mxu0 0.0
    %150 = vmatpush1.xpose.msra.mxu0 0.0
    %151 = vmatprep.subr.mxu0 0.0
    %152 = vmatpush1.xpose.msra.mxu0 0.0
    %153 = vmatprep.subr.mxu0 0.0
    %154 = vmatpush1.xpose.msra.mxu0 0.0
    %155 = vmatprep.subr.mxu0 0.0
    %156 = vmatpush1.xpose.msra.mxu0 0.0
    %157 = vmatprep.subr.mxu0 0.0
    %158 = vmatpush1.xpose.msra.mxu0 0.0
    %159 = vmatprep.subr.mxu0 0.0
    %160 = vmatpush1.xpose.msra.mxu0 0.0
    %161 = vmatprep.subr.mxu0 0.0
    %162 = vmatpush1.xpose.msra.mxu0 0.0
    %163 = vmatprep.subr.mxu0 0.0
    %164 = vmatpush1.xpose.msra.mxu0 0.0
    %165 = vmatprep.subr.mxu0 0.0
    %166 = vmatpush1.xpose.msra.mxu0 0.0
    %167 = vmatprep.subr.mxu0 0.0
    %168 = vmatpush1.xpose.msra.mxu0 0.0
    %169 = vmatprep.subr.mxu0 0.0
    %170 = vmatpush1.xpose.msra.mxu0 0.0
    %171 = vmatprep.subr.mxu0 0.0
    %172 = vmatpush1.xpose.msra.mxu0 0.0
    %173 = vmatprep.subr.mxu0 0.0
    %174 = vmatpush1.xpose.msra.mxu0 0.0
    %175 = vmatprep.subr.mxu0 0.0
    %176 = vmatpush1.xpose.msra.mxu0 0.0
    %177 = vmatprep.subr.mxu0 0.0
    %178 = vmatpush1.xpose.msra.mxu0 0.0
    %179 = vmatprep.subr.mxu0 0.0
    %180 = vmatpush1.xpose.msra.mxu0 0.0
    %181 = vmatprep.subr.mxu0 0.0
    %182 = vmatpush1.xpose.msra.mxu0 0.0
    %183 = vmatprep.subr.mxu0 0.0
    %184 = vmatpush1.xpose.msra.mxu0 0.0
    %185 = vmatprep.subr.mxu0 0.0
    %186 = vmatpush1.xpose.msra.mxu0 0.0
    %187 = vmatprep.subr.mxu0 0.0
    %188 = vmatpush1.xpose.msra.mxu0 0.0
    %189 = vmatprep.mubr.f32.mxu0 0.0
    %190 = vmatmul.mubr.f32.gmra.mrb[0].mxu0 %v111
    %v191 = vpop.f32.mrb[0].mxu0
    %v192 = vadd.f32 %v102, %v191
    %v193 = vpop.f32.mrb[0].mxu0
    %194 = vmatprep.mubr.f32.mxu0 0.0
    %195 = vmatmul.mubr.f32.gmra.mrb[0].mxu0 %v114
    %v196 = vpop.f32.mrb[0].mxu0
    %v197 = vadd.f32 %v107, %v196
    %v198 = vpop.f32.mrb[0].mxu0
    %199 = vdwg.mxu0
    %v200 = vld [vmem:[%s7] sm:$0xff]
    %v201 = vld [vmem:[%s7 + $0x8] sm:$0xff]
    %v202 = vld [vmem:[%s7 + $0x10] sm:$0xff]
    %v203 = vld [vmem:[%s7 + $0x18] sm:$0xff]
    %v204 = vld [vmem:[%s7 + $0x20] sm:$0xff]
    %v205 = vld [vmem:[%s7 + $0x28] sm:$0xff]
    %vm206 = vcmask 195584
    %v208 = vsel %vm206, %v192, 0
    %v211 = vsel %vm206, %v197, 0
    %213 = vmatprep.subr.mxu0 %v201
    %214 = vmatpush1.msra.mxu0 %v200
    %215 = vmatprep.subr.mxu0 %v203
    %216 = vmatpush1.msra.mxu0 %v202
    %217 = vmatprep.subr.mxu0 %v205
    %218 = vmatpush1.msra.mxu0 %v204
    %219 = vmatprep.subr.mxu0 0.0
    %220 = vmatpush1.msra.mxu0 0.0
    %221 = vmatprep.subr.mxu0 0.0
    %222 = vmatpush1.msra.mxu0 0.0
    %223 = vmatprep.subr.mxu0 0.0
    %224 = vmatpush1.msra.mxu0 0.0
    %225 = vmatprep.subr.mxu0 0.0
    %226 = vmatpush1.msra.mxu0 0.0
    %227 = vmatprep.subr.mxu0 0.0
    %228 = vmatpush1.msra.mxu0 0.0
    %229 = vmatprep.subr.mxu0 0.0
    %230 = vmatpush1.msra.mxu0 0.0
    %231 = vmatprep.subr.mxu0 0.0
    %232 = vmatpush1.msra.mxu0 0.0
    %233 = vmatprep.subr.mxu0 0.0
    %234 = vmatpush1.msra.mxu0 0.0
    %235 = vmatprep.subr.mxu0 0.0
    %236 = vmatpush1.msra.mxu0 0.0
    %237 = vmatprep.subr.mxu0 0.0
    %238 = vmatpush1.msra.mxu0 0.0
    %239 = vmatprep.subr.mxu0 0.0
    %240 = vmatpush1.msra.mxu0 0.0
    %241 = vmatprep.subr.mxu0 0.0
    %242 = vmatpush1.msra.mxu0 0.0
    %243 = vmatprep.subr.mxu0 0.0
    %244 = vmatpush1.msra.mxu0 0.0
    %245 = vmatprep.subr.mxu0 0.0
    %246 = vmatpush1.msra.mxu0 0.0
    %247 = vmatprep.subr.mxu0 0.0
    %248 = vmatpush1.msra.mxu0 0.0
    %249 = vmatprep.subr.mxu0 0.0
    %250 = vmatpush1.msra.mxu0 0.0
    %251 = vmatprep.subr.mxu0 0.0
    %252 = vmatpush1.msra.mxu0 0.0
    %253 = vmatprep.subr.mxu0 0.0
    %254 = vmatpush1.msra.mxu0 0.0
    %255 = vmatprep.subr.mxu0 0.0
    %256 = vmatpush1.msra.mxu0 0.0
    %257 = vmatprep.subr.mxu0 0.0
    %258 = vmatpush1.msra.mxu0 0.0
    %259 = vmatprep.subr.mxu0 0.0
    %260 = vmatpush1.msra.mxu0 0.0
    %261 = vmatprep.subr.mxu0 0.0
    %262 = vmatpush1.msra.mxu0 0.0
    %263 = vmatprep.subr.mxu0 0.0
    %264 = vmatpush1.msra.mxu0 0.0
    %265 = vmatprep.subr.mxu0 0.0
    %266 = vmatpush1.msra.mxu0 0.0
    %267 = vmatprep.subr.mxu0 0.0
    %268 = vmatpush1.msra.mxu0 0.0
    %269 = vmatprep.subr.mxu0 0.0
    %270 = vmatpush1.msra.mxu0 0.0
    %271 = vmatprep.subr.mxu0 0.0
    %272 = vmatpush1.msra.mxu0 0.0
    %273 = vmatprep.subr.mxu0 0.0
    %274 = vmatpush1.msra.mxu0 0.0
    %275 = vmatprep.subr.mxu0 0.0
    %276 = vmatpush1.msra.mxu0 0.0
    %277 = vmatprep.mubr.f32.mxu0 0.0
    %278 = vmatmul.mubr.f32.gmra.mrb[0].mxu0 %v208
    %v279 = vpop.f32.mrb[0].mxu0
    %v280 = vadd.f32 0.0, %v279
    %v281 = vpop.f32.mrb[0].mxu0
    %v282 = vadd.f32 0.0, %v281
    %283 = vmatprep.mubr.f32.mxu0 0.0
    %284 = vmatmul.mubr.f32.gmra.mrb[0].mxu0 %v211
    %v285 = vpop.f32.mrb[0].mxu0
    %v286 = vadd.f32 0.0, %v285
    %v287 = vpop.f32.mrb[0].mxu0
    %v288 = vadd.f32 0.0, %v287
    %289 = vdwg.mxu0
    %v290 = vld [vmem:[%s8] sm:$0xff]
    %s291 = scalar_lea.vmem %s7, 48
    %v292 = vld [vmem:[%s291] sm:$0xff]
    %v293 = vld [vmem:[%s291 + $0x8] sm:$0xff]
    %v294 = vld [vmem:[%s291 + $0x10] sm:$0xff]
    %v295 = vld [vmem:[%s291 + $0x18] sm:$0xff]
    %v296 = vld [vmem:[%s291 + $0x20] sm:$0xff]
    %v297 = vld [vmem:[%s291 + $0x28] sm:$0xff]
    %298 = vmatprep.subr.mxu0 %v293
    %299 = vmatpush1.msra.mxu0 %v292
    %300 = vmatprep.subr.mxu0 %v295
    %301 = vmatpush1.msra.mxu0 %v294
    %302 = vmatprep.subr.mxu0 %v297
    %303 = vmatpush1.msra.mxu0 %v296
    %304 = vmatprep.subr.mxu0 0.0
    %305 = vmatpush1.msra.mxu0 0.0
    %306 = vmatprep.subr.mxu0 0.0
    %307 = vmatpush1.msra.mxu0 0.0
    %308 = vmatprep.subr.mxu0 0.0
    %309 = vmatpush1.msra.mxu0 0.0
    %310 = vmatprep.subr.mxu0 0.0
    %311 = vmatpush1.msra.mxu0 0.0
    %312 = vmatprep.subr.mxu0 0.0
    %313 = vmatpush1.msra.mxu0 0.0
    %314 = vmatprep.subr.mxu0 0.0
    %315 = vmatpush1.msra.mxu0 0.0
    %316 = vmatprep.subr.mxu0 0.0
    %317 = vmatpush1.msra.mxu0 0.0
    %318 = vmatprep.subr.mxu0 0.0
    %319 = vmatpush1.msra.mxu0 0.0
    %320 = vmatprep.subr.mxu0 0.0
    %321 = vmatpush1.msra.mxu0 0.0
    %322 = vmatprep.subr.mxu0 0.0
    %323 = vmatpush1.msra.mxu0 0.0
    %324 = vmatprep.subr.mxu0 0.0
    %325 = vmatpush1.msra.mxu0 0.0
    %326 = vmatprep.subr.mxu0 0.0
    %327 = vmatpush1.msra.mxu0 0.0
    %328 = vmatprep.subr.mxu0 0.0
    %329 = vmatpush1.msra.mxu0 0.0
    %330 = vmatprep.subr.mxu0 0.0
    %331 = vmatpush1.msra.mxu0 0.0
    %332 = vmatprep.subr.mxu0 0.0
    %333 = vmatpush1.msra.mxu0 0.0
    %334 = vmatprep.subr.mxu0 0.0
    %335 = vmatpush1.msra.mxu0 0.0
    %336 = vmatprep.subr.mxu0 0.0
    %337 = vmatpush1.msra.mxu0 0.0
    %338 = vmatprep.subr.mxu0 0.0
    %339 = vmatpush1.msra.mxu0 0.0
    %340 = vmatprep.subr.mxu0 0.0
    %341 = vmatpush1.msra.mxu0 0.0
    %342 = vmatprep.subr.mxu0 0.0
    %343 = vmatpush1.msra.mxu0 0.0
    %344 = vmatprep.subr.mxu0 0.0
    %345 = vmatpush1.msra.mxu0 0.0
    %346 = vmatprep.subr.mxu0 0.0
    %347 = vmatpush1.msra.mxu0 0.0
    %348 = vmatprep.subr.mxu0 0.0
    %349 = vmatpush1.msra.mxu0 0.0
    %350 = vmatprep.subr.mxu0 0.0
    %351 = vmatpush1.msra.mxu0 0.0
    %352 = vmatprep.subr.mxu0 0.0
    %353 = vmatpush1.msra.mxu0 0.0
    %354 = vmatprep.subr.mxu0 0.0
    %355 = vmatpush1.msra.mxu0 0.0
    %356 = vmatprep.subr.mxu0 0.0
    %357 = vmatpush1.msra.mxu0 0.0
    %358 = vmatprep.subr.mxu0 0.0
    %359 = vmatpush1.msra.mxu0 0.0
    %360 = vmatprep.subr.mxu0 0.0
    %361 = vmatpush1.msra.mxu0 0.0
    %362 = vmatprep.mubr.f32.mxu0 0.0
    %363 = vmatmul.mubr.f32.gmra.mrb[0].mxu0 %v208
    %v364 = vpop.f32.mrb[0].mxu0
    %v365 = vadd.f32 0.0, %v364
    %v366 = vpop.f32.mrb[0].mxu0
    %v367 = vadd.f32 0.0, %v366
    %368 = vmatprep.mubr.f32.mxu0 0.0
    %369 = vmatmul.mubr.f32.gmra.mrb[0].mxu0 %v211
    %v370 = vpop.f32.mrb[0].mxu0
    %v371 = vadd.f32 0.0, %v370
    %v372 = vpop.f32.mrb[0].mxu0
    %v373 = vadd.f32 0.0, %v372
    %374 = vdwg.mxu0
    %s375 = scalar_lea.vmem %s8, 8
    %v376 = vld [vmem:[%s375] sm:$0xff]
    %vm377 = vcmask 130048
    %v379 = vsel %vm377, %v376, 0
    %381 = vmatprep.subr.mxu0 %v367
    %382 = vmatpush1.msra.mxu0 %v365
    %383 = vmatprep.subr.mxu0 %v373
    %384 = vmatpush1.msra.mxu0 %v371
    %385 = vmatprep.subr.mxu0 0.0
    %386 = vmatpush1.msra.mxu0 0.0
    %387 = vmatprep.subr.mxu0 0.0
    %388 = vmatpush1.msra.mxu0 0.0
    %389 = vmatprep.subr.mxu0 0.0
    %390 = vmatpush1.msra.mxu0 0.0
    %391 = vmatprep.subr.mxu0 0.0
    %392 = vmatpush1.msra.mxu0 0.0
    %393 = vmatprep.subr.mxu0 0.0
    %394 = vmatpush1.msra.mxu0 0.0
    %395 = vmatprep.subr.mxu0 0.0
    %396 = vmatpush1.msra.mxu0 0.0
    %397 = vmatprep.subr.mxu0 0.0
    %398 = vmatpush1.msra.mxu0 0.0
    %399 = vmatprep.subr.mxu0 0.0
    %400 = vmatpush1.msra.mxu0 0.0
    %401 = vmatprep.subr.mxu0 0.0
    %402 = vmatpush1.msra.mxu0 0.0
    %403 = vmatprep.subr.mxu0 0.0
    %404 = vmatpush1.msra.mxu0 0.0
    %405 = vmatprep.subr.mxu0 0.0
    %406 = vmatpush1.msra.mxu0 0.0
    %407 = vmatprep.subr.mxu0 0.0
    %408 = vmatpush1.msra.mxu0 0.0
    %409 = vmatprep.subr.mxu0 0.0
    %410 = vmatpush1.msra.mxu0 0.0
    %411 = vmatprep.subr.mxu0 0.0
    %412 = vmatpush1.msra.mxu0 0.0
    %413 = vmatprep.subr.mxu0 0.0
    %414 = vmatpush1.msra.mxu0 0.0
    %415 = vmatprep.subr.mxu0 0.0
    %416 = vmatpush1.msra.mxu0 0.0
    %417 = vmatprep.subr.mxu0 0.0
    %418 = vmatpush1.msra.mxu0 0.0
    %419 = vmatprep.subr.mxu0 0.0
    %420 = vmatpush1.msra.mxu0 0.0
    %421 = vmatprep.subr.mxu0 0.0
    %422 = vmatpush1.msra.mxu0 0.0
    %423 = vmatprep.subr.mxu0 0.0
    %424 = vmatpush1.msra.mxu0 0.0
    %425 = vmatprep.subr.mxu0 0.0
    %426 = vmatpush1.msra.mxu0 0.0
    %427 = vmatprep.subr.mxu0 0.0
    %428 = vmatpush1.msra.mxu0 0.0
    %429 = vmatprep.subr.mxu0 0.0
    %430 = vmatpush1.msra.mxu0 0.0
    %431 = vmatprep.subr.mxu0 0.0
    %432 = vmatpush1.msra.mxu0 0.0
    %433 = vmatprep.subr.mxu0 0.0
    %434 = vmatpush1.msra.mxu0 0.0
    %435 = vmatprep.subr.mxu0 0.0
    %436 = vmatpush1.msra.mxu0 0.0
    %437 = vmatprep.subr.mxu0 0.0
    %438 = vmatpush1.msra.mxu0 0.0
    %439 = vmatprep.subr.mxu0 0.0
    %440 = vmatpush1.msra.mxu0 0.0
    %441 = vmatprep.subr.mxu0 0.0
    %442 = vmatpush1.msra.mxu0 0.0
    %443 = vmatprep.subr.mxu0 0.0
    %444 = vmatpush1.msra.mxu0 0.0
    %445 = vmatprep.mubr.f32.mxu0 0.0
    %446 = vmatmul.mubr.f32.gmra.mrb[0].mxu0 %v379
    %v447 = vpop.f32.mrb[0].mxu0
    %v448 = vadd.f32 0.0, %v447
    %v449 = vpop.f32.mrb[0].mxu0
    %v450 = vadd.f32 0.0, %v449
    %451 = vdwg.mxu0
    %v453 = vsel %vm377, %v290, 0
    %455 = vmatprep.subr.mxu0 %v282
    %456 = vmatpush1.msra.mxu0 %v280
    %457 = vmatprep.subr.mxu0 %v288
    %458 = vmatpush1.msra.mxu0 %v286
    %459 = vmatprep.subr.mxu0 0.0
    %460 = vmatpush1.msra.mxu0 0.0
    %461 = vmatprep.subr.mxu0 0.0
    %462 = vmatpush1.msra.mxu0 0.0
    %463 = vmatprep.subr.mxu0 0.0
    %464 = vmatpush1.msra.mxu0 0.0
    %465 = vmatprep.subr.mxu0 0.0
    %466 = vmatpush1.msra.mxu0 0.0
    %467 = vmatprep.subr.mxu0 0.0
    %468 = vmatpush1.msra.mxu0 0.0
    %469 = vmatprep.subr.mxu0 0.0
    %470 = vmatpush1.msra.mxu0 0.0
    %471 = vmatprep.subr.mxu0 0.0
    %472 = vmatpush1.msra.mxu0 0.0
    %473 = vmatprep.subr.mxu0 0.0
    %474 = vmatpush1.msra.mxu0 0.0
    %475 = vmatprep.subr.mxu0 0.0
    %476 = vmatpush1.msra.mxu0 0.0
    %477 = vmatprep.subr.mxu0 0.0
    %478 = vmatpush1.msra.mxu0 0.0
    %479 = vmatprep.subr.mxu0 0.0
    %480 = vmatpush1.msra.mxu0 0.0
    %481 = vmatprep.subr.mxu0 0.0
    %482 = vmatpush1.msra.mxu0 0.0
    %483 = vmatprep.subr.mxu0 0.0
    %484 = vmatpush1.msra.mxu0 0.0
    %485 = vmatprep.subr.mxu0 0.0
    %486 = vmatpush1.msra.mxu0 0.0
    %487 = vmatprep.subr.mxu0 0.0
    %488 = vmatpush1.msra.mxu0 0.0
    %489 = vmatprep.subr.mxu0 0.0
    %490 = vmatpush1.msra.mxu0 0.0
    %491 = vmatprep.subr.mxu0 0.0
    %492 = vmatpush1.msra.mxu0 0.0
    %493 = vmatprep.subr.mxu0 0.0
    %494 = vmatpush1.msra.mxu0 0.0
    %495 = vmatprep.subr.mxu0 0.0
    %496 = vmatpush1.msra.mxu0 0.0
    %497 = vmatprep.subr.mxu0 0.0
    %498 = vmatpush1.msra.mxu0 0.0
    %499 = vmatprep.subr.mxu0 0.0
    %500 = vmatpush1.msra.mxu0 0.0
    %501 = vmatprep.subr.mxu0 0.0
    %502 = vmatpush1.msra.mxu0 0.0
    %503 = vmatprep.subr.mxu0 0.0
    %504 = vmatpush1.msra.mxu0 0.0
    %505 = vmatprep.subr.mxu0 0.0
    %506 = vmatpush1.msra.mxu0 0.0
    %507 = vmatprep.subr.mxu0 0.0
    %508 = vmatpush1.msra.mxu0 0.0
    %509 = vmatprep.subr.mxu0 0.0
    %510 = vmatpush1.msra.mxu0 0.0
    %511 = vmatprep.subr.mxu0 0.0
    %512 = vmatpush1.msra.mxu0 0.0
    %513 = vmatprep.subr.mxu0 0.0
    %514 = vmatpush1.msra.mxu0 0.0
    %515 = vmatprep.subr.mxu0 0.0
    %516 = vmatpush1.msra.mxu0 0.0
    %517 = vmatprep.subr.mxu0 0.0
    %518 = vmatpush1.msra.mxu0 0.0
    %519 = vmatprep.mubr.f32.mxu0 0.0
    %520 = vmatmul.mubr.f32.gmra.mrb[0].mxu0 %v453
    %v521 = vpop.f32.mrb[0].mxu0
    %v522 = vadd.f32 %v448, %v521
    %v523 = vpop.f32.mrb[0].mxu0
    %v524 = vadd.f32 %v450, %v523
    %525 = vdwg.mxu0
    %s526 = scalar_lea.vmem %s7, 96
    %v527 = vld [vmem:[%s526] sm:$0xff]
    %v528 = vld [vmem:[%s526 + $0x8] sm:$0xff]
    %v529 = vld [vmem:[%s526 + $0x10] sm:$0xff]
    %v530 = vld [vmem:[%s526 + $0x18] sm:$0xff]
    %v531 = vld [vmem:[%s526 + $0x20] sm:$0xff]
    %v532 = vld [vmem:[%s526 + $0x28] sm:$0xff]
    %533 = vmatprep.subr.mxu0 %v528
    %534 = vmatpush1.msra.mxu0 %v527
    %535 = vmatprep.subr.mxu0 %v530
    %536 = vmatpush1.msra.mxu0 %v529
    %537 = vmatprep.subr.mxu0 %v532
    %538 = vmatpush1.msra.mxu0 %v531
    %539 = vmatprep.subr.mxu0 0.0
    %540 = vmatpush1.msra.mxu0 0.0
    %541 = vmatprep.subr.mxu0 0.0
    %542 = vmatpush1.msra.mxu0 0.0
    %543 = vmatprep.subr.mxu0 0.0
    %544 = vmatpush1.msra.mxu0 0.0
    %545 = vmatprep.subr.mxu0 0.0
    %546 = vmatpush1.msra.mxu0 0.0
    %547 = vmatprep.subr.mxu0 0.0
    %548 = vmatpush1.msra.mxu0 0.0
    %549 = vmatprep.subr.mxu0 0.0
    %550 = vmatpush1.msra.mxu0 0.0
    %551 = vmatprep.subr.mxu0 0.0
    %552 = vmatpush1.msra.mxu0 0.0
    %553 = vmatprep.subr.mxu0 0.0
    %554 = vmatpush1.msra.mxu0 0.0
    %555 = vmatprep.subr.mxu0 0.0
    %556 = vmatpush1.msra.mxu0 0.0
    %557 = vmatprep.subr.mxu0 0.0
    %558 = vmatpush1.msra.mxu0 0.0
    %559 = vmatprep.subr.mxu0 0.0
    %560 = vmatpush1.msra.mxu0 0.0
    %561 = vmatprep.subr.mxu0 0.0
    %562 = vmatpush1.msra.mxu0 0.0
    %563 = vmatprep.subr.mxu0 0.0
    %564 = vmatpush1.msra.mxu0 0.0
    %565 = vmatprep.subr.mxu0 0.0
    %566 = vmatpush1.msra.mxu0 0.0
    %567 = vmatprep.subr.mxu0 0.0
    %568 = vmatpush1.msra.mxu0 0.0
    %569 = vmatprep.subr.mxu0 0.0
    %570 = vmatpush1.msra.mxu0 0.0
    %571 = vmatprep.subr.mxu0 0.0
    %572 = vmatpush1.msra.mxu0 0.0
    %573 = vmatprep.subr.mxu0 0.0
    %574 = vmatpush1.msra.mxu0 0.0
    %575 = vmatprep.subr.mxu0 0.0
    %576 = vmatpush1.msra.mxu0 0.0
    %577 = vmatprep.subr.mxu0 0.0
    %578 = vmatpush1.msra.mxu0 0.0
    %579 = vmatprep.subr.mxu0 0.0
    %580 = vmatpush1.msra.mxu0 0.0
    %581 = vmatprep.subr.mxu0 0.0
    %582 = vmatpush1.msra.mxu0 0.0
    %583 = vmatprep.subr.mxu0 0.0
    %584 = vmatpush1.msra.mxu0 0.0
    %585 = vmatprep.subr.mxu0 0.0
    %586 = vmatpush1.msra.mxu0 0.0
    %587 = vmatprep.subr.mxu0 0.0
    %588 = vmatpush1.msra.mxu0 0.0
    %589 = vmatprep.subr.mxu0 0.0
    %590 = vmatpush1.msra.mxu0 0.0
    %591 = vmatprep.subr.mxu0 0.0
    %592 = vmatpush1.msra.mxu0 0.0
    %593 = vmatprep.subr.mxu0 0.0
    %594 = vmatpush1.msra.mxu0 0.0
    %595 = vmatprep.subr.mxu0 0.0
    %596 = vmatpush1.msra.mxu0 0.0
    %597 = vmatprep.mubr.f32.mxu0 0.0
    %598 = vmatmul.mubr.f32.gmra.mrb[0].mxu0 %v208
    %v599 = vpop.f32.mrb[0].mxu0
    %v600 = vadd.f32 0.0, %v599
    %v601 = vpop.f32.mrb[0].mxu0
    %v602 = vadd.f32 0.0, %v601
    %603 = vmatprep.mubr.f32.mxu0 0.0
    %604 = vmatmul.mubr.f32.gmra.mrb[0].mxu0 %v211
    %v605 = vpop.f32.mrb[0].mxu0
    %v606 = vadd.f32 0.0, %v605
    %v607 = vpop.f32.mrb[0].mxu0
    %v608 = vadd.f32 0.0, %v607
    %609 = vdwg.mxu0
    %s610 = scalar_lea.vmem %s8, 16
    %v611 = vld [vmem:[%s610] sm:$0xff]
    %v613 = vsel %vm377, %v611, 0
    %615 = vmatprep.subr.mxu0 %v602
    %616 = vmatpush1.msra.mxu0 %v600
    %617 = vmatprep.subr.mxu0 %v608
    %618 = vmatpush1.msra.mxu0 %v606
    %619 = vmatprep.subr.mxu0 0.0
    %620 = vmatpush1.msra.mxu0 0.0
    %621 = vmatprep.subr.mxu0 0.0
    %622 = vmatpush1.msra.mxu0 0.0
    %623 = vmatprep.subr.mxu0 0.0
    %624 = vmatpush1.msra.mxu0 0.0
    %625 = vmatprep.subr.mxu0 0.0
    %626 = vmatpush1.msra.mxu0 0.0
    %627 = vmatprep.subr.mxu0 0.0
    %628 = vmatpush1.msra.mxu0 0.0
    %629 = vmatprep.subr.mxu0 0.0
    %630 = vmatpush1.msra.mxu0 0.0
    %631 = vmatprep.subr.mxu0 0.0
    %632 = vmatpush1.msra.mxu0 0.0
    %633 = vmatprep.subr.mxu0 0.0
    %634 = vmatpush1.msra.mxu0 0.0
    %635 = vmatprep.subr.mxu0 0.0
    %636 = vmatpush1.msra.mxu0 0.0
    %637 = vmatprep.subr.mxu0 0.0
    %638 = vmatpush1.msra.mxu0 0.0
    %639 = vmatprep.subr.mxu0 0.0
    %640 = vmatpush1.msra.mxu0 0.0
    %641 = vmatprep.subr.mxu0 0.0
    %642 = vmatpush1.msra.mxu0 0.0
    %643 = vmatprep.subr.mxu0 0.0
    %644 = vmatpush1.msra.mxu0 0.0
    %645 = vmatprep.subr.mxu0 0.0
    %646 = vmatpush1.msra.mxu0 0.0
    %647 = vmatprep.subr.mxu0 0.0
    %648 = vmatpush1.msra.mxu0 0.0
    %649 = vmatprep.subr.mxu0 0.0
    %650 = vmatpush1.msra.mxu0 0.0
    %651 = vmatprep.subr.mxu0 0.0
    %652 = vmatpush1.msra.mxu0 0.0
    %653 = vmatprep.subr.mxu0 0.0
    %654 = vmatpush1.msra.mxu0 0.0
    %655 = vmatprep.subr.mxu0 0.0
    %656 = vmatpush1.msra.mxu0 0.0
    %657 = vmatprep.subr.mxu0 0.0
    %658 = vmatpush1.msra.mxu0 0.0
    %659 = vmatprep.subr.mxu0 0.0
    %660 = vmatpush1.msra.mxu0 0.0
    %661 = vmatprep.subr.mxu0 0.0
    %662 = vmatpush1.msra.mxu0 0.0
    %663 = vmatprep.subr.mxu0 0.0
    %664 = vmatpush1.msra.mxu0 0.0
    %665 = vmatprep.subr.mxu0 0.0
    %666 = vmatpush1.msra.mxu0 0.0
    %667 = vmatprep.subr.mxu0 0.0
    %668 = vmatpush1.msra.mxu0 0.0
    %669 = vmatprep.subr.mxu0 0.0
    %670 = vmatpush1.msra.mxu0 0.0
    %671 = vmatprep.subr.mxu0 0.0
    %672 = vmatpush1.msra.mxu0 0.0
    %673 = vmatprep.subr.mxu0 0.0
    %674 = vmatpush1.msra.mxu0 0.0
    %675 = vmatprep.subr.mxu0 0.0
    %676 = vmatpush1.msra.mxu0 0.0
    %677 = vmatprep.subr.mxu0 0.0
    %678 = vmatpush1.msra.mxu0 0.0
    %679 = vmatprep.mubr.f32.mxu0 0.0
    %680 = vmatmul.mubr.f32.gmra.mrb[0].mxu0 %v613
    %v681 = vpop.f32.mrb[0].mxu0
    %v682 = vadd.f32 0.0, %v681
    %v683 = vpop.f32.mrb[0].mxu0
    %v684 = vadd.f32 0.0, %v683
    %685 = vdwg.mxu0
    %v686 = vadd.f32 %v522, %v682
    %v687 = vadd.f32 %v524, %v684
    %s688 = scalar_lea.vmem %s7, 144
    %v689 = vld [vmem:[%s688] sm:$0xff]
    %v690 = vld [vmem:[%s688 + $0x8] sm:$0xff]
    %v691 = vld [vmem:[%s688 + $0x10] sm:$0xff]
    %v692 = vld [vmem:[%s688 + $0x18] sm:$0xff]
    %v693 = vld [vmem:[%s688 + $0x20] sm:$0xff]
    %v694 = vld [vmem:[%s688 + $0x28] sm:$0xff]
    %695 = vmatprep.subr.mxu0 %v690
    %696 = vmatpush1.msra.mxu0 %v689
    %697 = vmatprep.subr.mxu0 %v692
    %698 = vmatpush1.msra.mxu0 %v691
    %699 = vmatprep.subr.mxu0 %v694
    %700 = vmatpush1.msra.mxu0 %v693
    %701 = vmatprep.subr.mxu0 0.0
    %702 = vmatpush1.msra.mxu0 0.0
    %703 = vmatprep.subr.mxu0 0.0
    %704 = vmatpush1.msra.mxu0 0.0
    %705 = vmatprep.subr.mxu0 0.0
    %706 = vmatpush1.msra.mxu0 0.0
    %707 = vmatprep.subr.mxu0 0.0
    %708 = vmatpush1.msra.mxu0 0.0
    %709 = vmatprep.subr.mxu0 0.0
    %710 = vmatpush1.msra.mxu0 0.0
    %711 = vmatprep.subr.mxu0 0.0
    %712 = vmatpush1.msra.mxu0 0.0
    %713 = vmatprep.subr.mxu0 0.0
    %714 = vmatpush1.msra.mxu0 0.0
    %715 = vmatprep.subr.mxu0 0.0
    %716 = vmatpush1.msra.mxu0 0.0
    %717 = vmatprep.subr.mxu0 0.0
    %718 = vmatpush1.msra.mxu0 0.0
    %719 = vmatprep.subr.mxu0 0.0
    %720 = vmatpush1.msra.mxu0 0.0
    %721 = vmatprep.subr.mxu0 0.0
    %722 = vmatpush1.msra.mxu0 0.0
    %723 = vmatprep.subr.mxu0 0.0
    %724 = vmatpush1.msra.mxu0 0.0
    %725 = vmatprep.subr.mxu0 0.0
    %726 = vmatpush1.msra.mxu0 0.0
    %727 = vmatprep.subr.mxu0 0.0
    %728 = vmatpush1.msra.mxu0 0.0
    %729 = vmatprep.subr.mxu0 0.0
    %730 = vmatpush1.msra.mxu0 0.0
    %731 = vmatprep.subr.mxu0 0.0
    %732 = vmatpush1.msra.mxu0 0.0
    %733 = vmatprep.subr.mxu0 0.0
    %734 = vmatpush1.msra.mxu0 0.0
    %735 = vmatprep.subr.mxu0 0.0
    %736 = vmatpush1.msra.mxu0 0.0
    %737 = vmatprep.subr.mxu0 0.0
    %738 = vmatpush1.msra.mxu0 0.0
    %739 = vmatprep.subr.mxu0 0.0
    %740 = vmatpush1.msra.mxu0 0.0
    %741 = vmatprep.subr.mxu0 0.0
    %742 = vmatpush1.msra.mxu0 0.0
    %743 = vmatprep.subr.mxu0 0.0
    %744 = vmatpush1.msra.mxu0 0.0
    %745 = vmatprep.subr.mxu0 0.0
    %746 = vmatpush1.msra.mxu0 0.0
    %747 = vmatprep.subr.mxu0 0.0
    %748 = vmatpush1.msra.mxu0 0.0
    %749 = vmatprep.subr.mxu0 0.0
    %750 = vmatpush1.msra.mxu0 0.0
    %751 = vmatprep.subr.mxu0 0.0
    %752 = vmatpush1.msra.mxu0 0.0
    %753 = vmatprep.subr.mxu0 0.0
    %754 = vmatpush1.msra.mxu0 0.0
    %755 = vmatprep.subr.mxu0 0.0
    %756 = vmatpush1.msra.mxu0 0.0
    %757 = vmatprep.subr.mxu0 0.0
    %758 = vmatpush1.msra.mxu0 0.0
    %759 = vmatprep.mubr.f32.mxu0 0.0
    %760 = vmatmul.mubr.f32.gmra.mrb[0].mxu0 %v208
    %v761 = vpop.f32.mrb[0].mxu0
    %v762 = vadd.f32 0.0, %v761
    %v763 = vpop.f32.mrb[0].mxu0
    %v764 = vadd.f32 0.0, %v763
    %765 = vmatprep.mubr.f32.mxu0 0.0
    %766 = vmatmul.mubr.f32.gmra.mrb[0].mxu0 %v211
    %v767 = vpop.f32.mrb[0].mxu0
    %v768 = vadd.f32 0.0, %v767
    %v769 = vpop.f32.mrb[0].mxu0
    %v770 = vadd.f32 0.0, %v769
    %771 = vdwg.mxu0
    %s772 = scalar_lea.vmem %s8, 24
    %v773 = vld [vmem:[%s772] sm:$0xff]
    %v775 = vsel %vm377, %v773, 0
    %777 = vmatprep.subr.mxu0 %v764
    %778 = vmatpush1.msra.mxu0 %v762
    %779 = vmatprep.subr.mxu0 %v770
    %780 = vmatpush1.msra.mxu0 %v768
    %781 = vmatprep.subr.mxu0 0.0
    %782 = vmatpush1.msra.mxu0 0.0
    %783 = vmatprep.subr.mxu0 0.0
    %784 = vmatpush1.msra.mxu0 0.0
    %785 = vmatprep.subr.mxu0 0.0
    %786 = vmatpush1.msra.mxu0 0.0
    %787 = vmatprep.subr.mxu0 0.0
    %788 = vmatpush1.msra.mxu0 0.0
    %789 = vmatprep.subr.mxu0 0.0
    %790 = vmatpush1.msra.mxu0 0.0
    %791 = vmatprep.subr.mxu0 0.0
    %792 = vmatpush1.msra.mxu0 0.0
    %793 = vmatprep.subr.mxu0 0.0
    %794 = vmatpush1.msra.mxu0 0.0
    %795 = vmatprep.subr.mxu0 0.0
    %796 = vmatpush1.msra.mxu0 0.0
    %797 = vmatprep.subr.mxu0 0.0
    %798 = vmatpush1.msra.mxu0 0.0
    %799 = vmatprep.subr.mxu0 0.0
    %800 = vmatpush1.msra.mxu0 0.0
    %801 = vmatprep.subr.mxu0 0.0
    %802 = vmatpush1.msra.mxu0 0.0
    %803 = vmatprep.subr.mxu0 0.0
    %804 = vmatpush1.msra.mxu0 0.0
    %805 = vmatprep.subr.mxu0 0.0
    %806 = vmatpush1.msra.mxu0 0.0
    %807 = vmatprep.subr.mxu0 0.0
    %808 = vmatpush1.msra.mxu0 0.0
    %809 = vmatprep.subr.mxu0 0.0
    %810 = vmatpush1.msra.mxu0 0.0
    %811 = vmatprep.subr.mxu0 0.0
    %812 = vmatpush1.msra.mxu0 0.0
    %813 = vmatprep.subr.mxu0 0.0
    %814 = vmatpush1.msra.mxu0 0.0
    %815 = vmatprep.subr.mxu0 0.0
    %816 = vmatpush1.msra.mxu0 0.0
    %817 = vmatprep.subr.mxu0 0.0
    %818 = vmatpush1.msra.mxu0 0.0
    %819 = vmatprep.subr.mxu0 0.0
    %820 = vmatpush1.msra.mxu0 0.0
    %821 = vmatprep.subr.mxu0 0.0
    %822 = vmatpush1.msra.mxu0 0.0
    %823 = vmatprep.subr.mxu0 0.0
    %824 = vmatpush1.msra.mxu0 0.0
    %825 = vmatprep.subr.mxu0 0.0
    %826 = vmatpush1.msra.mxu0 0.0
    %827 = vmatprep.subr.mxu0 0.0
    %828 = vmatpush1.msra.mxu0 0.0
    %829 = vmatprep.subr.mxu0 0.0
    %830 = vmatpush1.msra.mxu0 0.0
    %831 = vmatprep.subr.mxu0 0.0
    %832 = vmatpush1.msra.mxu0 0.0
    %833 = vmatprep.subr.mxu0 0.0
    %834 = vmatpush1.msra.mxu0 0.0
    %835 = vmatprep.subr.mxu0 0.0
    %836 = vmatpush1.msra.mxu0 0.0
    %837 = vmatprep.subr.mxu0 0.0
    %838 = vmatpush1.msra.mxu0 0.0
    %839 = vmatprep.subr.mxu0 0.0
    %840 = vmatpush1.msra.mxu0 0.0
    %841 = vmatprep.mubr.f32.mxu0 0.0
    %842 = vmatmul.mubr.f32.gmra.mrb[0].mxu0 %v775
    %v843 = vpop.f32.mrb[0].mxu0
    %v844 = vadd.f32 0.0, %v843
    %v845 = vpop.f32.mrb[0].mxu0
    %v846 = vadd.f32 0.0, %v845
    %847 = vdwg.mxu0
    %v848 = vadd.f32 %v686, %v844
    %v849 = vadd.f32 %v687, %v846
    %s850 = scalar_lea.vmem %s7, 192
    %v851 = vld [vmem:[%s850] sm:$0xff]
    %v852 = vld [vmem:[%s850 + $0x8] sm:$0xff]
    %v853 = vld [vmem:[%s850 + $0x10] sm:$0xff]
    %v854 = vld [vmem:[%s850 + $0x18] sm:$0xff]
    %v855 = vld [vmem:[%s850 + $0x20] sm:$0xff]
    %v856 = vld [vmem:[%s850 + $0x28] sm:$0xff]
    %857 = vmatprep.subr.mxu0 %v852
    %858 = vmatpush1.msra.mxu0 %v851
    %859 = vmatprep.subr.mxu0 %v854
    %860 = vmatpush1.msra.mxu0 %v853
    %861 = vmatprep.subr.mxu0 %v856
    %862 = vmatpush1.msra.mxu0 %v855
    %863 = vmatprep.subr.mxu0 0.0
    %864 = vmatpush1.msra.mxu0 0.0
    %865 = vmatprep.subr.mxu0 0.0
    %866 = vmatpush1.msra.mxu0 0.0
    %867 = vmatprep.subr.mxu0 0.0
    %868 = vmatpush1.msra.mxu0 0.0
    %869 = vmatprep.subr.mxu0 0.0
    %870 = vmatpush1.msra.mxu0 0.0
    %871 = vmatprep.subr.mxu0 0.0
    %872 = vmatpush1.msra.mxu0 0.0
    %873 = vmatprep.subr.mxu0 0.0
    %874 = vmatpush1.msra.mxu0 0.0
    %875 = vmatprep.subr.mxu0 0.0
    %876 = vmatpush1.msra.mxu0 0.0
    %877 = vmatprep.subr.mxu0 0.0
    %878 = vmatpush1.msra.mxu0 0.0
    %879 = vmatprep.subr.mxu0 0.0
    %880 = vmatpush1.msra.mxu0 0.0
    %881 = vmatprep.subr.mxu0 0.0
    %882 = vmatpush1.msra.mxu0 0.0
    %883 = vmatprep.subr.mxu0 0.0
    %884 = vmatpush1.msra.mxu0 0.0
    %885 = vmatprep.subr.mxu0 0.0
    %886 = vmatpush1.msra.mxu0 0.0
    %887 = vmatprep.subr.mxu0 0.0
    %888 = vmatpush1.msra.mxu0 0.0
    %889 = vmatprep.subr.mxu0 0.0
    %890 = vmatpush1.msra.mxu0 0.0
    %891 = vmatprep.subr.mxu0 0.0
    %892 = vmatpush1.msra.mxu0 0.0
    %893 = vmatprep.subr.mxu0 0.0
    %894 = vmatpush1.msra.mxu0 0.0
    %895 = vmatprep.subr.mxu0 0.0
    %896 = vmatpush1.msra.mxu0 0.0
    %897 = vmatprep.subr.mxu0 0.0
    %898 = vmatpush1.msra.mxu0 0.0
    %899 = vmatprep.subr.mxu0 0.0
    %900 = vmatpush1.msra.mxu0 0.0
    %901 = vmatprep.subr.mxu0 0.0
    %902 = vmatpush1.msra.mxu0 0.0
    %903 = vmatprep.subr.mxu0 0.0
    %904 = vmatpush1.msra.mxu0 0.0
    %905 = vmatprep.subr.mxu0 0.0
    %906 = vmatpush1.msra.mxu0 0.0
    %907 = vmatprep.subr.mxu0 0.0
    %908 = vmatpush1.msra.mxu0 0.0
    %909 = vmatprep.subr.mxu0 0.0
    %910 = vmatpush1.msra.mxu0 0.0
    %911 = vmatprep.subr.mxu0 0.0
    %912 = vmatpush1.msra.mxu0 0.0
    %913 = vmatprep.subr.mxu0 0.0
    %914 = vmatpush1.msra.mxu0 0.0
    %915 = vmatprep.subr.mxu0 0.0
    %916 = vmatpush1.msra.mxu0 0.0
    %917 = vmatprep.subr.mxu0 0.0
    %918 = vmatpush1.msra.mxu0 0.0
    %919 = vmatprep.subr.mxu0 0.0
    %920 = vmatpush1.msra.mxu0 0.0
    %921 = vmatprep.mubr.f32.mxu0 0.0
    %922 = vmatmul.mubr.f32.gmra.mrb[0].mxu0 %v208
    %v923 = vpop.f32.mrb[0].mxu0
    %v924 = vadd.f32 0.0, %v923
    %v925 = vpop.f32.mrb[0].mxu0
    %v926 = vadd.f32 0.0, %v925
    %927 = vmatprep.mubr.f32.mxu0 0.0
    %928 = vmatmul.mubr.f32.gmra.mrb[0].mxu0 %v211
    %v929 = vpop.f32.mrb[0].mxu0
    %v930 = vadd.f32 0.0, %v929
    %v931 = vpop.f32.mrb[0].mxu0
    %v932 = vadd.f32 0.0, %v931
    %933 = vdwg.mxu0
    %s934 = scalar_lea.vmem %s8, 32
    %v935 = vld [vmem:[%s934] sm:$0xff]
    %v937 = vsel %vm377, %v935, 0
    %939 = vmatprep.subr.mxu0 %v926
    %940 = vmatpush1.msra.mxu0 %v924
    %941 = vmatprep.subr.mxu0 %v932
    %942 = vmatpush1.msra.mxu0 %v930
    %943 = vmatprep.subr.mxu0 0.0
    %944 = vmatpush1.msra.mxu0 0.0
    %945 = vmatprep.subr.mxu0 0.0
    %946 = vmatpush1.msra.mxu0 0.0
    %947 = vmatprep.subr.mxu0 0.0
    %948 = vmatpush1.msra.mxu0 0.0
    %949 = vmatprep.subr.mxu0 0.0
    %950 = vmatpush1.msra.mxu0 0.0
    %951 = vmatprep.subr.mxu0 0.0
    %952 = vmatpush1.msra.mxu0 0.0
    %953 = vmatprep.subr.mxu0 0.0
    %954 = vmatpush1.msra.mxu0 0.0
    %955 = vmatprep.subr.mxu0 0.0
    %956 = vmatpush1.msra.mxu0 0.0
    %957 = vmatprep.subr.mxu0 0.0
    %958 = vmatpush1.msra.mxu0 0.0
    %959 = vmatprep.subr.mxu0 0.0
    %960 = vmatpush1.msra.mxu0 0.0
    %961 = vmatprep.subr.mxu0 0.0
    %962 = vmatpush1.msra.mxu0 0.0
    %963 = vmatprep.subr.mxu0 0.0
    %964 = vmatpush1.msra.mxu0 0.0
    %965 = vmatprep.subr.mxu0 0.0
    %966 = vmatpush1.msra.mxu0 0.0
    %967 = vmatprep.subr.mxu0 0.0
    %968 = vmatpush1.msra.mxu0 0.0
    %969 = vmatprep.subr.mxu0 0.0
    %970 = vmatpush1.msra.mxu0 0.0
    %971 = vmatprep.subr.mxu0 0.0
    %972 = vmatpush1.msra.mxu0 0.0
    %973 = vmatprep.subr.mxu0 0.0
    %974 = vmatpush1.msra.mxu0 0.0
    %975 = vmatprep.subr.mxu0 0.0
    %976 = vmatpush1.msra.mxu0 0.0
    %977 = vmatprep.subr.mxu0 0.0
    %978 = vmatpush1.msra.mxu0 0.0
    %979 = vmatprep.subr.mxu0 0.0
    %980 = vmatpush1.msra.mxu0 0.0
    %981 = vmatprep.subr.mxu0 0.0
    %982 = vmatpush1.msra.mxu0 0.0
    %983 = vmatprep.subr.mxu0 0.0
    %984 = vmatpush1.msra.mxu0 0.0
    %985 = vmatprep.subr.mxu0 0.0
    %986 = vmatpush1.msra.mxu0 0.0
    %987 = vmatprep.subr.mxu0 0.0
    %988 = vmatpush1.msra.mxu0 0.0
    %989 = vmatprep.subr.mxu0 0.0
    %990 = vmatpush1.msra.mxu0 0.0
    %991 = vmatprep.subr.mxu0 0.0
    %992 = vmatpush1.msra.mxu0 0.0
    %993 = vmatprep.subr.mxu0 0.0
    %994 = vmatpush1.msra.mxu0 0.0
    %995 = vmatprep.subr.mxu0 0.0
    %996 = vmatpush1.msra.mxu0 0.0
    %997 = vmatprep.subr.mxu0 0.0
    %998 = vmatpush1.msra.mxu0 0.0
    %999 = vmatprep.subr.mxu0 0.0
    %1000 = vmatpush1.msra.mxu0 0.0
    %1001 = vmatprep.subr.mxu0 0.0
    %1002 = vmatpush1.msra.mxu0 0.0
    %1003 = vmatprep.mubr.f32.mxu0 0.0
    %1004 = vmatmul.mubr.f32.gmra.mrb[0].mxu0 %v937
    %v1005 = vpop.f32.mrb[0].mxu0
    %v1006 = vadd.f32 0.0, %v1005
    %v1007 = vpop.f32.mrb[0].mxu0
    %v1008 = vadd.f32 0.0, %v1007
    %1009 = vdwg.mxu0
    %v1010 = vadd.f32 %v848, %v1006
    %v1011 = vadd.f32 %v849, %v1008
    %v1012 = vld [vmem:[#allocation2] sm:$0x1]
    %v1013 = vld [vmem:[%s9] sm:$0x1f]
    %v1014 = vld [vmem:[%s9 + $0x8] sm:$0x1f]
    %vm1015 = vcmask 39936
    %v1017 = vsel %vm1015, %v1012, 0
    %vm1019 = vcmask 1044480
    %v1021 = vsel %vm1019, %v1013, 0
    %v1024 = vsel %vm1019, %v1014, 0
    %1026 = vmatprep.subr.mxu0 %v1024
    %1027 = vmatpush1.msra.mxu0 %v1021
    %1028 = vmatprep.subr.mxu0 0.0
    %1029 = vmatpush1.msra.mxu0 0.0
    %1030 = vmatprep.subr.mxu0 0.0
    %1031 = vmatpush1.msra.mxu0 0.0
    %1032 = vmatprep.subr.mxu0 0.0
    %1033 = vmatpush1.msra.mxu0 0.0
    %1034 = vmatprep.subr.mxu0 0.0
    %1035 = vmatpush1.msra.mxu0 0.0
    %1036 = vmatprep.subr.mxu0 0.0
    %1037 = vmatpush1.msra.mxu0 0.0
    %1038 = vmatprep.subr.mxu0 0.0
    %1039 = vmatpush1.msra.mxu0 0.0
    %1040 = vmatprep.subr.mxu0 0.0
    %1041 = vmatpush1.msra.mxu0 0.0
    %1042 = vmatprep.subr.mxu0 0.0
    %1043 = vmatpush1.msra.mxu0 0.0
    %1044 = vmatprep.subr.mxu0 0.0
    %1045 = vmatpush1.msra.mxu0 0.0
    %1046 = vmatprep.subr.mxu0 0.0
    %1047 = vmatpush1.msra.mxu0 0.0
    %1048 = vmatprep.subr.mxu0 0.0
    %1049 = vmatpush1.msra.mxu0 0.0
    %1050 = vmatprep.subr.mxu0 0.0
    %1051 = vmatpush1.msra.mxu0 0.0
    %1052 = vmatprep.subr.mxu0 0.0
    %1053 = vmatpush1.msra.mxu0 0.0
    %1054 = vmatprep.subr.mxu0 0.0
    %1055 = vmatpush1.msra.mxu0 0.0
    %1056 = vmatprep.subr.mxu0 0.0
    %1057 = vmatpush1.msra.mxu0 0.0
    %1058 = vmatprep.subr.mxu0 0.0
    %1059 = vmatpush1.msra.mxu0 0.0
    %1060 = vmatprep.subr.mxu0 0.0
    %1061 = vmatpush1.msra.mxu0 0.0
    %1062 = vmatprep.subr.mxu0 0.0
    %1063 = vmatpush1.msra.mxu0 0.0
    %1064 = vmatprep.subr.mxu0 0.0
    %1065 = vmatpush1.msra.mxu0 0.0
    %1066 = vmatprep.subr.mxu0 0.0
    %1067 = vmatpush1.msra.mxu0 0.0
    %1068 = vmatprep.subr.mxu0 0.0
    %1069 = vmatpush1.msra.mxu0 0.0
    %1070 = vmatprep.subr.mxu0 0.0
    %1071 = vmatpush1.msra.mxu0 0.0
    %1072 = vmatprep.subr.mxu0 0.0
    %1073 = vmatpush1.msra.mxu0 0.0
    %1074 = vmatprep.subr.mxu0 0.0
    %1075 = vmatpush1.msra.mxu0 0.0
    %1076 = vmatprep.subr.mxu0 0.0
    %1077 = vmatpush1.msra.mxu0 0.0
    %1078 = vmatprep.subr.mxu0 0.0
    %1079 = vmatpush1.msra.mxu0 0.0
    %1080 = vmatprep.subr.mxu0 0.0
    %1081 = vmatpush1.msra.mxu0 0.0
    %1082 = vmatprep.subr.mxu0 0.0
    %1083 = vmatpush1.msra.mxu0 0.0
    %1084 = vmatprep.subr.mxu0 0.0
    %1085 = vmatpush1.msra.mxu0 0.0
    %1086 = vmatprep.subr.mxu0 0.0
    %1087 = vmatpush1.msra.mxu0 0.0
    %1088 = vmatprep.subr.mxu0 0.0
    %1089 = vmatpush1.msra.mxu0 0.0
    %1090 = vmatprep.mubr.f32.mxu0 0.0
    %1091 = vmatmul.mubr.f32.gmra.mrb[0].mxu0 %v1017
    %v1092 = vpop.f32.mrb[0].mxu0
    %v1093 = vadd.f32 0.0, %v1092
    %v1094 = vpop.f32.mrb[0].mxu0
    %v1095 = vadd.f32 0.0, %v1094
    %1096 = vdwg.mxu0
    %v1097 = vlaneseq
    %v1098 = vshrl.u32 %v1097, 7
    %v1099 = vsub.s32 0, %v1098
    %v1100 = vrot.slane %v1093, %v1099
    %v1101 = vlaneseq
    %v1102 = vshrl.u32 %v1101, 7
    %v1103 = vsub.s32 0, %v1102
    %v1104 = vrot.slane %v1095, %v1103
    %v1105 = vadd.f32 %v1010, %v1100
    %v1106 = vadd.f32 %v1011, %v1104
    %v1107 = vld [vmem:[%s11] sm:$0xff]
    %v1108 = vld [vmem:[%s11 + $0x8] sm:$0xff]
    %v1109 = vld [vmem:[%s11 + $0x10] sm:$0xff]
    %v1110 = vld [vmem:[%s11 + $0x18] sm:$0xff]
    %v1111 = vld [vmem:[%s12] sm:$0xff]
    %v1112 = vld [vmem:[%s12 + $0x8] sm:$0xff]
    %v1113 = vld [vmem:[%s12 + $0x10] sm:$0xff]
    %v1114 = vld [vmem:[%s12 + $0x18] sm:$0xff]
    %v1115 = vld [vmem:[%s12 + $0x20] sm:$0xff]
    %v1116 = vld [vmem:[%s12 + $0x28] sm:$0xff]
    %v1117 = vld [vmem:[%s12 + $0x30] sm:$0xff]
    %v1118 = vld [vmem:[%s12 + $0x38] sm:$0xff]
    %v1119 = vld [vmem:[%s12 + $0x40] sm:$0xff]
    %v1120 = vld [vmem:[%s12 + $0x48] sm:$0xff]
    %v1121 = vld [vmem:[%s12 + $0x50] sm:$0xff]
    %v1122 = vld [vmem:[%s12 + $0x58] sm:$0xff]
    %v1123 = vld [vmem:[%s12 + $0x60] sm:$0xff]
    %v1124 = vld [vmem:[%s12 + $0x68] sm:$0xff]
    %v1125 = vld [vmem:[%s12 + $0x70] sm:$0xff]
    %v1126 = vld [vmem:[%s12 + $0x78] sm:$0xff]
    %v1127 = vld [vmem:[%s12 + $0x80] sm:$0xff]
    %v1128 = vld [vmem:[%s12 + $0x88] sm:$0xff]
    %v1129 = vld [vmem:[%s12 + $0x90] sm:$0xff]
    %v1130 = vld [vmem:[%s12 + $0x98] sm:$0xff]
    %v1131 = vld [vmem:[%s12 + $0xa0] sm:$0xff]
    %v1132 = vld [vmem:[%s12 + $0xa8] sm:$0xff]
    %v1133 = vld [vmem:[%s12 + $0xb0] sm:$0xff]
    %v1134 = vld [vmem:[%s12 + $0xb8] sm:$0xff]
    %v1135 = vld [vmem:[%s12 + $0xc0] sm:$0xff]
    %v1136 = vld [vmem:[%s12 + $0xc8] sm:$0xff]
    %v1137 = vld [vmem:[%s12 + $0xd0] sm:$0xff]
    %v1138 = vld [vmem:[%s12 + $0xd8] sm:$0xff]
    %v1139 = vld [vmem:[%s12 + $0xe0] sm:$0xff]
    %v1140 = vld [vmem:[%s12 + $0xe8] sm:$0xff]
    %v1141 = vld [vmem:[%s12 + $0xf0] sm:$0xff]
    %v1142 = vld [vmem:[%s12 + $0xf8] sm:$0xff]
    %v1143 = vlaneseq
    %v1144 = vand.u32 %v1143, 127
    %vm1145 = vcmp.ge.s32.totalorder %v1144, 0
    %vm1146 = vcmp.lt.s32.totalorder %v1144, 32
    %vm1147 = vmand %vm1145, %vm1146
    %v1148 = vsel %vm1147, 1.0, 0.0
    %vm1149 = vcmp.ge.s32.totalorder %v1144, 32
    %vm1150 = vcmp.lt.s32.totalorder %v1144, 64
    %vm1151 = vmand %vm1149, %vm1150
    %v1152 = vsel %vm1151, 1.0, 0.0
    %vm1153 = vcmp.ge.s32.totalorder %v1144, 64
    %vm1154 = vcmp.lt.s32.totalorder %v1144, 96
    %vm1155 = vmand %vm1153, %vm1154
    %v1156 = vsel %vm1155, 1.0, 0.0
    %vm1157 = vcmp.ge.s32.totalorder %v1144, 96
    %vm1158 = vcmp.lt.s32.totalorder %v1144, 128
    %vm1159 = vmand %vm1157, %vm1158
    %v1160 = vsel %vm1159, 1.0, 0.0
    %v1161 = vld [vmem:[%s0] sm:$0xff]
    %v1162 = vld [vmem:[%s0 + $0x8] sm:$0xff]
    %v1163 = vld [vmem:[%s1] sm:$0xff]
    %v1164 = vld [vmem:[%s2] sm:$0xff]
    %v1165 = vld [vmem:[%s2 + $0x8] sm:$0xff]
    %v1166 = vld [vmem:[%s3] sm:$0xff]
    %v1167 = vld [vmem:[%s3 + $0x8] sm:$0x7]
    %vm1168 = vcmask 89088
    %v1170 = vsel %vm1168, %v1164, 0
    %v1173 = vsel %vm1168, %v1165, 0
    %vm1175 = vcmask 1042432
    %v1177 = vsel %vm1175, %v1167, 0
    %1179 = vmatprep.subr.mxu0 0.0
    %1180 = vmatpush1.msra.mxu0 %v1166
    %1181 = vmatprep.subr.mxu0 0.0
    %1182 = vmatpush1.msra.mxu0 %v1177
    %1183 = vmatprep.subr.mxu0 0.0
    %1184 = vmatpush1.msra.mxu0 0.0
    %1185 = vmatprep.subr.mxu0 0.0
    %1186 = vmatpush1.msra.mxu0 0.0
    %1187 = vmatprep.subr.mxu0 0.0
    %1188 = vmatpush1.msra.mxu0 0.0
    %1189 = vmatprep.subr.mxu0 0.0
    %1190 = vmatpush1.msra.mxu0 0.0
    %1191 = vmatprep.subr.mxu0 0.0
    %1192 = vmatpush1.msra.mxu0 0.0
    %1193 = vmatprep.subr.mxu0 0.0
    %1194 = vmatpush1.msra.mxu0 0.0
    %1195 = vmatprep.subr.mxu0 0.0
    %1196 = vmatpush1.msra.mxu0 0.0
    %1197 = vmatprep.subr.mxu0 0.0
    %1198 = vmatpush1.msra.mxu0 0.0
    %1199 = vmatprep.subr.mxu0 0.0
    %1200 = vmatpush1.msra.mxu0 0.0
    %1201 = vmatprep.subr.mxu0 0.0
    %1202 = vmatpush1.msra.mxu0 0.0
    %1203 = vmatprep.subr.mxu0 0.0
    %1204 = vmatpush1.msra.mxu0 0.0
    %1205 = vmatprep.subr.mxu0 0.0
    %1206 = vmatpush1.msra.mxu0 0.0
    %1207 = vmatprep.subr.mxu0 0.0
    %1208 = vmatpush1.msra.mxu0 0.0
    %1209 = vmatprep.subr.mxu0 0.0
    %1210 = vmatpush1.msra.mxu0 0.0
    %1211 = vmatprep.subr.mxu0 0.0
    %1212 = vmatpush1.msra.mxu0 0.0
    %1213 = vmatprep.subr.mxu0 0.0
    %1214 = vmatpush1.msra.mxu0 0.0
    %1215 = vmatprep.subr.mxu0 0.0
    %1216 = vmatpush1.msra.mxu0 0.0
    %1217 = vmatprep.subr.mxu0 0.0
    %1218 = vmatpush1.msra.mxu0 0.0
    %1219 = vmatprep.subr.mxu0 0.0
    %1220 = vmatpush1.msra.mxu0 0.0
    %1221 = vmatprep.subr.mxu0 0.0
    %1222 = vmatpush1.msra.mxu0 0.0
    %1223 = vmatprep.subr.mxu0 0.0
    %1224 = vmatpush1.msra.mxu0 0.0
    %1225 = vmatprep.subr.mxu0 0.0
    %1226 = vmatpush1.msra.mxu0 0.0
    %1227 = vmatprep.subr.mxu0 0.0
    %1228 = vmatpush1.msra.mxu0 0.0
    %1229 = vmatprep.subr.mxu0 0.0
    %1230 = vmatpush1.msra.mxu0 0.0
    %1231 = vmatprep.subr.mxu0 0.0
    %1232 = vmatpush1.msra.mxu0 0.0
    %1233 = vmatprep.subr.mxu0 0.0
    %1234 = vmatpush1.msra.mxu0 0.0
    %1235 = vmatprep.subr.mxu0 0.0
    %1236 = vmatpush1.msra.mxu0 0.0
    %1237 = vmatprep.subr.mxu0 0.0
    %1238 = vmatpush1.msra.mxu0 0.0
    %1239 = vmatprep.subr.mxu0 0.0
    %1240 = vmatpush1.msra.mxu0 0.0
    %1241 = vmatprep.subr.mxu0 0.0
    %1242 = vmatpush1.msra.mxu0 0.0
    %1243 = vmatprep.mubr.f32.mxu0 0.0
    %1244 = vmatmul.mubr.f32.gmra.mrb[0].mxu0 %v1170
    %v1245 = vpop.f32.mrb[0].mxu0
    %v1246 = vadd.f32 0.0, %v1245
    %v1247 = vpop.f32.mrb[0].mxu0
    %1248 = vmatprep.mubr.f32.mxu0 0.0
    %1249 = vmatmul.mubr.f32.gmra.mrb[0].mxu0 %v1173
    %v1250 = vpop.f32.mrb[0].mxu0
    %v1251 = vadd.f32 0.0, %v1250
    %v1252 = vpop.f32.mrb[0].mxu0
    %1253 = vdwg.mxu0
    %vm1254 = vcmask 64512
    %v1256 = vsel %vm1254, %v1161, 0
    %v1259 = vsel %vm1254, %v1162, 0
    %1261 = vmatprep.subr.mxu0 0.0
    %1262 = vmatpush1.msra.mxu0 %v1163
    %1263 = vmatprep.subr.mxu0 0.0
    %1264 = vmatpush1.msra.mxu0 0.0
    %1265 = vmatprep.subr.mxu0 0.0
    %1266 = vmatpush1.msra.mxu0 0.0
    %1267 = vmatprep.subr.mxu0 0.0
    %1268 = vmatpush1.msra.mxu0 0.0
    %1269 = vmatprep.subr.mxu0 0.0
    %1270 = vmatpush1.msra.mxu0 0.0
    %1271 = vmatprep.subr.mxu0 0.0
    %1272 = vmatpush1.msra.mxu0 0.0
    %1273 = vmatprep.subr.mxu0 0.0
    %1274 = vmatpush1.msra.mxu0 0.0
    %1275 = vmatprep.subr.mxu0 0.0
    %1276 = vmatpush1.msra.mxu0 0.0
    %1277 = vmatprep.subr.mxu0 0.0
    %1278 = vmatpush1.msra.mxu0 0.0
    %1279 = vmatprep.subr.mxu0 0.0
    %1280 = vmatpush1.msra.mxu0 0.0
    %1281 = vmatprep.subr.mxu0 0.0
    %1282 = vmatpush1.msra.mxu0 0.0
    %1283 = vmatprep.subr.mxu0 0.0
    %1284 = vmatpush1.msra.mxu0 0.0
    %1285 = vmatprep.subr.mxu0 0.0
    %1286 = vmatpush1.msra.mxu0 0.0
    %1287 = vmatprep.subr.mxu0 0.0
    %1288 = vmatpush1.msra.mxu0 0.0
    %1289 = vmatprep.subr.mxu0 0.0
    %1290 = vmatpush1.msra.mxu0 0.0
    %1291 = vmatprep.subr.mxu0 0.0
    %1292 = vmatpush1.msra.mxu0 0.0
    %1293 = vmatprep.subr.mxu0 0.0
    %1294 = vmatpush1.msra.mxu0 0.0
    %1295 = vmatprep.subr.mxu0 0.0
    %1296 = vmatpush1.msra.mxu0 0.0
    %1297 = vmatprep.subr.mxu0 0.0
    %1298 = vmatpush1.msra.mxu0 0.0
    %1299 = vmatprep.subr.mxu0 0.0
    %1300 = vmatpush1.msra.mxu0 0.0
    %1301 = vmatprep.subr.mxu0 0.0
    %1302 = vmatpush1.msra.mxu0 0.0
    %1303 = vmatprep.subr.mxu0 0.0
    %1304 = vmatpush1.msra.mxu0 0.0
    %1305 = vmatprep.subr.mxu0 0.0
    %1306 = vmatpush1.msra.mxu0 0.0
    %1307 = vmatprep.subr.mxu0 0.0
    %1308 = vmatpush1.msra.mxu0 0.0
    %1309 = vmatprep.subr.mxu0 0.0
    %1310 = vmatpush1.msra.mxu0 0.0
    %1311 = vmatprep.subr.mxu0 0.0
    %1312 = vmatpush1.msra.mxu0 0.0
    %1313 = vmatprep.subr.mxu0 0.0
    %1314 = vmatpush1.msra.mxu0 0.0
    %1315 = vmatprep.subr.mxu0 0.0
    %1316 = vmatpush1.msra.mxu0 0.0
    %1317 = vmatprep.subr.mxu0 0.0
    %1318 = vmatpush1.msra.mxu0 0.0
    %1319 = vmatprep.subr.mxu0 0.0
    %1320 = vmatpush1.msra.mxu0 0.0
    %1321 = vmatprep.subr.mxu0 0.0
    %1322 = vmatpush1.msra.mxu0 0.0
    %1323 = vmatprep.subr.mxu0 0.0
    %1324 = vmatpush1.msra.mxu0 0.0
    %1325 = vmatprep.mubr.f32.mxu0 0.0
    %1326 = vmatmul.mubr.f32.gmra.mrb[0].mxu0 %v1256
    %v1327 = vpop.f32.mrb[0].mxu0
    %v1328 = vadd.f32 %v1246, %v1327
    %v1329 = vpop.f32.mrb[0].mxu0
    %1330 = vmatprep.mubr.f32.mxu0 0.0
    %1331 = vmatmul.mubr.f32.gmra.mrb[0].mxu0 %v1259
    %v1332 = vpop.f32.mrb[0].mxu0
    %v1333 = vadd.f32 %v1251, %v1332
    %v1334 = vpop.f32.mrb[0].mxu0
    %1335 = vdwg.mxu0
    %v1336 = vld [vmem:[%s16] sm:$0xff]
    %vm1337 = vcmask 261120
    %v1338 = vsel %vm1337, %v1328, 0.0
    %1339 = vadd.xlane.f32.xlu0 %v1338
    %v1340 = vpop.xlane.xlu0 %1339
    %v1341 = vsel %vm1337, %v1333, 0.0
    %1342 = vadd.xlane.f32.xlu0 %v1341
    %v1343 = vpop.xlane.xlu0 %1342
    %v1344 = vrcp.pop 32.0
    %v1345 = vmul.f32 %v1340, %v1344
    %v1346 = vmul.f32 %v1343, %v1344
    %v1347 = vsub.f32 %v1328, %v1345
    %v1348 = vsub.f32 %v1333, %v1346
    %v1349 = vmul.f32 %v1347, %v1347
    %v1350 = vmul.f32 %v1348, %v1348
    %v1351 = vsel %vm1337, %v1349, 0.0
    %1352 = vadd.xlane.f32.xlu0 %v1351
    %v1353 = vpop.xlane.xlu0 %1352
    %v1354 = vsel %vm1337, %v1350, 0.0
    %1355 = vadd.xlane.f32.xlu0 %v1354
    %v1356 = vpop.xlane.xlu0 %1355
    %v1357 = vmul.f32 %v1353, %v1344
    %v1358 = vmul.f32 %v1356, %v1344
    %v1359 = vadd.f32 %v1357, 1e-05
    %v1360 = vadd.f32 %v1358, 1e-05
    %v1361 = vrsqrt.pop %v1359
    %v1362 = vrsqrt.pop %v1360
    %v1363 = vmul.f32 %v1347, %v1361
    %v1364 = vmul.f32 %v1348, %v1362
    %v1365 = vlaneseq
    %v1366 = vshrl.u32 %v1365, 7
    %v1367 = vsub.s32 0, %v1366
    %v1368 = vrot.slane %v1336, %v1367
    %v1369 = vmul.f32 %v1363, %v1368
    %v1370 = vmul.f32 %v1364, %v1368
    %v1371 = vlaneseq
    %v1372 = vshrl.u32 %v1371, 7
    %v1373 = vsub.s32 1, %v1372
    %v1374 = vrot.slane %v1336, %v1373
    %v1375 = vadd.f32 %v1369, %v1374
    %v1376 = vadd.f32 %v1370, %v1374
    %v1377 = vld [vmem:[%s13] sm:$0xff]
    %v1378 = vld [vmem:[%s13 + $0x8] sm:$0xff]
    %v1379 = vld [vmem:[%s13 + $0x10] sm:$0xff]
    %v1380 = vld [vmem:[%s13 + $0x18] sm:$0xff]
    %v1381 = vld [vmem:[%s13 + $0x20] sm:$0xff]
    %v1382 = vld [vmem:[%s13 + $0x28] sm:$0xff]
    %v1383 = vld [vmem:[%s13 + $0x30] sm:$0xff]
    %v1384 = vld [vmem:[%s13 + $0x38] sm:$0xff]
    %v1385 = vld [vmem:[%s13 + $0x40] sm:$0xff]
    %v1386 = vld [vmem:[%s13 + $0x48] sm:$0xff]
    %v1387 = vld [vmem:[%s13 + $0x50] sm:$0xff]
    %v1388 = vld [vmem:[%s13 + $0x58] sm:$0xff]
    %v1389 = vld [vmem:[#allocation5] sm:$0x7]
    %v1391 = vlaneseq
    %v1392 = vshrl.u32 %v1391, 7
    %v1393 = vsub.s32 0, %v1392
    %v1394 = vrot.slane %v1389, %v1393
    %v1395 = vlaneseq
    %v1396 = vshrl.u32 %v1395, 7
    %v1397 = vsub.s32 1, %v1396
    %v1398 = vrot.slane %v1389, %v1397
    %v1399 = vlaneseq
    %v1400 = vshrl.u32 %v1399, 7
    %v1401 = vsub.s32 2, %v1400
    %v1402 = vrot.slane %v1389, %v1401
    %v1407 = vsel %vm1337, %v1375, 0
    %v1410 = vsel %vm1337, %v1376, 0
    %1412 = vmatprep.subr.mxu0 %v1378
    %1413 = vmatpush1.msra.mxu0 %v1377
    %1414 = vmatprep.subr.mxu0 %v1381
    %1415 = vmatpush1.msra.mxu0 %v1380
    %1416 = vmatprep.subr.mxu0 %v1384
    %1417 = vmatpush1.msra.mxu0 %v1383
    %1418 = vmatprep.subr.mxu0 %v1387
    %1419 = vmatpush1.msra.mxu0 %v1386
    %1420 = vmatprep.subr.mxu0 0.0
    %1421 = vmatpush1.msra.mxu0 0.0
    %1422 = vmatprep.subr.mxu0 0.0
    %1423 = vmatpush1.msra.mxu0 0.0
    %1424 = vmatprep.subr.mxu0 0.0
    %1425 = vmatpush1.msra.mxu0 0.0
    %1426 = vmatprep.subr.mxu0 0.0
    %1427 = vmatpush1.msra.mxu0 0.0
    %1428 = vmatprep.subr.mxu0 0.0
    %1429 = vmatpush1.msra.mxu0 0.0
    %1430 = vmatprep.subr.mxu0 0.0
    %1431 = vmatpush1.msra.mxu0 0.0
    %1432 = vmatprep.subr.mxu0 0.0
    %1433 = vmatpush1.msra.mxu0 0.0
    %1434 = vmatprep.subr.mxu0 0.0
    %1435 = vmatpush1.msra.mxu0 0.0
    %1436 = vmatprep.subr.mxu0 0.0
    %1437 = vmatpush1.msra.mxu0 0.0
    %1438 = vmatprep.subr.mxu0 0.0
    %1439 = vmatpush1.msra.mxu0 0.0
    %1440 = vmatprep.subr.mxu0 0.0
    %1441 = vmatpush1.msra.mxu0 0.0
    %1442 = vmatprep.subr.mxu0 0.0
    %1443 = vmatpush1.msra.mxu0 0.0
    %1444 = vmatprep.subr.mxu0 0.0
    %1445 = vmatpush1.msra.mxu0 0.0
    %1446 = vmatprep.subr.mxu0 0.0
    %1447 = vmatpush1.msra.mxu0 0.0
    %1448 = vmatprep.subr.mxu0 0.0
    %1449 = vmatpush1.msra.mxu0 0.0
    %1450 = vmatprep.subr.mxu0 0.0
    %1451 = vmatpush1.msra.mxu0 0.0
    %1452 = vmatprep.subr.mxu0 0.0
    %1453 = vmatpush1.msra.mxu0 0.0
    %1454 = vmatprep.subr.mxu0 0.0
    %1455 = vmatpush1.msra.mxu0 0.0
    %1456 = vmatprep.subr.mxu0 0.0
    %1457 = vmatpush1.msra.mxu0 0.0
    %1458 = vmatprep.subr.mxu0 0.0
    %1459 = vmatpush1.msra.mxu0 0.0
    %1460 = vmatprep.subr.mxu0 0.0
    %1461 = vmatpush1.msra.mxu0 0.0
    %1462 = vmatprep.subr.mxu0 0.0
    %1463 = vmatpush1.msra.mxu0 0.0
    %1464 = vmatprep.subr.mxu0 0.0
    %1465 = vmatpush1.msra.mxu0 0.0
    %1466 = vmatprep.subr.mxu0 0.0
    %1467 = vmatpush1.msra.mxu0 0.0
    %1468 = vmatprep.subr.mxu0 0.0
    %1469 = vmatpush1.msra.mxu0 0.0
    %1470 = vmatprep.subr.mxu0 0.0
    %1471 = vmatpush1.msra.mxu0 0.0
    %1472 = vmatprep.subr.mxu0 0.0
    %1473 = vmatpush1.msra.mxu0 0.0
    %1474 = vmatprep.subr.mxu0 0.0
    %1475 = vmatpush1.msra.mxu0 0.0
    %1476 = vmatprep.mubr.f32.mxu0 0.0
    %1477 = vmatmul.mubr.f32.gmra.mrb[0].mxu0 %v1407
    %v1478 = vpop.f32.mrb[0].mxu0
    %v1479 = vadd.f32 %v1394, %v1478
    %v1480 = vpop.f32.mrb[0].mxu0
    %v1481 = vadd.f32 %v1398, %v1480
    %1482 = vmatprep.mubr.f32.mxu0 0.0
    %1483 = vmatmul.mubr.f32.gmra.mrb[0].mxu0 %v1410
    %v1484 = vpop.f32.mrb[0].mxu0
    %v1485 = vadd.f32 %v1394, %v1484
    %v1486 = vpop.f32.mrb[0].mxu0
    %v1487 = vadd.f32 %v1398, %v1486
    %1488 = vdwg.mxu0
    %1489 = vmatprep.subr.mxu0 0.0
    %1490 = vmatpush1.msra.mxu0 %v1379
    %1491 = vmatprep.subr.mxu0 0.0
    %1492 = vmatpush1.msra.mxu0 %v1382
    %1493 = vmatprep.subr.mxu0 0.0
    %1494 = vmatpush1.msra.mxu0 %v1385
    %1495 = vmatprep.subr.mxu0 0.0
    %1496 = vmatpush1.msra.mxu0 %v1388
    %1497 = vmatprep.subr.mxu0 0.0
    %1498 = vmatpush1.msra.mxu0 0.0
    %1499 = vmatprep.subr.mxu0 0.0
    %1500 = vmatpush1.msra.mxu0 0.0
    %1501 = vmatprep.subr.mxu0 0.0
    %1502 = vmatpush1.msra.mxu0 0.0
    %1503 = vmatprep.subr.mxu0 0.0
    %1504 = vmatpush1.msra.mxu0 0.0
    %1505 = vmatprep.subr.mxu0 0.0
    %1506 = vmatpush1.msra.mxu0 0.0
    %1507 = vmatprep.subr.mxu0 0.0
    %1508 = vmatpush1.msra.mxu0 0.0
    %1509 = vmatprep.subr.mxu0 0.0
    %1510 = vmatpush1.msra.mxu0 0.0
    %1511 = vmatprep.subr.mxu0 0.0
    %1512 = vmatpush1.msra.mxu0 0.0
    %1513 = vmatprep.subr.mxu0 0.0
    %1514 = vmatpush1.msra.mxu0 0.0
    %1515 = vmatprep.subr.mxu0 0.0
    %1516 = vmatpush1.msra.mxu0 0.0
    %1517 = vmatprep.subr.mxu0 0.0
    %1518 = vmatpush1.msra.mxu0 0.0
    %1519 = vmatprep.subr.mxu0 0.0
    %1520 = vmatpush1.msra.mxu0 0.0
    %1521 = vmatprep.subr.mxu0 0.0
    %1522 = vmatpush1.msra.mxu0 0.0
    %1523 = vmatprep.subr.mxu0 0.0
    %1524 = vmatpush1.msra.mxu0 0.0
    %1525 = vmatprep.subr.mxu0 0.0
    %1526 = vmatpush1.msra.mxu0 0.0
    %1527 = vmatprep.subr.mxu0 0.0
    %1528 = vmatpush1.msra.mxu0 0.0
    %1529 = vmatprep.subr.mxu0 0.0
    %1530 = vmatpush1.msra.mxu0 0.0
    %1531 = vmatprep.subr.mxu0 0.0
    %1532 = vmatpush1.msra.mxu0 0.0
    %1533 = vmatprep.subr.mxu0 0.0
    %1534 = vmatpush1.msra.mxu0 0.0
    %1535 = vmatprep.subr.mxu0 0.0
    %1536 = vmatpush1.msra.mxu0 0.0
    %1537 = vmatprep.subr.mxu0 0.0
    %1538 = vmatpush1.msra.mxu0 0.0
    %1539 = vmatprep.subr.mxu0 0.0
    %1540 = vmatpush1.msra.mxu0 0.0
    %1541 = vmatprep.subr.mxu0 0.0
    %1542 = vmatpush1.msra.mxu0 0.0
    %1543 = vmatprep.subr.mxu0 0.0
    %1544 = vmatpush1.msra.mxu0 0.0
    %1545 = vmatprep.subr.mxu0 0.0
    %1546 = vmatpush1.msra.mxu0 0.0
    %1547 = vmatprep.subr.mxu0 0.0
    %1548 = vmatpush1.msra.mxu0 0.0
    %1549 = vmatprep.subr.mxu0 0.0
    %1550 = vmatpush1.msra.mxu0 0.0
    %1551 = vmatprep.subr.mxu0 0.0
    %1552 = vmatpush1.msra.mxu0 0.0
    %1553 = vmatprep.mubr.f32.mxu0 0.0
    %1554 = vmatmul.mubr.f32.gmra.mrb[0].mxu0 %v1407
    %v1555 = vpop.f32.mrb[0].mxu0
    %v1556 = vadd.f32 %v1402, %v1555
    %v1557 = vpop.f32.mrb[0].mxu0
    %1558 = vmatprep.mubr.f32.mxu0 0.0
    %1559 = vmatmul.mubr.f32.gmra.mrb[0].mxu0 %v1410
    %v1560 = vpop.f32.mrb[0].mxu0
    %v1561 = vadd.f32 %v1402, %v1560
    %v1562 = vpop.f32.mrb[0].mxu0
    %1563 = vdwg.mxu0
    %v1564 = vmul.f32 %v1479, %v1148
    %v1565 = vmul.f32 %v1485, %v1148
    %1566 = vmatprep.subr.mxu0 0.0
    %1567 = vmatpush1.xpose.msra.mxu0 %v1481
    %1568 = vmatprep.subr.mxu0 0.0
    %1569 = vmatpush1.xpose.msra.mxu0 %v1487
    %1570 = vmatprep.subr.mxu0 0.0
    %1571 = vmatpush1.xpose.msra.mxu0 0.0
    %1572 = vmatprep.subr.mxu0 0.0
    %1573 = vmatpush1.xpose.msra.mxu0 0.0
    %1574 = vmatprep.subr.mxu0 0.0
    %1575 = vmatpush1.xpose.msra.mxu0 0.0
    %1576 = vmatprep.subr.mxu0 0.0
    %1577 = vmatpush1.xpose.msra.mxu0 0.0
    %1578 = vmatprep.subr.mxu0 0.0
    %1579 = vmatpush1.xpose.msra.mxu0 0.0
    %1580 = vmatprep.subr.mxu0 0.0
    %1581 = vmatpush1.xpose.msra.mxu0 0.0
    %1582 = vmatprep.subr.mxu0 0.0
    %1583 = vmatpush1.xpose.msra.mxu0 0.0
    %1584 = vmatprep.subr.mxu0 0.0
    %1585 = vmatpush1.xpose.msra.mxu0 0.0
    %1586 = vmatprep.subr.mxu0 0.0
    %1587 = vmatpush1.xpose.msra.mxu0 0.0
    %1588 = vmatprep.subr.mxu0 0.0
    %1589 = vmatpush1.xpose.msra.mxu0 0.0
    %1590 = vmatprep.subr.mxu0 0.0
    %1591 = vmatpush1.xpose.msra.mxu0 0.0
    %1592 = vmatprep.subr.mxu0 0.0
    %1593 = vmatpush1.xpose.msra.mxu0 0.0
    %1594 = vmatprep.subr.mxu0 0.0
    %1595 = vmatpush1.xpose.msra.mxu0 0.0
    %1596 = vmatprep.subr.mxu0 0.0
    %1597 = vmatpush1.xpose.msra.mxu0 0.0
    %1598 = vmatprep.subr.mxu0 0.0
    %1599 = vmatpush1.xpose.msra.mxu0 0.0
    %1600 = vmatprep.subr.mxu0 0.0
    %1601 = vmatpush1.xpose.msra.mxu0 0.0
    %1602 = vmatprep.subr.mxu0 0.0
    %1603 = vmatpush1.xpose.msra.mxu0 0.0
    %1604 = vmatprep.subr.mxu0 0.0
    %1605 = vmatpush1.xpose.msra.mxu0 0.0
    %1606 = vmatprep.subr.mxu0 0.0
    %1607 = vmatpush1.xpose.msra.mxu0 0.0
    %1608 = vmatprep.subr.mxu0 0.0
    %1609 = vmatpush1.xpose.msra.mxu0 0.0
    %1610 = vmatprep.subr.mxu0 0.0
    %1611 = vmatpush1.xpose.msra.mxu0 0.0
    %1612 = vmatprep.subr.mxu0 0.0
    %1613 = vmatpush1.xpose.msra.mxu0 0.0
    %1614 = vmatprep.subr.mxu0 0.0
    %1615 = vmatpush1.xpose.msra.mxu0 0.0
    %1616 = vmatprep.subr.mxu0 0.0
    %1617 = vmatpush1.xpose.msra.mxu0 0.0
    %1618 = vmatprep.subr.mxu0 0.0
    %1619 = vmatpush1.xpose.msra.mxu0 0.0
    %1620 = vmatprep.subr.mxu0 0.0
    %1621 = vmatpush1.xpose.msra.mxu0 0.0
    %1622 = vmatprep.subr.mxu0 0.0
    %1623 = vmatpush1.xpose.msra.mxu0 0.0
    %1624 = vmatprep.subr.mxu0 0.0
    %1625 = vmatpush1.xpose.msra.mxu0 0.0
    %1626 = vmatprep.subr.mxu0 0.0
    %1627 = vmatpush1.xpose.msra.mxu0 0.0
    %1628 = vmatprep.subr.mxu0 0.0
    %1629 = vmatpush1.xpose.msra.mxu0 0.0
    %1630 = vmatprep.mubr.f32.mxu0 0.0
    %1631 = vmatmul.mubr.f32.gmra.mrb[0].mxu0 %v1564
    %v1632 = vpop.f32.mrb[0].mxu0
    %v1633 = vadd.f32 0.0, %v1632
    %v1634 = vpop.f32.mrb[0].mxu0
    %1635 = vmatprep.mubr.f32.mxu0 0.0
    %1636 = vmatmul.mubr.f32.gmra.mrb[0].mxu0 %v1565
    %v1637 = vpop.f32.mrb[0].mxu0
    %v1638 = vadd.f32 0.0, %v1637
    %v1639 = vpop.f32.mrb[0].mxu0
    %1640 = vdwg.mxu0
    %v1641 = vmul.f32 %v1633, 0.17677669
    %v1642 = vmul.f32 %v1638, 0.17677669
    %v1643 = vlaneseq
    %v1644 = vshrl.u32 %v1643, 7
    %v1645 = vsub.s32 0, %v1644
    %v1646 = vrot.slane %v1105, %v1645
    %v1647 = vlaneseq
    %v1648 = vshrl.u32 %v1647, 7
    %v1649 = vsub.s32 0, %v1648
    %v1650 = vrot.slane %v1106, %v1649
    %v1651 = vmul.f32 %v1107, %v1646
    %v1652 = vmul.f32 %v1108, %v1650
    %v1653 = vmul.f32 %v1109, %v1646
    %v1654 = vmul.f32 %v1110, %v1650
    %1655 = vmatprep.subr.mxu0 0.0
    %1656 = vmatpush1.msra.mxu0 %v1111
    %1657 = vmatprep.subr.mxu0 0.0
    %1658 = vmatpush1.msra.mxu0 %v1112
    %1659 = vmatprep.subr.mxu0 0.0
    %1660 = vmatpush1.msra.mxu0 %v1113
    %1661 = vmatprep.subr.mxu0 0.0
    %1662 = vmatpush1.msra.mxu0 %v1114
    %1663 = vmatprep.subr.mxu0 0.0
    %1664 = vmatpush1.msra.mxu0 %v1115
    %1665 = vmatprep.subr.mxu0 0.0
    %1666 = vmatpush1.msra.mxu0 %v1116
    %1667 = vmatprep.subr.mxu0 0.0
    %1668 = vmatpush1.msra.mxu0 %v1117
    %1669 = vmatprep.subr.mxu0 0.0
    %1670 = vmatpush1.msra.mxu0 %v1118
    %1671 = vmatprep.subr.mxu0 0.0
    %1672 = vmatpush1.msra.mxu0 %v1119
    %1673 = vmatprep.subr.mxu0 0.0
    %1674 = vmatpush1.msra.mxu0 %v1120
    %1675 = vmatprep.subr.mxu0 0.0
    %1676 = vmatpush1.msra.mxu0 %v1121
    %1677 = vmatprep.subr.mxu0 0.0
    %1678 = vmatpush1.msra.mxu0 %v1122
    %1679 = vmatprep.subr.mxu0 0.0
    %1680 = vmatpush1.msra.mxu0 %v1123
    %1681 = vmatprep.subr.mxu0 0.0
    %1682 = vmatpush1.msra.mxu0 %v1124
    %1683 = vmatprep.subr.mxu0 0.0
    %1684 = vmatpush1.msra.mxu0 %v1125
    %1685 = vmatprep.subr.mxu0 0.0
    %1686 = vmatpush1.msra.mxu0 %v1126
    %1687 = vmatprep.subr.mxu0 0.0
    %1688 = vmatpush1.msra.mxu0 %v1127
    %1689 = vmatprep.subr.mxu0 0.0
    %1690 = vmatpush1.msra.mxu0 %v1128
    %1691 = vmatprep.subr.mxu0 0.0
    %1692 = vmatpush1.msra.mxu0 %v1129
    %1693 = vmatprep.subr.mxu0 0.0
    %1694 = vmatpush1.msra.mxu0 %v1130
    %1695 = vmatprep.subr.mxu0 0.0
    %1696 = vmatpush1.msra.mxu0 %v1131
    %1697 = vmatprep.subr.mxu0 0.0
    %1698 = vmatpush1.msra.mxu0 %v1132
    %1699 = vmatprep.subr.mxu0 0.0
    %1700 = vmatpush1.msra.mxu0 %v1133
    %1701 = vmatprep.subr.mxu0 0.0
    %1702 = vmatpush1.msra.mxu0 %v1134
    %1703 = vmatprep.subr.mxu0 0.0
    %1704 = vmatpush1.msra.mxu0 %v1135
    %1705 = vmatprep.subr.mxu0 0.0
    %1706 = vmatpush1.msra.mxu0 %v1136
    %1707 = vmatprep.subr.mxu0 0.0
    %1708 = vmatpush1.msra.mxu0 %v1137
    %1709 = vmatprep.subr.mxu0 0.0
    %1710 = vmatpush1.msra.mxu0 %v1138
    %1711 = vmatprep.subr.mxu0 0.0
    %1712 = vmatpush1.msra.mxu0 %v1139
    %1713 = vmatprep.subr.mxu0 0.0
    %1714 = vmatpush1.msra.mxu0 %v1140
    %1715 = vmatprep.subr.mxu0 0.0
    %1716 = vmatpush1.msra.mxu0 %v1141
    %1717 = vmatprep.subr.mxu0 0.0
    %1718 = vmatpush1.msra.mxu0 %v1142
    %1719 = vmatprep.mubr.f32.mxu0 %v1652
    %1720 = vmatmul.mubr.f32.gmra.mrb[0].mxu0 %v1651
    %v1721 = vpop.f32.mrb[0].mxu0
    %v1722 = vadd.f32 0.0, %v1721
    %v1723 = vpop.f32.mrb[0].mxu0
    %1724 = vmatprep.mubr.f32.mxu0 %v1654
    %1725 = vmatmul.mubr.f32.gmra.mrb[0].mxu0 %v1653
    %v1726 = vpop.f32.mrb[0].mxu0
    %v1727 = vadd.f32 0.0, %v1726
    %v1728 = vpop.f32.mrb[0].mxu0
    %1729 = vdwg.mxu0
    %v1730 = vadd.f32 %v1641, %v1722
    %v1731 = vadd.f32 %v1642, %v1727
    %v1732 = vsel %vm377, %v1730, -inf
    %1733 = vmax.xlane.f32.xlu0 %v1732
    %v1734 = vpop.xlane.xlu0 %1733
    %v1735 = vsel %vm377, %v1731, -inf
    %1736 = vmax.xlane.f32.xlu0 %v1735
    %v1737 = vpop.xlane.xlu0 %1736
    %v1738 = vsub.f32 %v1730, %v1734
    %v1739 = vsub.f32 %v1731, %v1737
    %v1740 = vmul.f32 %v1738, 1.442695
    %v1741 = vpow.pop %v1740
    %v1742 = vmul.f32 %v1739, 1.442695
    %v1743 = vpow.pop %v1742
    %v1744 = vsel %vm377, %v1741, 0.0
    %1745 = vadd.xlane.f32.xlu0 %v1744
    %v1746 = vpop.xlane.xlu0 %1745
    %v1747 = vsel %vm377, %v1743, 0.0
    %1748 = vadd.xlane.f32.xlu0 %v1747
    %v1749 = vpop.xlane.xlu0 %1748
    %v1750 = vrcp.pop %v1746
    %v1751 = vmul.f32 %v1741, %v1750
    %v1752 = vrcp.pop %v1749
    %v1753 = vmul.f32 %v1743, %v1752
    %v1754 = vmul.f32 %v1556, %v1148
    %v1755 = vmul.f32 %v1561, %v1148
    %v1756 = vmul.f32 %v1479, %v1152
    %v1757 = vmul.f32 %v1485, %v1152
    %1758 = vmatprep.subr.mxu0 0.0
    %1759 = vmatpush1.xpose.msra.mxu0 %v1481
    %1760 = vmatprep.subr.mxu0 0.0
    %1761 = vmatpush1.xpose.msra.mxu0 %v1487
    %1762 = vmatprep.subr.mxu0 0.0
    %1763 = vmatpush1.xpose.msra.mxu0 0.0
    %1764 = vmatprep.subr.mxu0 0.0
    %1765 = vmatpush1.xpose.msra.mxu0 0.0
    %1766 = vmatprep.subr.mxu0 0.0
    %1767 = vmatpush1.xpose.msra.mxu0 0.0
    %1768 = vmatprep.subr.mxu0 0.0
    %1769 = vmatpush1.xpose.msra.mxu0 0.0
    %1770 = vmatprep.subr.mxu0 0.0
    %1771 = vmatpush1.xpose.msra.mxu0 0.0
    %1772 = vmatprep.subr.mxu0 0.0
    %1773 = vmatpush1.xpose.msra.mxu0 0.0
    %1774 = vmatprep.subr.mxu0 0.0
    %1775 = vmatpush1.xpose.msra.mxu0 0.0
    %1776 = vmatprep.subr.mxu0 0.0
    %1777 = vmatpush1.xpose.msra.mxu0 0.0
    %1778 = vmatprep.subr.mxu0 0.0
    %1779 = vmatpush1.xpose.msra.mxu0 0.0
    %1780 = vmatprep.subr.mxu0 0.0
    %1781 = vmatpush1.xpose.msra.mxu0 0.0
    %1782 = vmatprep.subr.mxu0 0.0
    %1783 = vmatpush1.xpose.msra.mxu0 0.0
    %1784 = vmatprep.subr.mxu0 0.0
    %1785 = vmatpush1.xpose.msra.mxu0 0.0
    %1786 = vmatprep.subr.mxu0 0.0
    %1787 = vmatpush1.xpose.msra.mxu0 0.0
    %1788 = vmatprep.subr.mxu0 0.0
    %1789 = vmatpush1.xpose.msra.mxu0 0.0
    %1790 = vmatprep.subr.mxu0 0.0
    %1791 = vmatpush1.xpose.msra.mxu0 0.0
    %1792 = vmatprep.subr.mxu0 0.0
    %1793 = vmatpush1.xpose.msra.mxu0 0.0
    %1794 = vmatprep.subr.mxu0 0.0
    %1795 = vmatpush1.xpose.msra.mxu0 0.0
    %1796 = vmatprep.subr.mxu0 0.0
    %1797 = vmatpush1.xpose.msra.mxu0 0.0
    %1798 = vmatprep.subr.mxu0 0.0
    %1799 = vmatpush1.xpose.msra.mxu0 0.0
    %1800 = vmatprep.subr.mxu0 0.0
    %1801 = vmatpush1.xpose.msra.mxu0 0.0
    %1802 = vmatprep.subr.mxu0 0.0
    %1803 = vmatpush1.xpose.msra.mxu0 0.0
    %1804 = vmatprep.subr.mxu0 0.0
    %1805 = vmatpush1.xpose.msra.mxu0 0.0
    %1806 = vmatprep.subr.mxu0 0.0
    %1807 = vmatpush1.xpose.msra.mxu0 0.0
    %1808 = vmatprep.subr.mxu0 0.0
    %1809 = vmatpush1.xpose.msra.mxu0 0.0
    %1810 = vmatprep.subr.mxu0 0.0
    %1811 = vmatpush1.xpose.msra.mxu0 0.0
    %1812 = vmatprep.subr.mxu0 0.0
    %1813 = vmatpush1.xpose.msra.mxu0 0.0
    %1814 = vmatprep.subr.mxu0 0.0
    %1815 = vmatpush1.xpose.msra.mxu0 0.0
    %1816 = vmatprep.subr.mxu0 0.0
    %1817 = vmatpush1.xpose.msra.mxu0 0.0
    %1818 = vmatprep.subr.mxu0 0.0
    %1819 = vmatpush1.xpose.msra.mxu0 0.0
    %1820 = vmatprep.subr.mxu0 0.0
    %1821 = vmatpush1.xpose.msra.mxu0 0.0
    %1822 = vmatprep.mubr.f32.mxu0 0.0
    %1823 = vmatmul.mubr.f32.gmra.mrb[0].mxu0 %v1756
    %v1824 = vpop.f32.mrb[0].mxu0
    %v1825 = vadd.f32 0.0, %v1824
    %v1826 = vpop.f32.mrb[0].mxu0
    %1827 = vmatprep.mubr.f32.mxu0 0.0
    %1828 = vmatmul.mubr.f32.gmra.mrb[0].mxu0 %v1757
    %v1829 = vpop.f32.mrb[0].mxu0
    %v1830 = vadd.f32 0.0, %v1829
    %v1831 = vpop.f32.mrb[0].mxu0
    %1832 = vdwg.mxu0
    %v1833 = vmul.f32 %v1825, 0.17677669
    %v1834 = vmul.f32 %v1830, 0.17677669
    %v1835 = vlaneseq
    %v1836 = vshrl.u32 %v1835, 7
    %v1837 = vsub.s32 1, %v1836
    %v1838 = vrot.slane %v1105, %v1837
    %v1839 = vlaneseq
    %v1840 = vshrl.u32 %v1839, 7
    %v1841 = vsub.s32 1, %v1840
    %v1842 = vrot.slane %v1106, %v1841
    %v1843 = vmul.f32 %v1107, %v1838
    %v1844 = vmul.f32 %v1108, %v1842
    %v1845 = vmul.f32 %v1109, %v1838
    %v1846 = vmul.f32 %v1110, %v1842
    %1847 = vmatprep.subr.mxu0 0.0
    %1848 = vmatpush1.msra.mxu0 %v1111
    %1849 = vmatprep.subr.mxu0 0.0
    %1850 = vmatpush1.msra.mxu0 %v1112
    %1851 = vmatprep.subr.mxu0 0.0
    %1852 = vmatpush1.msra.mxu0 %v1113
    %1853 = vmatprep.subr.mxu0 0.0
    %1854 = vmatpush1.msra.mxu0 %v1114
    %1855 = vmatprep.subr.mxu0 0.0
    %1856 = vmatpush1.msra.mxu0 %v1115
    %1857 = vmatprep.subr.mxu0 0.0
    %1858 = vmatpush1.msra.mxu0 %v1116
    %1859 = vmatprep.subr.mxu0 0.0
    %1860 = vmatpush1.msra.mxu0 %v1117
    %1861 = vmatprep.subr.mxu0 0.0
    %1862 = vmatpush1.msra.mxu0 %v1118
    %1863 = vmatprep.subr.mxu0 0.0
    %1864 = vmatpush1.msra.mxu0 %v1119
    %1865 = vmatprep.subr.mxu0 0.0
    %1866 = vmatpush1.msra.mxu0 %v1120
    %1867 = vmatprep.subr.mxu0 0.0
    %1868 = vmatpush1.msra.mxu0 %v1121
    %1869 = vmatprep.subr.mxu0 0.0
    %1870 = vmatpush1.msra.mxu0 %v1122
    %1871 = vmatprep.subr.mxu0 0.0
    %1872 = vmatpush1.msra.mxu0 %v1123
    %1873 = vmatprep.subr.mxu0 0.0
    %1874 = vmatpush1.msra.mxu0 %v1124
    %1875 = vmatprep.subr.mxu0 0.0
    %1876 = vmatpush1.msra.mxu0 %v1125
    %1877 = vmatprep.subr.mxu0 0.0
    %1878 = vmatpush1.msra.mxu0 %v1126
    %1879 = vmatprep.subr.mxu0 0.0
    %1880 = vmatpush1.msra.mxu0 %v1127
    %1881 = vmatprep.subr.mxu0 0.0
    %1882 = vmatpush1.msra.mxu0 %v1128
    %1883 = vmatprep.subr.mxu0 0.0
    %1884 = vmatpush1.msra.mxu0 %v1129
    %1885 = vmatprep.subr.mxu0 0.0
    %1886 = vmatpush1.msra.mxu0 %v1130
    %1887 = vmatprep.subr.mxu0 0.0
    %1888 = vmatpush1.msra.mxu0 %v1131
    %1889 = vmatprep.subr.mxu0 0.0
    %1890 = vmatpush1.msra.mxu0 %v1132
    %1891 = vmatprep.subr.mxu0 0.0
    %1892 = vmatpush1.msra.mxu0 %v1133
    %1893 = vmatprep.subr.mxu0 0.0
    %1894 = vmatpush1.msra.mxu0 %v1134
    %1895 = vmatprep.subr.mxu0 0.0
    %1896 = vmatpush1.msra.mxu0 %v1135
    %1897 = vmatprep.subr.mxu0 0.0
    %1898 = vmatpush1.msra.mxu0 %v1136
    %1899 = vmatprep.subr.mxu0 0.0
    %1900 = vmatpush1.msra.mxu0 %v1137
    %1901 = vmatprep.subr.mxu0 0.0
    %1902 = vmatpush1.msra.mxu0 %v1138
    %1903 = vmatprep.subr.mxu0 0.0
    %1904 = vmatpush1.msra.mxu0 %v1139
    %1905 = vmatprep.subr.mxu0 0.0
    %1906 = vmatpush1.msra.mxu0 %v1140
    %1907 = vmatprep.subr.mxu0 0.0
    %1908 = vmatpush1.msra.mxu0 %v1141
    %1909 = vmatprep.subr.mxu0 0.0
    %1910 = vmatpush1.msra.mxu0 %v1142
    %1911 = vmatprep.mubr.f32.mxu0 %v1844
    %1912 = vmatmul.mubr.f32.gmra.mrb[0].mxu0 %v1843
    %v1913 = vpop.f32.mrb[0].mxu0
    %v1914 = vadd.f32 0.0, %v1913
    %v1915 = vpop.f32.mrb[0].mxu0
    %1916 = vmatprep.mubr.f32.mxu0 %v1846
    %1917 = vmatmul.mubr.f32.gmra.mrb[0].mxu0 %v1845
    %v1918 = vpop.f32.mrb[0].mxu0
    %v1919 = vadd.f32 0.0, %v1918
    %v1920 = vpop.f32.mrb[0].mxu0
    %1921 = vdwg.mxu0
    %v1922 = vadd.f32 %v1833, %v1914
    %v1923 = vadd.f32 %v1834, %v1919
    %v1924 = vsel %vm377, %v1922, -inf
    %1925 = vmax.xlane.f32.xlu0 %v1924
    %v1926 = vpop.xlane.xlu0 %1925
    %v1927 = vsel %vm377, %v1923, -inf
    %1928 = vmax.xlane.f32.xlu0 %v1927
    %v1929 = vpop.xlane.xlu0 %1928
    %v1930 = vsub.f32 %v1922, %v1926
    %v1931 = vsub.f32 %v1923, %v1929
    %v1932 = vmul.f32 %v1930, 1.442695
    %v1933 = vpow.pop %v1932
    %v1934 = vmul.f32 %v1931, 1.442695
    %v1935 = vpow.pop %v1934
    %v1936 = vsel %vm377, %v1933, 0.0
    %1937 = vadd.xlane.f32.xlu0 %v1936
    %v1938 = vpop.xlane.xlu0 %1937
    %v1939 = vsel %vm377, %v1935, 0.0
    %1940 = vadd.xlane.f32.xlu0 %v1939
    %v1941 = vpop.xlane.xlu0 %1940
    %v1942 = vrcp.pop %v1938
    %v1943 = vmul.f32 %v1933, %v1942
    %v1944 = vrcp.pop %v1941
    %v1945 = vmul.f32 %v1935, %v1944
    %v1946 = vmul.f32 %v1556, %v1152
    %v1947 = vmul.f32 %v1561, %v1152
    %v1949 = vsel %vm377, %v1943, 0
    %v1952 = vsel %vm377, %v1945, 0
    %1954 = vmatprep.subr.mxu0 0.0
    %1955 = vmatpush1.msra.mxu0 %v1946
    %1956 = vmatprep.subr.mxu0 0.0
    %1957 = vmatpush1.msra.mxu0 %v1947
    %1958 = vmatprep.subr.mxu0 0.0
    %1959 = vmatpush1.msra.mxu0 0.0
    %1960 = vmatprep.subr.mxu0 0.0
    %1961 = vmatpush1.msra.mxu0 0.0
    %1962 = vmatprep.subr.mxu0 0.0
    %1963 = vmatpush1.msra.mxu0 0.0
    %1964 = vmatprep.subr.mxu0 0.0
    %1965 = vmatpush1.msra.mxu0 0.0
    %1966 = vmatprep.subr.mxu0 0.0
    %1967 = vmatpush1.msra.mxu0 0.0
    %1968 = vmatprep.subr.mxu0 0.0
    %1969 = vmatpush1.msra.mxu0 0.0
    %1970 = vmatprep.subr.mxu0 0.0
    %1971 = vmatpush1.msra.mxu0 0.0
    %1972 = vmatprep.subr.mxu0 0.0
    %1973 = vmatpush1.msra.mxu0 0.0
    %1974 = vmatprep.subr.mxu0 0.0
    %1975 = vmatpush1.msra.mxu0 0.0
    %1976 = vmatprep.subr.mxu0 0.0
    %1977 = vmatpush1.msra.mxu0 0.0
    %1978 = vmatprep.subr.mxu0 0.0
    %1979 = vmatpush1.msra.mxu0 0.0
    %1980 = vmatprep.subr.mxu0 0.0
    %1981 = vmatpush1.msra.mxu0 0.0
    %1982 = vmatprep.subr.mxu0 0.0
    %1983 = vmatpush1.msra.mxu0 0.0
    %1984 = vmatprep.subr.mxu0 0.0
    %1985 = vmatpush1.msra.mxu0 0.0
    %1986 = vmatprep.subr.mxu0 0.0
    %1987 = vmatpush1.msra.mxu0 0.0
    %1988 = vmatprep.subr.mxu0 0.0
    %1989 = vmatpush1.msra.mxu0 0.0
    %1990 = vmatprep.subr.mxu0 0.0
    %1991 = vmatpush1.msra.mxu0 0.0
    %1992 = vmatprep.subr.mxu0 0.0
    %1993 = vmatpush1.msra.mxu0 0.0
    %1994 = vmatprep.subr.mxu0 0.0
    %1995 = vmatpush1.msra.mxu0 0.0
    %1996 = vmatprep.subr.mxu0 0.0
    %1997 = vmatpush1.msra.mxu0 0.0
    %1998 = vmatprep.subr.mxu0 0.0
    %1999 = vmatpush1.msra.mxu0 0.0
    %2000 = vmatprep.subr.mxu0 0.0
    %2001 = vmatpush1.msra.mxu0 0.0
    %2002 = vmatprep.subr.mxu0 0.0
    %2003 = vmatpush1.msra.mxu0 0.0
    %2004 = vmatprep.subr.mxu0 0.0
    %2005 = vmatpush1.msra.mxu0 0.0
    %2006 = vmatprep.subr.mxu0 0.0
    %2007 = vmatpush1.msra.mxu0 0.0
    %2008 = vmatprep.subr.mxu0 0.0
    %2009 = vmatpush1.msra.mxu0 0.0
    %2010 = vmatprep.subr.mxu0 0.0
    %2011 = vmatpush1.msra.mxu0 0.0
    %2012 = vmatprep.subr.mxu0 0.0
    %2013 = vmatpush1.msra.mxu0 0.0
    %2014 = vmatprep.subr.mxu0 0.0
    %2015 = vmatpush1.msra.mxu0 0.0
    %2016 = vmatprep.subr.mxu0 0.0
    %2017 = vmatpush1.msra.mxu0 0.0
    %2018 = vmatprep.mubr.f32.mxu0 0.0
    %2019 = vmatmul.mubr.f32.gmra.mrb[0].mxu0 %v1949
    %v2020 = vpop.f32.mrb[0].mxu0
    %v2021 = vadd.f32 0.0, %v2020
    %v2022 = vpop.f32.mrb[0].mxu0
    %2023 = vmatprep.mubr.f32.mxu0 0.0
    %2024 = vmatmul.mubr.f32.gmra.mrb[0].mxu0 %v1952
    %v2025 = vpop.f32.mrb[0].mxu0
    %v2026 = vadd.f32 0.0, %v2025
    %v2027 = vpop.f32.mrb[0].mxu0
    %2028 = vdwg.mxu0
    %v2030 = vsel %vm377, %v1751, 0
    %v2033 = vsel %vm377, %v1753, 0
    %2035 = vmatprep.subr.mxu0 0.0
    %2036 = vmatpush1.msra.mxu0 %v1754
    %2037 = vmatprep.subr.mxu0 0.0
    %2038 = vmatpush1.msra.mxu0 %v1755
    %2039 = vmatprep.subr.mxu0 0.0
    %2040 = vmatpush1.msra.mxu0 0.0
    %2041 = vmatprep.subr.mxu0 0.0
    %2042 = vmatpush1.msra.mxu0 0.0
    %2043 = vmatprep.subr.mxu0 0.0
    %2044 = vmatpush1.msra.mxu0 0.0
    %2045 = vmatprep.subr.mxu0 0.0
    %2046 = vmatpush1.msra.mxu0 0.0
    %2047 = vmatprep.subr.mxu0 0.0
    %2048 = vmatpush1.msra.mxu0 0.0
    %2049 = vmatprep.subr.mxu0 0.0
    %2050 = vmatpush1.msra.mxu0 0.0
    %2051 = vmatprep.subr.mxu0 0.0
    %2052 = vmatpush1.msra.mxu0 0.0
    %2053 = vmatprep.subr.mxu0 0.0
    %2054 = vmatpush1.msra.mxu0 0.0
    %2055 = vmatprep.subr.mxu0 0.0
    %2056 = vmatpush1.msra.mxu0 0.0
    %2057 = vmatprep.subr.mxu0 0.0
    %2058 = vmatpush1.msra.mxu0 0.0
    %2059 = vmatprep.subr.mxu0 0.0
    %2060 = vmatpush1.msra.mxu0 0.0
    %2061 = vmatprep.subr.mxu0 0.0
    %2062 = vmatpush1.msra.mxu0 0.0
    %2063 = vmatprep.subr.mxu0 0.0
    %2064 = vmatpush1.msra.mxu0 0.0
    %2065 = vmatprep.subr.mxu0 0.0
    %2066 = vmatpush1.msra.mxu0 0.0
    %2067 = vmatprep.subr.mxu0 0.0
    %2068 = vmatpush1.msra.mxu0 0.0
    %2069 = vmatprep.subr.mxu0 0.0
    %2070 = vmatpush1.msra.mxu0 0.0
    %2071 = vmatprep.subr.mxu0 0.0
    %2072 = vmatpush1.msra.mxu0 0.0
    %2073 = vmatprep.subr.mxu0 0.0
    %2074 = vmatpush1.msra.mxu0 0.0
    %2075 = vmatprep.subr.mxu0 0.0
    %2076 = vmatpush1.msra.mxu0 0.0
    %2077 = vmatprep.subr.mxu0 0.0
    %2078 = vmatpush1.msra.mxu0 0.0
    %2079 = vmatprep.subr.mxu0 0.0
    %2080 = vmatpush1.msra.mxu0 0.0
    %2081 = vmatprep.subr.mxu0 0.0
    %2082 = vmatpush1.msra.mxu0 0.0
    %2083 = vmatprep.subr.mxu0 0.0
    %2084 = vmatpush1.msra.mxu0 0.0
    %2085 = vmatprep.subr.mxu0 0.0
    %2086 = vmatpush1.msra.mxu0 0.0
    %2087 = vmatprep.subr.mxu0 0.0
    %2088 = vmatpush1.msra.mxu0 0.0
    %2089 = vmatprep.subr.mxu0 0.0
    %2090 = vmatpush1.msra.mxu0 0.0
    %2091 = vmatprep.subr.mxu0 0.0
    %2092 = vmatpush1.msra.mxu0 0.0
    %2093 = vmatprep.subr.mxu0 0.0
    %2094 = vmatpush1.msra.mxu0 0.0
    %2095 = vmatprep.subr.mxu0 0.0
    %2096 = vmatpush1.msra.mxu0 0.0
    %2097 = vmatprep.subr.mxu0 0.0
    %2098 = vmatpush1.msra.mxu0 0.0
    %2099 = vmatprep.mubr.f32.mxu0 0.0
    %2100 = vmatmul.mubr.f32.gmra.mrb[0].mxu0 %v2030
    %v2101 = vpop.f32.mrb[0].mxu0
    %v2102 = vadd.f32 %v2021, %v2101
    %v2103 = vpop.f32.mrb[0].mxu0
    %2104 = vmatprep.mubr.f32.mxu0 0.0
    %2105 = vmatmul.mubr.f32.gmra.mrb[0].mxu0 %v2033
    %v2106 = vpop.f32.mrb[0].mxu0
    %v2107 = vadd.f32 %v2026, %v2106
    %v2108 = vpop.f32.mrb[0].mxu0
    %2109 = vdwg.mxu0
    %v2110 = vmul.f32 %v1479, %v1156
    %v2111 = vmul.f32 %v1485, %v1156
    %2112 = vmatprep.subr.mxu0 0.0
    %2113 = vmatpush1.xpose.msra.mxu0 %v1481
    %2114 = vmatprep.subr.mxu0 0.0
    %2115 = vmatpush1.xpose.msra.mxu0 %v1487
    %2116 = vmatprep.subr.mxu0 0.0
    %2117 = vmatpush1.xpose.msra.mxu0 0.0
    %2118 = vmatprep.subr.mxu0 0.0
    %2119 = vmatpush1.xpose.msra.mxu0 0.0
    %2120 = vmatprep.subr.mxu0 0.0
    %2121 = vmatpush1.xpose.msra.mxu0 0.0
    %2122 = vmatprep.subr.mxu0 0.0
    %2123 = vmatpush1.xpose.msra.mxu0 0.0
    %2124 = vmatprep.subr.mxu0 0.0
    %2125 = vmatpush1.xpose.msra.mxu0 0.0
    %2126 = vmatprep.subr.mxu0 0.0
    %2127 = vmatpush1.xpose.msra.mxu0 0.0
    %2128 = vmatprep.subr.mxu0 0.0
    %2129 = vmatpush1.xpose.msra.mxu0 0.0
    %2130 = vmatprep.subr.mxu0 0.0
    %2131 = vmatpush1.xpose.msra.mxu0 0.0
    %2132 = vmatprep.subr.mxu0 0.0
    %2133 = vmatpush1.xpose.msra.mxu0 0.0
    %2134 = vmatprep.subr.mxu0 0.0
    %2135 = vmatpush1.xpose.msra.mxu0 0.0
    %2136 = vmatprep.subr.mxu0 0.0
    %2137 = vmatpush1.xpose.msra.mxu0 0.0
    %2138 = vmatprep.subr.mxu0 0.0
    %2139 = vmatpush1.xpose.msra.mxu0 0.0
    %2140 = vmatprep.subr.mxu0 0.0
    %2141 = vmatpush1.xpose.msra.mxu0 0.0
    %2142 = vmatprep.subr.mxu0 0.0
    %2143 = vmatpush1.xpose.msra.mxu0 0.0
    %2144 = vmatprep.subr.mxu0 0.0
    %2145 = vmatpush1.xpose.msra.mxu0 0.0
    %2146 = vmatprep.subr.mxu0 0.0
    %2147 = vmatpush1.xpose.msra.mxu0 0.0
    %2148 = vmatprep.subr.mxu0 0.0
    %2149 = vmatpush1.xpose.msra.mxu0 0.0
    %2150 = vmatprep.subr.mxu0 0.0
    %2151 = vmatpush1.xpose.msra.mxu0 0.0
    %2152 = vmatprep.subr.mxu0 0.0
    %2153 = vmatpush1.xpose.msra.mxu0 0.0
    %2154 = vmatprep.subr.mxu0 0.0
    %2155 = vmatpush1.xpose.msra.mxu0 0.0
    %2156 = vmatprep.subr.mxu0 0.0
    %2157 = vmatpush1.xpose.msra.mxu0 0.0
    %2158 = vmatprep.subr.mxu0 0.0
    %2159 = vmatpush1.xpose.msra.mxu0 0.0
    %2160 = vmatprep.subr.mxu0 0.0
    %2161 = vmatpush1.xpose.msra.mxu0 0.0
    %2162 = vmatprep.subr.mxu0 0.0
    %2163 = vmatpush1.xpose.msra.mxu0 0.0
    %2164 = vmatprep.subr.mxu0 0.0
    %2165 = vmatpush1.xpose.msra.mxu0 0.0
    %2166 = vmatprep.subr.mxu0 0.0
    %2167 = vmatpush1.xpose.msra.mxu0 0.0
    %2168 = vmatprep.subr.mxu0 0.0
    %2169 = vmatpush1.xpose.msra.mxu0 0.0
    %2170 = vmatprep.subr.mxu0 0.0
    %2171 = vmatpush1.xpose.msra.mxu0 0.0
    %2172 = vmatprep.subr.mxu0 0.0
    %2173 = vmatpush1.xpose.msra.mxu0 0.0
    %2174 = vmatprep.subr.mxu0 0.0
    %2175 = vmatpush1.xpose.msra.mxu0 0.0
    %2176 = vmatprep.mubr.f32.mxu0 0.0
    %2177 = vmatmul.mubr.f32.gmra.mrb[0].mxu0 %v2110
    %v2178 = vpop.f32.mrb[0].mxu0
    %v2179 = vadd.f32 0.0, %v2178
    %v2180 = vpop.f32.mrb[0].mxu0
    %2181 = vmatprep.mubr.f32.mxu0 0.0
    %2182 = vmatmul.mubr.f32.gmra.mrb[0].mxu0 %v2111
    %v2183 = vpop.f32.mrb[0].mxu0
    %v2184 = vadd.f32 0.0, %v2183
    %v2185 = vpop.f32.mrb[0].mxu0
    %2186 = vdwg.mxu0
    %v2187 = vmul.f32 %v2179, 0.17677669
    %v2188 = vmul.f32 %v2184, 0.17677669
    %v2189 = vlaneseq
    %v2190 = vshrl.u32 %v2189, 7
    %v2191 = vsub.s32 2, %v2190
    %v2192 = vrot.slane %v1105, %v2191
    %v2193 = vlaneseq
    %v2194 = vshrl.u32 %v2193, 7
    %v2195 = vsub.s32 2, %v2194
    %v2196 = vrot.slane %v1106, %v2195
    %v2197 = vmul.f32 %v1107, %v2192
    %v2198 = vmul.f32 %v1108, %v2196
    %v2199 = vmul.f32 %v1109, %v2192
    %v2200 = vmul.f32 %v1110, %v2196
    %2201 = vmatprep.subr.mxu0 0.0
    %2202 = vmatpush1.msra.mxu0 %v1111
    %2203 = vmatprep.subr.mxu0 0.0
    %2204 = vmatpush1.msra.mxu0 %v1112
    %2205 = vmatprep.subr.mxu0 0.0
    %2206 = vmatpush1.msra.mxu0 %v1113
    %2207 = vmatprep.subr.mxu0 0.0
    %2208 = vmatpush1.msra.mxu0 %v1114
    %2209 = vmatprep.subr.mxu0 0.0
    %2210 = vmatpush1.msra.mxu0 %v1115
    %2211 = vmatprep.subr.mxu0 0.0
    %2212 = vmatpush1.msra.mxu0 %v1116
    %2213 = vmatprep.subr.mxu0 0.0
    %2214 = vmatpush1.msra.mxu0 %v1117
    %2215 = vmatprep.subr.mxu0 0.0
    %2216 = vmatpush1.msra.mxu0 %v1118
    %2217 = vmatprep.subr.mxu0 0.0
    %2218 = vmatpush1.msra.mxu0 %v1119
    %2219 = vmatprep.subr.mxu0 0.0
    %2220 = vmatpush1.msra.mxu0 %v1120
    %2221 = vmatprep.subr.mxu0 0.0
    %2222 = vmatpush1.msra.mxu0 %v1121
    %2223 = vmatprep.subr.mxu0 0.0
    %2224 = vmatpush1.msra.mxu0 %v1122
    %2225 = vmatprep.subr.mxu0 0.0
    %2226 = vmatpush1.msra.mxu0 %v1123
    %2227 = vmatprep.subr.mxu0 0.0
    %2228 = vmatpush1.msra.mxu0 %v1124
    %2229 = vmatprep.subr.mxu0 0.0
    %2230 = vmatpush1.msra.mxu0 %v1125
    %2231 = vmatprep.subr.mxu0 0.0
    %2232 = vmatpush1.msra.mxu0 %v1126
    %2233 = vmatprep.subr.mxu0 0.0
    %2234 = vmatpush1.msra.mxu0 %v1127
    %2235 = vmatprep.subr.mxu0 0.0
    %2236 = vmatpush1.msra.mxu0 %v1128
    %2237 = vmatprep.subr.mxu0 0.0
    %2238 = vmatpush1.msra.mxu0 %v1129
    %2239 = vmatprep.subr.mxu0 0.0
    %2240 = vmatpush1.msra.mxu0 %v1130
    %2241 = vmatprep.subr.mxu0 0.0
    %2242 = vmatpush1.msra.mxu0 %v1131
    %2243 = vmatprep.subr.mxu0 0.0
    %2244 = vmatpush1.msra.mxu0 %v1132
    %2245 = vmatprep.subr.mxu0 0.0
    %2246 = vmatpush1.msra.mxu0 %v1133
    %2247 = vmatprep.subr.mxu0 0.0
    %2248 = vmatpush1.msra.mxu0 %v1134
    %2249 = vmatprep.subr.mxu0 0.0
    %2250 = vmatpush1.msra.mxu0 %v1135
    %2251 = vmatprep.subr.mxu0 0.0
    %2252 = vmatpush1.msra.mxu0 %v1136
    %2253 = vmatprep.subr.mxu0 0.0
    %2254 = vmatpush1.msra.mxu0 %v1137
    %2255 = vmatprep.subr.mxu0 0.0
    %2256 = vmatpush1.msra.mxu0 %v1138
    %2257 = vmatprep.subr.mxu0 0.0
    %2258 = vmatpush1.msra.mxu0 %v1139
    %2259 = vmatprep.subr.mxu0 0.0
    %2260 = vmatpush1.msra.mxu0 %v1140
    %2261 = vmatprep.subr.mxu0 0.0
    %2262 = vmatpush1.msra.mxu0 %v1141
    %2263 = vmatprep.subr.mxu0 0.0
    %2264 = vmatpush1.msra.mxu0 %v1142
    %2265 = vmatprep.mubr.f32.mxu0 %v2198
    %2266 = vmatmul.mubr.f32.gmra.mrb[0].mxu0 %v2197
    %v2267 = vpop.f32.mrb[0].mxu0
    %v2268 = vadd.f32 0.0, %v2267
    %v2269 = vpop.f32.mrb[0].mxu0
    %2270 = vmatprep.mubr.f32.mxu0 %v2200
    %2271 = vmatmul.mubr.f32.gmra.mrb[0].mxu0 %v2199
    %v2272 = vpop.f32.mrb[0].mxu0
    %v2273 = vadd.f32 0.0, %v2272
    %v2274 = vpop.f32.mrb[0].mxu0
    %2275 = vdwg.mxu0
    %v2276 = vadd.f32 %v2187, %v2268
    %v2277 = vadd.f32 %v2188, %v2273
    %v2278 = vsel %vm377, %v2276, -inf
    %2279 = vmax.xlane.f32.xlu0 %v2278
    %v2280 = vpop.xlane.xlu0 %2279
    %v2281 = vsel %vm377, %v2277, -inf
    %2282 = vmax.xlane.f32.xlu0 %v2281
    %v2283 = vpop.xlane.xlu0 %2282
    %v2284 = vsub.f32 %v2276, %v2280
    %v2285 = vsub.f32 %v2277, %v2283
    %v2286 = vmul.f32 %v2284, 1.442695
    %v2287 = vpow.pop %v2286
    %v2288 = vmul.f32 %v2285, 1.442695
    %v2289 = vpow.pop %v2288
    %v2290 = vsel %vm377, %v2287, 0.0
    %2291 = vadd.xlane.f32.xlu0 %v2290
    %v2292 = vpop.xlane.xlu0 %2291
    %v2293 = vsel %vm377, %v2289, 0.0
    %2294 = vadd.xlane.f32.xlu0 %v2293
    %v2295 = vpop.xlane.xlu0 %2294
    %v2296 = vrcp.pop %v2292
    %v2297 = vmul.f32 %v2287, %v2296
    %v2298 = vrcp.pop %v2295
    %v2299 = vmul.f32 %v2289, %v2298
    %v2300 = vmul.f32 %v1556, %v1156
    %v2301 = vmul.f32 %v1561, %v1156
    %v2303 = vsel %vm377, %v2297, 0
    %v2306 = vsel %vm377, %v2299, 0
    %2308 = vmatprep.subr.mxu0 0.0
    %2309 = vmatpush1.msra.mxu0 %v2300
    %2310 = vmatprep.subr.mxu0 0.0
    %2311 = vmatpush1.msra.mxu0 %v2301
    %2312 = vmatprep.subr.mxu0 0.0
    %2313 = vmatpush1.msra.mxu0 0.0
    %2314 = vmatprep.subr.mxu0 0.0
    %2315 = vmatpush1.msra.mxu0 0.0
    %2316 = vmatprep.subr.mxu0 0.0
    %2317 = vmatpush1.msra.mxu0 0.0
    %2318 = vmatprep.subr.mxu0 0.0
    %2319 = vmatpush1.msra.mxu0 0.0
    %2320 = vmatprep.subr.mxu0 0.0
    %2321 = vmatpush1.msra.mxu0 0.0
    %2322 = vmatprep.subr.mxu0 0.0
    %2323 = vmatpush1.msra.mxu0 0.0
    %2324 = vmatprep.subr.mxu0 0.0
    %2325 = vmatpush1.msra.mxu0 0.0
    %2326 = vmatprep.subr.mxu0 0.0
    %2327 = vmatpush1.msra.mxu0 0.0
    %2328 = vmatprep.subr.mxu0 0.0
    %2329 = vmatpush1.msra.mxu0 0.0
    %2330 = vmatprep.subr.mxu0 0.0
    %2331 = vmatpush1.msra.mxu0 0.0
    %2332 = vmatprep.subr.mxu0 0.0
    %2333 = vmatpush1.msra.mxu0 0.0
    %2334 = vmatprep.subr.mxu0 0.0
    %2335 = vmatpush1.msra.mxu0 0.0
    %2336 = vmatprep.subr.mxu0 0.0
    %2337 = vmatpush1.msra.mxu0 0.0
    %2338 = vmatprep.subr.mxu0 0.0
    %2339 = vmatpush1.msra.mxu0 0.0
    %2340 = vmatprep.subr.mxu0 0.0
    %2341 = vmatpush1.msra.mxu0 0.0
    %2342 = vmatprep.subr.mxu0 0.0
    %2343 = vmatpush1.msra.mxu0 0.0
    %2344 = vmatprep.subr.mxu0 0.0
    %2345 = vmatpush1.msra.mxu0 0.0
    %2346 = vmatprep.subr.mxu0 0.0
    %2347 = vmatpush1.msra.mxu0 0.0
    %2348 = vmatprep.subr.mxu0 0.0
    %2349 = vmatpush1.msra.mxu0 0.0
    %2350 = vmatprep.subr.mxu0 0.0
    %2351 = vmatpush1.msra.mxu0 0.0
    %2352 = vmatprep.subr.mxu0 0.0
    %2353 = vmatpush1.msra.mxu0 0.0
    %2354 = vmatprep.subr.mxu0 0.0
    %2355 = vmatpush1.msra.mxu0 0.0
    %2356 = vmatprep.subr.mxu0 0.0
    %2357 = vmatpush1.msra.mxu0 0.0
    %2358 = vmatprep.subr.mxu0 0.0
    %2359 = vmatpush1.msra.mxu0 0.0
    %2360 = vmatprep.subr.mxu0 0.0
    %2361 = vmatpush1.msra.mxu0 0.0
    %2362 = vmatprep.subr.mxu0 0.0
    %2363 = vmatpush1.msra.mxu0 0.0
    %2364 = vmatprep.subr.mxu0 0.0
    %2365 = vmatpush1.msra.mxu0 0.0
    %2366 = vmatprep.subr.mxu0 0.0
    %2367 = vmatpush1.msra.mxu0 0.0
    %2368 = vmatprep.subr.mxu0 0.0
    %2369 = vmatpush1.msra.mxu0 0.0
    %2370 = vmatprep.subr.mxu0 0.0
    %2371 = vmatpush1.msra.mxu0 0.0
    %2372 = vmatprep.mubr.f32.mxu0 0.0
    %2373 = vmatmul.mubr.f32.gmra.mrb[0].mxu0 %v2303
    %v2374 = vpop.f32.mrb[0].mxu0
    %v2375 = vadd.f32 0.0, %v2374
    %v2376 = vpop.f32.mrb[0].mxu0
    %2377 = vmatprep.mubr.f32.mxu0 0.0
    %2378 = vmatmul.mubr.f32.gmra.mrb[0].mxu0 %v2306
    %v2379 = vpop.f32.mrb[0].mxu0
    %v2380 = vadd.f32 0.0, %v2379
    %v2381 = vpop.f32.mrb[0].mxu0
    %2382 = vdwg.mxu0
    %v2383 = vadd.f32 %v2102, %v2375
    %v2384 = vadd.f32 %v2107, %v2380
    %v2385 = vmul.f32 %v1479, %v1160
    %v2386 = vmul.f32 %v1485, %v1160
    %2387 = vmatprep.subr.mxu0 0.0
    %2388 = vmatpush1.xpose.msra.mxu0 %v1481
    %2389 = vmatprep.subr.mxu0 0.0
    %2390 = vmatpush1.xpose.msra.mxu0 %v1487
    %2391 = vmatprep.subr.mxu0 0.0
    %2392 = vmatpush1.xpose.msra.mxu0 0.0
    %2393 = vmatprep.subr.mxu0 0.0
    %2394 = vmatpush1.xpose.msra.mxu0 0.0
    %2395 = vmatprep.subr.mxu0 0.0
    %2396 = vmatpush1.xpose.msra.mxu0 0.0
    %2397 = vmatprep.subr.mxu0 0.0
    %2398 = vmatpush1.xpose.msra.mxu0 0.0
    %2399 = vmatprep.subr.mxu0 0.0
    %2400 = vmatpush1.xpose.msra.mxu0 0.0
    %2401 = vmatprep.subr.mxu0 0.0
    %2402 = vmatpush1.xpose.msra.mxu0 0.0
    %2403 = vmatprep.subr.mxu0 0.0
    %2404 = vmatpush1.xpose.msra.mxu0 0.0
    %2405 = vmatprep.subr.mxu0 0.0
    %2406 = vmatpush1.xpose.msra.mxu0 0.0
    %2407 = vmatprep.subr.mxu0 0.0
    %2408 = vmatpush1.xpose.msra.mxu0 0.0
    %2409 = vmatprep.subr.mxu0 0.0
    %2410 = vmatpush1.xpose.msra.mxu0 0.0
    %2411 = vmatprep.subr.mxu0 0.0
    %2412 = vmatpush1.xpose.msra.mxu0 0.0
    %2413 = vmatprep.subr.mxu0 0.0
    %2414 = vmatpush1.xpose.msra.mxu0 0.0
    %2415 = vmatprep.subr.mxu0 0.0
    %2416 = vmatpush1.xpose.msra.mxu0 0.0
    %2417 = vmatprep.subr.mxu0 0.0
    %2418 = vmatpush1.xpose.msra.mxu0 0.0
    %2419 = vmatprep.subr.mxu0 0.0
    %2420 = vmatpush1.xpose.msra.mxu0 0.0
    %2421 = vmatprep.subr.mxu0 0.0
    %2422 = vmatpush1.xpose.msra.mxu0 0.0
    %2423 = vmatprep.subr.mxu0 0.0
    %2424 = vmatpush1.xpose.msra.mxu0 0.0
    %2425 = vmatprep.subr.mxu0 0.0
    %2426 = vmatpush1.xpose.msra.mxu0 0.0
    %2427 = vmatprep.subr.mxu0 0.0
    %2428 = vmatpush1.xpose.msra.mxu0 0.0
    %2429 = vmatprep.subr.mxu0 0.0
    %2430 = vmatpush1.xpose.msra.mxu0 0.0
    %2431 = vmatprep.subr.mxu0 0.0
    %2432 = vmatpush1.xpose.msra.mxu0 0.0
    %2433 = vmatprep.subr.mxu0 0.0
    %2434 = vmatpush1.xpose.msra.mxu0 0.0
    %2435 = vmatprep.subr.mxu0 0.0
    %2436 = vmatpush1.xpose.msra.mxu0 0.0
    %2437 = vmatprep.subr.mxu0 0.0
    %2438 = vmatpush1.xpose.msra.mxu0 0.0
    %2439 = vmatprep.subr.mxu0 0.0
    %2440 = vmatpush1.xpose.msra.mxu0 0.0
    %2441 = vmatprep.subr.mxu0 0.0
    %2442 = vmatpush1.xpose.msra.mxu0 0.0
    %2443 = vmatprep.subr.mxu0 0.0
    %2444 = vmatpush1.xpose.msra.mxu0 0.0
    %2445 = vmatprep.subr.mxu0 0.0
    %2446 = vmatpush1.xpose.msra.mxu0 0.0
    %2447 = vmatprep.subr.mxu0 0.0
    %2448 = vmatpush1.xpose.msra.mxu0 0.0
    %2449 = vmatprep.subr.mxu0 0.0
    %2450 = vmatpush1.xpose.msra.mxu0 0.0
    %2451 = vmatprep.mubr.f32.mxu0 0.0
    %2452 = vmatmul.mubr.f32.gmra.mrb[0].mxu0 %v2385
    %v2453 = vpop.f32.mrb[0].mxu0
    %v2454 = vadd.f32 0.0, %v2453
    %v2455 = vpop.f32.mrb[0].mxu0
    %2456 = vmatprep.mubr.f32.mxu0 0.0
    %2457 = vmatmul.mubr.f32.gmra.mrb[0].mxu0 %v2386
    %v2458 = vpop.f32.mrb[0].mxu0
    %v2459 = vadd.f32 0.0, %v2458
    %v2460 = vpop.f32.mrb[0].mxu0
    %2461 = vdwg.mxu0
    %v2462 = vmul.f32 %v2454, 0.17677669
    %v2463 = vmul.f32 %v2459, 0.17677669
    %v2464 = vlaneseq
    %v2465 = vshrl.u32 %v2464, 7
    %v2466 = vsub.s32 3, %v2465
    %v2467 = vrot.slane %v1105, %v2466
    %v2468 = vlaneseq
    %v2469 = vshrl.u32 %v2468, 7
    %v2470 = vsub.s32 3, %v2469
    %v2471 = vrot.slane %v1106, %v2470
    %v2472 = vmul.f32 %v1107, %v2467
    %v2473 = vmul.f32 %v1108, %v2471
    %v2474 = vmul.f32 %v1109, %v2467
    %v2475 = vmul.f32 %v1110, %v2471
    %2476 = vmatprep.subr.mxu0 0.0
    %2477 = vmatpush1.msra.mxu0 %v1111
    %2478 = vmatprep.subr.mxu0 0.0
    %2479 = vmatpush1.msra.mxu0 %v1112
    %2480 = vmatprep.subr.mxu0 0.0
    %2481 = vmatpush1.msra.mxu0 %v1113
    %2482 = vmatprep.subr.mxu0 0.0
    %2483 = vmatpush1.msra.mxu0 %v1114
    %2484 = vmatprep.subr.mxu0 0.0
    %2485 = vmatpush1.msra.mxu0 %v1115
    %2486 = vmatprep.subr.mxu0 0.0
    %2487 = vmatpush1.msra.mxu0 %v1116
    %2488 = vmatprep.subr.mxu0 0.0
    %2489 = vmatpush1.msra.mxu0 %v1117
    %2490 = vmatprep.subr.mxu0 0.0
    %2491 = vmatpush1.msra.mxu0 %v1118
    %2492 = vmatprep.subr.mxu0 0.0
    %2493 = vmatpush1.msra.mxu0 %v1119
    %2494 = vmatprep.subr.mxu0 0.0
    %2495 = vmatpush1.msra.mxu0 %v1120
    %2496 = vmatprep.subr.mxu0 0.0
    %2497 = vmatpush1.msra.mxu0 %v1121
    %2498 = vmatprep.subr.mxu0 0.0
    %2499 = vmatpush1.msra.mxu0 %v1122
    %2500 = vmatprep.subr.mxu0 0.0
    %2501 = vmatpush1.msra.mxu0 %v1123
    %2502 = vmatprep.subr.mxu0 0.0
    %2503 = vmatpush1.msra.mxu0 %v1124
    %2504 = vmatprep.subr.mxu0 0.0
    %2505 = vmatpush1.msra.mxu0 %v1125
    %2506 = vmatprep.subr.mxu0 0.0
    %2507 = vmatpush1.msra.mxu0 %v1126
    %2508 = vmatprep.subr.mxu0 0.0
    %2509 = vmatpush1.msra.mxu0 %v1127
    %2510 = vmatprep.subr.mxu0 0.0
    %2511 = vmatpush1.msra.mxu0 %v1128
    %2512 = vmatprep.subr.mxu0 0.0
    %2513 = vmatpush1.msra.mxu0 %v1129
    %2514 = vmatprep.subr.mxu0 0.0
    %2515 = vmatpush1.msra.mxu0 %v1130
    %2516 = vmatprep.subr.mxu0 0.0
    %2517 = vmatpush1.msra.mxu0 %v1131
    %2518 = vmatprep.subr.mxu0 0.0
    %2519 = vmatpush1.msra.mxu0 %v1132
    %2520 = vmatprep.subr.mxu0 0.0
    %2521 = vmatpush1.msra.mxu0 %v1133
    %2522 = vmatprep.subr.mxu0 0.0
    %2523 = vmatpush1.msra.mxu0 %v1134
    %2524 = vmatprep.subr.mxu0 0.0
    %2525 = vmatpush1.msra.mxu0 %v1135
    %2526 = vmatprep.subr.mxu0 0.0
    %2527 = vmatpush1.msra.mxu0 %v1136
    %2528 = vmatprep.subr.mxu0 0.0
    %2529 = vmatpush1.msra.mxu0 %v1137
    %2530 = vmatprep.subr.mxu0 0.0
    %2531 = vmatpush1.msra.mxu0 %v1138
    %2532 = vmatprep.subr.mxu0 0.0
    %2533 = vmatpush1.msra.mxu0 %v1139
    %2534 = vmatprep.subr.mxu0 0.0
    %2535 = vmatpush1.msra.mxu0 %v1140
    %2536 = vmatprep.subr.mxu0 0.0
    %2537 = vmatpush1.msra.mxu0 %v1141
    %2538 = vmatprep.subr.mxu0 0.0
    %2539 = vmatpush1.msra.mxu0 %v1142
    %2540 = vmatprep.mubr.f32.mxu0 %v2473
    %2541 = vmatmul.mubr.f32.gmra.mrb[0].mxu0 %v2472
    %v2542 = vpop.f32.mrb[0].mxu0
    %v2543 = vadd.f32 0.0, %v2542
    %v2544 = vpop.f32.mrb[0].mxu0
    %2545 = vmatprep.mubr.f32.mxu0 %v2475
    %2546 = vmatmul.mubr.f32.gmra.mrb[0].mxu0 %v2474
    %v2547 = vpop.f32.mrb[0].mxu0
    %v2548 = vadd.f32 0.0, %v2547
    %v2549 = vpop.f32.mrb[0].mxu0
    %2550 = vdwg.mxu0
    %v2551 = vadd.f32 %v2462, %v2543
    %v2552 = vadd.f32 %v2463, %v2548
    %v2553 = vsel %vm377, %v2551, -inf
    %2554 = vmax.xlane.f32.xlu0 %v2553
    %v2555 = vpop.xlane.xlu0 %2554
    %v2556 = vsel %vm377, %v2552, -inf
    %2557 = vmax.xlane.f32.xlu0 %v2556
    %v2558 = vpop.xlane.xlu0 %2557
    %v2559 = vsub.f32 %v2551, %v2555
    %v2560 = vsub.f32 %v2552, %v2558
    %v2561 = vmul.f32 %v2559, 1.442695
    %v2562 = vpow.pop %v2561
    %v2563 = vmul.f32 %v2560, 1.442695
    %v2564 = vpow.pop %v2563
    %v2565 = vsel %vm377, %v2562, 0.0
    %2566 = vadd.xlane.f32.xlu0 %v2565
    %v2567 = vpop.xlane.xlu0 %2566
    %v2568 = vsel %vm377, %v2564, 0.0
    %2569 = vadd.xlane.f32.xlu0 %v2568
    %v2570 = vpop.xlane.xlu0 %2569
    %v2571 = vrcp.pop %v2567
    %v2572 = vmul.f32 %v2562, %v2571
    %v2573 = vrcp.pop %v2570
    %v2574 = vmul.f32 %v2564, %v2573
    %v2575 = vmul.f32 %v1556, %v1160
    %v2576 = vmul.f32 %v1561, %v1160
    %v2578 = vsel %vm377, %v2572, 0
    %v2581 = vsel %vm377, %v2574, 0
    %2583 = vmatprep.subr.mxu0 0.0
    %2584 = vmatpush1.msra.mxu0 %v2575
    %2585 = vmatprep.subr.mxu0 0.0
    %2586 = vmatpush1.msra.mxu0 %v2576
    %2587 = vmatprep.subr.mxu0 0.0
    %2588 = vmatpush1.msra.mxu0 0.0
    %2589 = vmatprep.subr.mxu0 0.0
    %2590 = vmatpush1.msra.mxu0 0.0
    %2591 = vmatprep.subr.mxu0 0.0
    %2592 = vmatpush1.msra.mxu0 0.0
    %2593 = vmatprep.subr.mxu0 0.0
    %2594 = vmatpush1.msra.mxu0 0.0
    %2595 = vmatprep.subr.mxu0 0.0
    %2596 = vmatpush1.msra.mxu0 0.0
    %2597 = vmatprep.subr.mxu0 0.0
    %2598 = vmatpush1.msra.mxu0 0.0
    %2599 = vmatprep.subr.mxu0 0.0
    %2600 = vmatpush1.msra.mxu0 0.0
    %2601 = vmatprep.subr.mxu0 0.0
    %2602 = vmatpush1.msra.mxu0 0.0
    %2603 = vmatprep.subr.mxu0 0.0
    %2604 = vmatpush1.msra.mxu0 0.0
    %2605 = vmatprep.subr.mxu0 0.0
    %2606 = vmatpush1.msra.mxu0 0.0
    %2607 = vmatprep.subr.mxu0 0.0
    %2608 = vmatpush1.msra.mxu0 0.0
    %2609 = vmatprep.subr.mxu0 0.0
    %2610 = vmatpush1.msra.mxu0 0.0
    %2611 = vmatprep.subr.mxu0 0.0
    %2612 = vmatpush1.msra.mxu0 0.0
    %2613 = vmatprep.subr.mxu0 0.0
    %2614 = vmatpush1.msra.mxu0 0.0
    %2615 = vmatprep.subr.mxu0 0.0
    %2616 = vmatpush1.msra.mxu0 0.0
    %2617 = vmatprep.subr.mxu0 0.0
    %2618 = vmatpush1.msra.mxu0 0.0
    %2619 = vmatprep.subr.mxu0 0.0
    %2620 = vmatpush1.msra.mxu0 0.0
    %2621 = vmatprep.subr.mxu0 0.0
    %2622 = vmatpush1.msra.mxu0 0.0
    %2623 = vmatprep.subr.mxu0 0.0
    %2624 = vmatpush1.msra.mxu0 0.0
    %2625 = vmatprep.subr.mxu0 0.0
    %2626 = vmatpush1.msra.mxu0 0.0
    %2627 = vmatprep.subr.mxu0 0.0
    %2628 = vmatpush1.msra.mxu0 0.0
    %2629 = vmatprep.subr.mxu0 0.0
    %2630 = vmatpush1.msra.mxu0 0.0
    %2631 = vmatprep.subr.mxu0 0.0
    %2632 = vmatpush1.msra.mxu0 0.0
    %2633 = vmatprep.subr.mxu0 0.0
    %2634 = vmatpush1.msra.mxu0 0.0
    %2635 = vmatprep.subr.mxu0 0.0
    %2636 = vmatpush1.msra.mxu0 0.0
    %2637 = vmatprep.subr.mxu0 0.0
    %2638 = vmatpush1.msra.mxu0 0.0
    %2639 = vmatprep.subr.mxu0 0.0
    %2640 = vmatpush1.msra.mxu0 0.0
    %2641 = vmatprep.subr.mxu0 0.0
    %2642 = vmatpush1.msra.mxu0 0.0
    %2643 = vmatprep.subr.mxu0 0.0
    %2644 = vmatpush1.msra.mxu0 0.0
    %2645 = vmatprep.subr.mxu0 0.0
    %2646 = vmatpush1.msra.mxu0 0.0
    %2647 = vmatprep.mubr.f32.mxu0 0.0
    %2648 = vmatmul.mubr.f32.gmra.mrb[0].mxu0 %v2578
    %v2649 = vpop.f32.mrb[0].mxu0
    %v2650 = vadd.f32 0.0, %v2649
    %v2651 = vpop.f32.mrb[0].mxu0
    %2652 = vmatprep.mubr.f32.mxu0 0.0
    %2653 = vmatmul.mubr.f32.gmra.mrb[0].mxu0 %v2581
    %v2654 = vpop.f32.mrb[0].mxu0
    %v2655 = vadd.f32 0.0, %v2654
    %v2656 = vpop.f32.mrb[0].mxu0
    %2657 = vdwg.mxu0
    %v2658 = vadd.f32 %v2383, %v2650
    %v2659 = vadd.f32 %v2384, %v2655
    %v2660 = vld [vmem:[%s15] sm:$0xff]
    %v2661 = vld [vmem:[%s15 + $0x8] sm:$0xff]
    %v2662 = vld [vmem:[%s15 + $0x10] sm:$0xff]
    %v2663 = vld [vmem:[%s15 + $0x18] sm:$0xff]
    %v2664 = vld [vmem:[%s15 + $0x20] sm:$0xff]
    %v2665 = vld [vmem:[%s15 + $0x28] sm:$0xff]
    %v2666 = vld [vmem:[%s15 + $0x30] sm:$0xff]
    %v2667 = vld [vmem:[%s15 + $0x38] sm:$0xff]
    %v2668 = vld [vmem:[%s15 + $0x40] sm:$0xff]
    %v2669 = vld [vmem:[%s15 + $0x48] sm:$0xff]
    %v2670 = vld [vmem:[%s15 + $0x50] sm:$0xff]
    %v2671 = vld [vmem:[%s15 + $0x58] sm:$0xff]
    %v2672 = vld [vmem:[%s15 + $0x60] sm:$0xff]
    %v2673 = vld [vmem:[%s15 + $0x68] sm:$0xff]
    %v2674 = vld [vmem:[%s15 + $0x70] sm:$0xff]
    %v2675 = vld [vmem:[%s15 + $0x78] sm:$0xff]
    %v2676 = vlaneseq
    %v2677 = vshrl.u32 %v2676, 7
    %v2678 = vsub.s32 5, %v2677
    %v2679 = vrot.slane %v1336, %v2678
    %2680 = vmatprep.subr.mxu0 0.0
    %2681 = vmatpush1.msra.mxu0 %v2660
    %2682 = vmatprep.subr.mxu0 0.0
    %2683 = vmatpush1.msra.mxu0 %v2661
    %2684 = vmatprep.subr.mxu0 0.0
    %2685 = vmatpush1.msra.mxu0 %v2662
    %2686 = vmatprep.subr.mxu0 0.0
    %2687 = vmatpush1.msra.mxu0 %v2663
    %2688 = vmatprep.subr.mxu0 0.0
    %2689 = vmatpush1.msra.mxu0 %v2664
    %2690 = vmatprep.subr.mxu0 0.0
    %2691 = vmatpush1.msra.mxu0 %v2665
    %2692 = vmatprep.subr.mxu0 0.0
    %2693 = vmatpush1.msra.mxu0 %v2666
    %2694 = vmatprep.subr.mxu0 0.0
    %2695 = vmatpush1.msra.mxu0 %v2667
    %2696 = vmatprep.subr.mxu0 0.0
    %2697 = vmatpush1.msra.mxu0 %v2668
    %2698 = vmatprep.subr.mxu0 0.0
    %2699 = vmatpush1.msra.mxu0 %v2669
    %2700 = vmatprep.subr.mxu0 0.0
    %2701 = vmatpush1.msra.mxu0 %v2670
    %2702 = vmatprep.subr.mxu0 0.0
    %2703 = vmatpush1.msra.mxu0 %v2671
    %2704 = vmatprep.subr.mxu0 0.0
    %2705 = vmatpush1.msra.mxu0 %v2672
    %2706 = vmatprep.subr.mxu0 0.0
    %2707 = vmatpush1.msra.mxu0 %v2673
    %2708 = vmatprep.subr.mxu0 0.0
    %2709 = vmatpush1.msra.mxu0 %v2674
    %2710 = vmatprep.subr.mxu0 0.0
    %2711 = vmatpush1.msra.mxu0 %v2675
    %2712 = vmatprep.subr.mxu0 0.0
    %2713 = vmatpush1.msra.mxu0 0.0
    %2714 = vmatprep.subr.mxu0 0.0
    %2715 = vmatpush1.msra.mxu0 0.0
    %2716 = vmatprep.subr.mxu0 0.0
    %2717 = vmatpush1.msra.mxu0 0.0
    %2718 = vmatprep.subr.mxu0 0.0
    %2719 = vmatpush1.msra.mxu0 0.0
    %2720 = vmatprep.subr.mxu0 0.0
    %2721 = vmatpush1.msra.mxu0 0.0
    %2722 = vmatprep.subr.mxu0 0.0
    %2723 = vmatpush1.msra.mxu0 0.0
    %2724 = vmatprep.subr.mxu0 0.0
    %2725 = vmatpush1.msra.mxu0 0.0
    %2726 = vmatprep.subr.mxu0 0.0
    %2727 = vmatpush1.msra.mxu0 0.0
    %2728 = vmatprep.subr.mxu0 0.0
    %2729 = vmatpush1.msra.mxu0 0.0
    %2730 = vmatprep.subr.mxu0 0.0
    %2731 = vmatpush1.msra.mxu0 0.0
    %2732 = vmatprep.subr.mxu0 0.0
    %2733 = vmatpush1.msra.mxu0 0.0
    %2734 = vmatprep.subr.mxu0 0.0
    %2735 = vmatpush1.msra.mxu0 0.0
    %2736 = vmatprep.subr.mxu0 0.0
    %2737 = vmatpush1.msra.mxu0 0.0
    %2738 = vmatprep.subr.mxu0 0.0
    %2739 = vmatpush1.msra.mxu0 0.0
    %2740 = vmatprep.subr.mxu0 0.0
    %2741 = vmatpush1.msra.mxu0 0.0
    %2742 = vmatprep.subr.mxu0 0.0
    %2743 = vmatpush1.msra.mxu0 0.0
    %2744 = vmatprep.mubr.f32.mxu0 0.0
    %2745 = vmatmul.mubr.f32.gmra.mrb[0].mxu0 %v2658
    %v2746 = vpop.f32.mrb[0].mxu0
    %v2747 = vadd.f32 %v2679, %v2746
    %v2748 = vpop.f32.mrb[0].mxu0
    %2749 = vmatprep.mubr.f32.mxu0 0.0
    %2750 = vmatmul.mubr.f32.gmra.mrb[0].mxu0 %v2659
    %v2751 = vpop.f32.mrb[0].mxu0
    %v2752 = vadd.f32 %v2679, %v2751
    %v2753 = vpop.f32.mrb[0].mxu0
    %2754 = vdwg.mxu0
    %v2755 = vadd.f32 %v2747, %v1328
    %v2756 = vadd.f32 %v2752, %v1333
    %v2757 = vsel %vm1337, %v2755, 0.0
    %2758 = vadd.xlane.f32.xlu0 %v2757
    %v2759 = vpop.xlane.xlu0 %2758
    %v2760 = vsel %vm1337, %v2756, 0.0
    %2761 = vadd.xlane.f32.xlu0 %v2760
    %v2762 = vpop.xlane.xlu0 %2761
    %v2763 = vmul.f32 %v2759, %v1344
    %v2764 = vmul.f32 %v2762, %v1344
    %v2765 = vsub.f32 %v2755, %v2763
    %v2766 = vsub.f32 %v2756, %v2764
    %v2767 = vmul.f32 %v2765, %v2765
    %v2768 = vmul.f32 %v2766, %v2766
    %v2769 = vsel %vm1337, %v2767, 0.0
    %2770 = vadd.xlane.f32.xlu0 %v2769
    %v2771 = vpop.xlane.xlu0 %2770
    %v2772 = vsel %vm1337, %v2768, 0.0
    %2773 = vadd.xlane.f32.xlu0 %v2772
    %v2774 = vpop.xlane.xlu0 %2773
    %v2775 = vmul.f32 %v2771, %v1344
    %v2776 = vmul.f32 %v2774, %v1344
    %v2777 = vadd.f32 %v2775, 1e-05
    %v2778 = vadd.f32 %v2776, 1e-05
    %v2779 = vrsqrt.pop %v2777
    %v2780 = vrsqrt.pop %v2778
    %v2781 = vmul.f32 %v2765, %v2779
    %v2782 = vmul.f32 %v2766, %v2780
    %v2783 = vlaneseq
    %v2784 = vshrl.u32 %v2783, 7
    %v2785 = vsub.s32 2, %v2784
    %v2786 = vrot.slane %v1336, %v2785
    %v2787 = vmul.f32 %v2781, %v2786
    %v2788 = vmul.f32 %v2782, %v2786
    %v2789 = vlaneseq
    %v2790 = vshrl.u32 %v2789, 7
    %v2791 = vsub.s32 3, %v2790
    %v2792 = vrot.slane %v1336, %v2791
    %v2793 = vadd.f32 %v2787, %v2792
    %v2794 = vadd.f32 %v2788, %v2792
    %v2795 = vld [vmem:[%s17] sm:$0xff]
    %v2796 = vld [vmem:[%s17 + $0x8] sm:$0xff]
    %v2797 = vld [vmem:[%s17 + $0x10] sm:$0xff]
    %v2798 = vld [vmem:[%s17 + $0x18] sm:$0xff]
    %v2799 = vlaneseq
    %v2800 = vshrl.u32 %v2799, 7
    %v2801 = vsub.s32 4, %v2800
    %v2802 = vrot.slane %v1336, %v2801
    %v2804 = vsel %vm1337, %v2793, 0
    %v2807 = vsel %vm1337, %v2794, 0
    %2809 = vmatprep.subr.mxu0 0.0
    %2810 = vmatpush1.msra.mxu0 %v2795
    %2811 = vmatprep.subr.mxu0 0.0
    %2812 = vmatpush1.msra.mxu0 %v2796
    %2813 = vmatprep.subr.mxu0 0.0
    %2814 = vmatpush1.msra.mxu0 %v2797
    %2815 = vmatprep.subr.mxu0 0.0
    %2816 = vmatpush1.msra.mxu0 %v2798
    %2817 = vmatprep.subr.mxu0 0.0
    %2818 = vmatpush1.msra.mxu0 0.0
    %2819 = vmatprep.subr.mxu0 0.0
    %2820 = vmatpush1.msra.mxu0 0.0
    %2821 = vmatprep.subr.mxu0 0.0
    %2822 = vmatpush1.msra.mxu0 0.0
    %2823 = vmatprep.subr.mxu0 0.0
    %2824 = vmatpush1.msra.mxu0 0.0
    %2825 = vmatprep.subr.mxu0 0.0
    %2826 = vmatpush1.msra.mxu0 0.0
    %2827 = vmatprep.subr.mxu0 0.0
    %2828 = vmatpush1.msra.mxu0 0.0
    %2829 = vmatprep.subr.mxu0 0.0
    %2830 = vmatpush1.msra.mxu0 0.0
    %2831 = vmatprep.subr.mxu0 0.0
    %2832 = vmatpush1.msra.mxu0 0.0
    %2833 = vmatprep.subr.mxu0 0.0
    %2834 = vmatpush1.msra.mxu0 0.0
    %2835 = vmatprep.subr.mxu0 0.0
    %2836 = vmatpush1.msra.mxu0 0.0
    %2837 = vmatprep.subr.mxu0 0.0
    %2838 = vmatpush1.msra.mxu0 0.0
    %2839 = vmatprep.subr.mxu0 0.0
    %2840 = vmatpush1.msra.mxu0 0.0
    %2841 = vmatprep.subr.mxu0 0.0
    %2842 = vmatpush1.msra.mxu0 0.0
    %2843 = vmatprep.subr.mxu0 0.0
    %2844 = vmatpush1.msra.mxu0 0.0
    %2845 = vmatprep.subr.mxu0 0.0
    %2846 = vmatpush1.msra.mxu0 0.0
    %2847 = vmatprep.subr.mxu0 0.0
    %2848 = vmatpush1.msra.mxu0 0.0
    %2849 = vmatprep.subr.mxu0 0.0
    %2850 = vmatpush1.msra.mxu0 0.0
    %2851 = vmatprep.subr.mxu0 0.0
    %2852 = vmatpush1.msra.mxu0 0.0
    %2853 = vmatprep.subr.mxu0 0.0
    %2854 = vmatpush1.msra.mxu0 0.0
    %2855 = vmatprep.subr.mxu0 0.0
    %2856 = vmatpush1.msra.mxu0 0.0
    %2857 = vmatprep.subr.mxu0 0.0
    %2858 = vmatpush1.msra.mxu0 0.0
    %2859 = vmatprep.subr.mxu0 0.0
    %2860 = vmatpush1.msra.mxu0 0.0
    %2861 = vmatprep.subr.mxu0 0.0
    %2862 = vmatpush1.msra.mxu0 0.0
    %2863 = vmatprep.subr.mxu0 0.0
    %2864 = vmatpush1.msra.mxu0 0.0
    %2865 = vmatprep.subr.mxu0 0.0
    %2866 = vmatpush1.msra.mxu0 0.0
    %2867 = vmatprep.subr.mxu0 0.0
    %2868 = vmatpush1.msra.mxu0 0.0
    %2869 = vmatprep.subr.mxu0 0.0
    %2870 = vmatpush1.msra.mxu0 0.0
    %2871 = vmatprep.subr.mxu0 0.0
    %2872 = vmatpush1.msra.mxu0 0.0
    %2873 = vmatprep.mubr.f32.mxu0 0.0
    %2874 = vmatmul.mubr.f32.gmra.mrb[0].mxu0 %v2804
    %v2875 = vpop.f32.mrb[0].mxu0
    %v2876 = vadd.f32 %v2802, %v2875
    %v2877 = vpop.f32.mrb[0].mxu0
    %2878 = vmatprep.mubr.f32.mxu0 0.0
    %2879 = vmatmul.mubr.f32.gmra.mrb[0].mxu0 %v2807
    %v2880 = vpop.f32.mrb[0].mxu0
    %v2881 = vadd.f32 %v2802, %v2880
    %v2882 = vpop.f32.mrb[0].mxu0
    %2883 = vdwg.mxu0
    %v2884 = vadd.f32 %v2876, %v2755
    %v2885 = vadd.f32 %v2881, %v2756
    %s2886 = scalar_lea.vmem %s16, 8
    %v2887 = vld [vmem:[%s2886] sm:$0xff]
    %v2888 = vsel %vm1337, %v2884, 0.0
    %2889 = vadd.xlane.f32.xlu0 %v2888
    %v2890 = vpop.xlane.xlu0 %2889
    %v2891 = vsel %vm1337, %v2885, 0.0
    %2892 = vadd.xlane.f32.xlu0 %v2891
    %v2893 = vpop.xlane.xlu0 %2892
    %v2894 = vmul.f32 %v2890, %v1344
    %v2895 = vmul.f32 %v2893, %v1344
    %v2896 = vsub.f32 %v2884, %v2894
    %v2897 = vsub.f32 %v2885, %v2895
    %v2898 = vmul.f32 %v2896, %v2896
    %v2899 = vmul.f32 %v2897, %v2897
    %v2900 = vsel %vm1337, %v2898, 0.0
    %2901 = vadd.xlane.f32.xlu0 %v2900
    %v2902 = vpop.xlane.xlu0 %2901
    %v2903 = vsel %vm1337, %v2899, 0.0
    %2904 = vadd.xlane.f32.xlu0 %v2903
    %v2905 = vpop.xlane.xlu0 %2904
    %v2906 = vmul.f32 %v2902, %v1344
    %v2907 = vmul.f32 %v2905, %v1344
    %v2908 = vadd.f32 %v2906, 1e-05
    %v2909 = vadd.f32 %v2907, 1e-05
    %v2910 = vrsqrt.pop %v2908
    %v2911 = vrsqrt.pop %v2909
    %v2912 = vmul.f32 %v2896, %v2910
    %v2913 = vmul.f32 %v2897, %v2911
    %v2914 = vlaneseq
    %v2915 = vshrl.u32 %v2914, 7
    %v2916 = vsub.s32 0, %v2915
    %v2917 = vrot.slane %v2887, %v2916
    %v2918 = vmul.f32 %v2912, %v2917
    %v2919 = vmul.f32 %v2913, %v2917
    %v2920 = vlaneseq
    %v2921 = vshrl.u32 %v2920, 7
    %v2922 = vsub.s32 1, %v2921
    %v2923 = vrot.slane %v2887, %v2922
    %v2924 = vadd.f32 %v2918, %v2923
    %v2925 = vadd.f32 %v2919, %v2923
    %s2926 = scalar_lea.vmem %s13, 96
    %v2927 = vld [vmem:[%s2926] sm:$0xff]
    %v2928 = vld [vmem:[%s2926 + $0x8] sm:$0xff]
    %v2929 = vld [vmem:[%s2926 + $0x10] sm:$0xff]
    %v2930 = vld [vmem:[%s2926 + $0x18] sm:$0xff]
    %v2931 = vld [vmem:[%s2926 + $0x20] sm:$0xff]
    %v2932 = vld [vmem:[%s2926 + $0x28] sm:$0xff]
    %v2933 = vld [vmem:[%s2926 + $0x30] sm:$0xff]
    %v2934 = vld [vmem:[%s2926 + $0x38] sm:$0xff]
    %v2935 = vld [vmem:[%s2926 + $0x40] sm:$0xff]
    %v2936 = vld [vmem:[%s2926 + $0x48] sm:$0xff]
    %v2937 = vld [vmem:[%s2926 + $0x50] sm:$0xff]
    %v2938 = vld [vmem:[%s2926 + $0x58] sm:$0xff]
    %s2939 = scalar_lea.vmem [#allocation5], 3
    %v2940 = vld [vmem:[%s2939] sm:$0x7]
    %v2942 = vlaneseq
    %v2943 = vshrl.u32 %v2942, 7
    %v2944 = vsub.s32 0, %v2943
    %v2945 = vrot.slane %v2940, %v2944
    %v2946 = vlaneseq
    %v2947 = vshrl.u32 %v2946, 7
    %v2948 = vsub.s32 1, %v2947
    %v2949 = vrot.slane %v2940, %v2948
    %v2950 = vlaneseq
    %v2951 = vshrl.u32 %v2950, 7
    %v2952 = vsub.s32 2, %v2951
    %v2953 = vrot.slane %v2940, %v2952
    %v2958 = vsel %vm1337, %v2924, 0
    %v2961 = vsel %vm1337, %v2925, 0
    %2963 = vmatprep.subr.mxu0 %v2928
    %2964 = vmatpush1.msra.mxu0 %v2927
    %2965 = vmatprep.subr.mxu0 %v2931
    %2966 = vmatpush1.msra.mxu0 %v2930
    %2967 = vmatprep.subr.mxu0 %v2934
    %2968 = vmatpush1.msra.mxu0 %v2933
    %2969 = vmatprep.subr.mxu0 %v2937
    %2970 = vmatpush1.msra.mxu0 %v2936
    %2971 = vmatprep.subr.mxu0 0.0
    %2972 = vmatpush1.msra.mxu0 0.0
    %2973 = vmatprep.subr.mxu0 0.0
    %2974 = vmatpush1.msra.mxu0 0.0
    %2975 = vmatprep.subr.mxu0 0.0
    %2976 = vmatpush1.msra.mxu0 0.0
    %2977 = vmatprep.subr.mxu0 0.0
    %2978 = vmatpush1.msra.mxu0 0.0
    %2979 = vmatprep.subr.mxu0 0.0
    %2980 = vmatpush1.msra.mxu0 0.0
    %2981 = vmatprep.subr.mxu0 0.0
    %2982 = vmatpush1.msra.mxu0 0.0
    %2983 = vmatprep.subr.mxu0 0.0
    %2984 = vmatpush1.msra.mxu0 0.0
    %2985 = vmatprep.subr.mxu0 0.0
    %2986 = vmatpush1.msra.mxu0 0.0
    %2987 = vmatprep.subr.mxu0 0.0
    %2988 = vmatpush1.msra.mxu0 0.0
    %2989 = vmatprep.subr.mxu0 0.0
    %2990 = vmatpush1.msra.mxu0 0.0
    %2991 = vmatprep.subr.mxu0 0.0
    %2992 = vmatpush1.msra.mxu0 0.0
    %2993 = vmatprep.subr.mxu0 0.0
    %2994 = vmatpush1.msra.mxu0 0.0
    %2995 = vmatprep.subr.mxu0 0.0
    %2996 = vmatpush1.msra.mxu0 0.0
    %2997 = vmatprep.subr.mxu0 0.0
    %2998 = vmatpush1.msra.mxu0 0.0
    %2999 = vmatprep.subr.mxu0 0.0
    %3000 = vmatpush1.msra.mxu0 0.0
    %3001 = vmatprep.subr.mxu0 0.0
    %3002 = vmatpush1.msra.mxu0 0.0
    %3003 = vmatprep.subr.mxu0 0.0
    %3004 = vmatpush1.msra.mxu0 0.0
    %3005 = vmatprep.subr.mxu0 0.0
    %3006 = vmatpush1.msra.mxu0 0.0
    %3007 = vmatprep.subr.mxu0 0.0
    %3008 = vmatpush1.msra.mxu0 0.0
    %3009 = vmatprep.subr.mxu0 0.0
    %3010 = vmatpush1.msra.mxu0 0.0
    %3011 = vmatprep.subr.mxu0 0.0
    %3012 = vmatpush1.msra.mxu0 0.0
    %3013 = vmatprep.subr.mxu0 0.0
    %3014 = vmatpush1.msra.mxu0 0.0
    %3015 = vmatprep.subr.mxu0 0.0
    %3016 = vmatpush1.msra.mxu0 0.0
    %3017 = vmatprep.subr.mxu0 0.0
    %3018 = vmatpush1.msra.mxu0 0.0
    %3019 = vmatprep.subr.mxu0 0.0
    %3020 = vmatpush1.msra.mxu0 0.0
    %3021 = vmatprep.subr.mxu0 0.0
    %3022 = vmatpush1.msra.mxu0 0.0
    %3023 = vmatprep.subr.mxu0 0.0
    %3024 = vmatpush1.msra.mxu0 0.0
    %3025 = vmatprep.subr.mxu0 0.0
    %3026 = vmatpush1.msra.mxu0 0.0
    %3027 = vmatprep.mubr.f32.mxu0 0.0
    %3028 = vmatmul.mubr.f32.gmra.mrb[0].mxu0 %v2958
    %v3029 = vpop.f32.mrb[0].mxu0
    %v3030 = vadd.f32 %v2945, %v3029
    %v3031 = vpop.f32.mrb[0].mxu0
    %v3032 = vadd.f32 %v2949, %v3031
    %3033 = vmatprep.mubr.f32.mxu0 0.0
    %3034 = vmatmul.mubr.f32.gmra.mrb[0].mxu0 %v2961
    %v3035 = vpop.f32.mrb[0].mxu0
    %v3036 = vadd.f32 %v2945, %v3035
    %v3037 = vpop.f32.mrb[0].mxu0
    %v3038 = vadd.f32 %v2949, %v3037
    %3039 = vdwg.mxu0
    %3040 = vmatprep.subr.mxu0 0.0
    %3041 = vmatpush1.msra.mxu0 %v2929
    %3042 = vmatprep.subr.mxu0 0.0
    %3043 = vmatpush1.msra.mxu0 %v2932
    %3044 = vmatprep.subr.mxu0 0.0
    %3045 = vmatpush1.msra.mxu0 %v2935
    %3046 = vmatprep.subr.mxu0 0.0
    %3047 = vmatpush1.msra.mxu0 %v2938
    %3048 = vmatprep.subr.mxu0 0.0
    %3049 = vmatpush1.msra.mxu0 0.0
    %3050 = vmatprep.subr.mxu0 0.0
    %3051 = vmatpush1.msra.mxu0 0.0
    %3052 = vmatprep.subr.mxu0 0.0
    %3053 = vmatpush1.msra.mxu0 0.0
    %3054 = vmatprep.subr.mxu0 0.0
    %3055 = vmatpush1.msra.mxu0 0.0
    %3056 = vmatprep.subr.mxu0 0.0
    %3057 = vmatpush1.msra.mxu0 0.0
    %3058 = vmatprep.subr.mxu0 0.0
    %3059 = vmatpush1.msra.mxu0 0.0
    %3060 = vmatprep.subr.mxu0 0.0
    %3061 = vmatpush1.msra.mxu0 0.0
    %3062 = vmatprep.subr.mxu0 0.0
    %3063 = vmatpush1.msra.mxu0 0.0
    %3064 = vmatprep.subr.mxu0 0.0
    %3065 = vmatpush1.msra.mxu0 0.0
    %3066 = vmatprep.subr.mxu0 0.0
    %3067 = vmatpush1.msra.mxu0 0.0
    %3068 = vmatprep.subr.mxu0 0.0
    %3069 = vmatpush1.msra.mxu0 0.0
    %3070 = vmatprep.subr.mxu0 0.0
    %3071 = vmatpush1.msra.mxu0 0.0
    %3072 = vmatprep.subr.mxu0 0.0
    %3073 = vmatpush1.msra.mxu0 0.0
    %3074 = vmatprep.subr.mxu0 0.0
    %3075 = vmatpush1.msra.mxu0 0.0
    %3076 = vmatprep.subr.mxu0 0.0
    %3077 = vmatpush1.msra.mxu0 0.0
    %3078 = vmatprep.subr.mxu0 0.0
    %3079 = vmatpush1.msra.mxu0 0.0
    %3080 = vmatprep.subr.mxu0 0.0
    %3081 = vmatpush1.msra.mxu0 0.0
    %3082 = vmatprep.subr.mxu0 0.0
    %3083 = vmatpush1.msra.mxu0 0.0
    %3084 = vmatprep.subr.mxu0 0.0
    %3085 = vmatpush1.msra.mxu0 0.0
    %3086 = vmatprep.subr.mxu0 0.0
    %3087 = vmatpush1.msra.mxu0 0.0
    %3088 = vmatprep.subr.mxu0 0.0
    %3089 = vmatpush1.msra.mxu0 0.0
    %3090 = vmatprep.subr.mxu0 0.0
    %3091 = vmatpush1.msra.mxu0 0.0
    %3092 = vmatprep.subr.mxu0 0.0
    %3093 = vmatpush1.msra.mxu0 0.0
    %3094 = vmatprep.subr.mxu0 0.0
    %3095 = vmatpush1.msra.mxu0 0.0
    %3096 = vmatprep.subr.mxu0 0.0
    %3097 = vmatpush1.msra.mxu0 0.0
    %3098 = vmatprep.subr.mxu0 0.0
    %3099 = vmatpush1.msra.mxu0 0.0
    %3100 = vmatprep.subr.mxu0 0.0
    %3101 = vmatpush1.msra.mxu0 0.0
    %3102 = vmatprep.subr.mxu0 0.0
    %3103 = vmatpush1.msra.mxu0 0.0
    %3104 = vmatprep.mubr.f32.mxu0 0.0
    %3105 = vmatmul.mubr.f32.gmra.mrb[0].mxu0 %v2958
    %v3106 = vpop.f32.mrb[0].mxu0
    %v3107 = vadd.f32 %v2953, %v3106
    %v3108 = vpop.f32.mrb[0].mxu0
    %3109 = vmatprep.mubr.f32.mxu0 0.0
    %3110 = vmatmul.mubr.f32.gmra.mrb[0].mxu0 %v2961
    %v3111 = vpop.f32.mrb[0].mxu0
    %v3112 = vadd.f32 %v2953, %v3111
    %v3113 = vpop.f32.mrb[0].mxu0
    %3114 = vdwg.mxu0
    %v3115 = vmul.f32 %v3030, %v1148
    %v3116 = vmul.f32 %v3036, %v1148
    %3117 = vmatprep.subr.mxu0 0.0
    %3118 = vmatpush1.xpose.msra.mxu0 %v3032
    %3119 = vmatprep.subr.mxu0 0.0
    %3120 = vmatpush1.xpose.msra.mxu0 %v3038
    %3121 = vmatprep.subr.mxu0 0.0
    %3122 = vmatpush1.xpose.msra.mxu0 0.0
    %3123 = vmatprep.subr.mxu0 0.0
    %3124 = vmatpush1.xpose.msra.mxu0 0.0
    %3125 = vmatprep.subr.mxu0 0.0
    %3126 = vmatpush1.xpose.msra.mxu0 0.0
    %3127 = vmatprep.subr.mxu0 0.0
    %3128 = vmatpush1.xpose.msra.mxu0 0.0
    %3129 = vmatprep.subr.mxu0 0.0
    %3130 = vmatpush1.xpose.msra.mxu0 0.0
    %3131 = vmatprep.subr.mxu0 0.0
    %3132 = vmatpush1.xpose.msra.mxu0 0.0
    %3133 = vmatprep.subr.mxu0 0.0
    %3134 = vmatpush1.xpose.msra.mxu0 0.0
    %3135 = vmatprep.subr.mxu0 0.0
    %3136 = vmatpush1.xpose.msra.mxu0 0.0
    %3137 = vmatprep.subr.mxu0 0.0
    %3138 = vmatpush1.xpose.msra.mxu0 0.0
    %3139 = vmatprep.subr.mxu0 0.0
    %3140 = vmatpush1.xpose.msra.mxu0 0.0
    %3141 = vmatprep.subr.mxu0 0.0
    %3142 = vmatpush1.xpose.msra.mxu0 0.0
    %3143 = vmatprep.subr.mxu0 0.0
    %3144 = vmatpush1.xpose.msra.mxu0 0.0
    %3145 = vmatprep.subr.mxu0 0.0
    %3146 = vmatpush1.xpose.msra.mxu0 0.0
    %3147 = vmatprep.subr.mxu0 0.0
    %3148 = vmatpush1.xpose.msra.mxu0 0.0
    %3149 = vmatprep.subr.mxu0 0.0
    %3150 = vmatpush1.xpose.msra.mxu0 0.0
    %3151 = vmatprep.subr.mxu0 0.0
    %3152 = vmatpush1.xpose.msra.mxu0 0.0
    %3153 = vmatprep.subr.mxu0 0.0
    %3154 = vmatpush1.xpose.msra.mxu0 0.0
    %3155 = vmatprep.subr.mxu0 0.0
    %3156 = vmatpush1.xpose.msra.mxu0 0.0
    %3157 = vmatprep.subr.mxu0 0.0
    %3158 = vmatpush1.xpose.msra.mxu0 0.0
    %3159 = vmatprep.subr.mxu0 0.0
    %3160 = vmatpush1.xpose.msra.mxu0 0.0
    %3161 = vmatprep.subr.mxu0 0.0
    %3162 = vmatpush1.xpose.msra.mxu0 0.0
    %3163 = vmatprep.subr.mxu0 0.0
    %3164 = vmatpush1.xpose.msra.mxu0 0.0
    %3165 = vmatprep.subr.mxu0 0.0
    %3166 = vmatpush1.xpose.msra.mxu0 0.0
    %3167 = vmatprep.subr.mxu0 0.0
    %3168 = vmatpush1.xpose.msra.mxu0 0.0
    %3169 = vmatprep.subr.mxu0 0.0
    %3170 = vmatpush1.xpose.msra.mxu0 0.0
    %3171 = vmatprep.subr.mxu0 0.0
    %3172 = vmatpush1.xpose.msra.mxu0 0.0
    %3173 = vmatprep.subr.mxu0 0.0
    %3174 = vmatpush1.xpose.msra.mxu0 0.0
    %3175 = vmatprep.subr.mxu0 0.0
    %3176 = vmatpush1.xpose.msra.mxu0 0.0
    %3177 = vmatprep.subr.mxu0 0.0
    %3178 = vmatpush1.xpose.msra.mxu0 0.0
    %3179 = vmatprep.subr.mxu0 0.0
    %3180 = vmatpush1.xpose.msra.mxu0 0.0
    %3181 = vmatprep.mubr.f32.mxu0 0.0
    %3182 = vmatmul.mubr.f32.gmra.mrb[0].mxu0 %v3115
    %v3183 = vpop.f32.mrb[0].mxu0
    %v3184 = vadd.f32 0.0, %v3183
    %v3185 = vpop.f32.mrb[0].mxu0
    %3186 = vmatprep.mubr.f32.mxu0 0.0
    %3187 = vmatmul.mubr.f32.gmra.mrb[0].mxu0 %v3116
    %v3188 = vpop.f32.mrb[0].mxu0
    %v3189 = vadd.f32 0.0, %v3188
    %v3190 = vpop.f32.mrb[0].mxu0
    %3191 = vdwg.mxu0
    %v3192 = vmul.f32 %v3184, 0.17677669
    %v3193 = vmul.f32 %v3189, 0.17677669
    %v3194 = vlaneseq
    %v3195 = vshrl.u32 %v3194, 7
    %v3196 = vsub.s32 4, %v3195
    %v3197 = vrot.slane %v1105, %v3196
    %v3198 = vlaneseq
    %v3199 = vshrl.u32 %v3198, 7
    %v3200 = vsub.s32 4, %v3199
    %v3201 = vrot.slane %v1106, %v3200
    %v3202 = vmul.f32 %v1107, %v3197
    %v3203 = vmul.f32 %v1108, %v3201
    %v3204 = vmul.f32 %v1109, %v3197
    %v3205 = vmul.f32 %v1110, %v3201
    %3206 = vmatprep.subr.mxu0 0.0
    %3207 = vmatpush1.msra.mxu0 %v1111
    %3208 = vmatprep.subr.mxu0 0.0
    %3209 = vmatpush1.msra.mxu0 %v1112
    %3210 = vmatprep.subr.mxu0 0.0
    %3211 = vmatpush1.msra.mxu0 %v1113
    %3212 = vmatprep.subr.mxu0 0.0
    %3213 = vmatpush1.msra.mxu0 %v1114
    %3214 = vmatprep.subr.mxu0 0.0
    %3215 = vmatpush1.msra.mxu0 %v1115
    %3216 = vmatprep.subr.mxu0 0.0
    %3217 = vmatpush1.msra.mxu0 %v1116
    %3218 = vmatprep.subr.mxu0 0.0
    %3219 = vmatpush1.msra.mxu0 %v1117
    %3220 = vmatprep.subr.mxu0 0.0
    %3221 = vmatpush1.msra.mxu0 %v1118
    %3222 = vmatprep.subr.mxu0 0.0
    %3223 = vmatpush1.msra.mxu0 %v1119
    %3224 = vmatprep.subr.mxu0 0.0
    %3225 = vmatpush1.msra.mxu0 %v1120
    %3226 = vmatprep.subr.mxu0 0.0
    %3227 = vmatpush1.msra.mxu0 %v1121
    %3228 = vmatprep.subr.mxu0 0.0
    %3229 = vmatpush1.msra.mxu0 %v1122
    %3230 = vmatprep.subr.mxu0 0.0
    %3231 = vmatpush1.msra.mxu0 %v1123
    %3232 = vmatprep.subr.mxu0 0.0
    %3233 = vmatpush1.msra.mxu0 %v1124
    %3234 = vmatprep.subr.mxu0 0.0
    %3235 = vmatpush1.msra.mxu0 %v1125
    %3236 = vmatprep.subr.mxu0 0.0
    %3237 = vmatpush1.msra.mxu0 %v1126
    %3238 = vmatprep.subr.mxu0 0.0
    %3239 = vmatpush1.msra.mxu0 %v1127
    %3240 = vmatprep.subr.mxu0 0.0
    %3241 = vmatpush1.msra.mxu0 %v1128
    %3242 = vmatprep.subr.mxu0 0.0
    %3243 = vmatpush1.msra.mxu0 %v1129
    %3244 = vmatprep.subr.mxu0 0.0
    %3245 = vmatpush1.msra.mxu0 %v1130
    %3246 = vmatprep.subr.mxu0 0.0
    %3247 = vmatpush1.msra.mxu0 %v1131
    %3248 = vmatprep.subr.mxu0 0.0
    %3249 = vmatpush1.msra.mxu0 %v1132
    %3250 = vmatprep.subr.mxu0 0.0
    %3251 = vmatpush1.msra.mxu0 %v1133
    %3252 = vmatprep.subr.mxu0 0.0
    %3253 = vmatpush1.msra.mxu0 %v1134
    %3254 = vmatprep.subr.mxu0 0.0
    %3255 = vmatpush1.msra.mxu0 %v1135
    %3256 = vmatprep.subr.mxu0 0.0
    %3257 = vmatpush1.msra.mxu0 %v1136
    %3258 = vmatprep.subr.mxu0 0.0
    %3259 = vmatpush1.msra.mxu0 %v1137
    %3260 = vmatprep.subr.mxu0 0.0
    %3261 = vmatpush1.msra.mxu0 %v1138
    %3262 = vmatprep.subr.mxu0 0.0
    %3263 = vmatpush1.msra.mxu0 %v1139
    %3264 = vmatprep.subr.mxu0 0.0
    %3265 = vmatpush1.msra.mxu0 %v1140
    %3266 = vmatprep.subr.mxu0 0.0
    %3267 = vmatpush1.msra.mxu0 %v1141
    %3268 = vmatprep.subr.mxu0 0.0
    %3269 = vmatpush1.msra.mxu0 %v1142
    %3270 = vmatprep.mubr.f32.mxu0 %v3203
    %3271 = vmatmul.mubr.f32.gmra.mrb[0].mxu0 %v3202
    %v3272 = vpop.f32.mrb[0].mxu0
    %v3273 = vadd.f32 0.0, %v3272
    %v3274 = vpop.f32.mrb[0].mxu0
    %3275 = vmatprep.mubr.f32.mxu0 %v3205
    %3276 = vmatmul.mubr.f32.gmra.mrb[0].mxu0 %v3204
    %v3277 = vpop.f32.mrb[0].mxu0
    %v3278 = vadd.f32 0.0, %v3277
    %v3279 = vpop.f32.mrb[0].mxu0
    %3280 = vdwg.mxu0
    %v3281 = vadd.f32 %v3192, %v3273
    %v3282 = vadd.f32 %v3193, %v3278
    %v3283 = vsel %vm377, %v3281, -inf
    %3284 = vmax.xlane.f32.xlu0 %v3283
    %v3285 = vpop.xlane.xlu0 %3284
    %v3286 = vsel %vm377, %v3282, -inf
    %3287 = vmax.xlane.f32.xlu0 %v3286
    %v3288 = vpop.xlane.xlu0 %3287
    %v3289 = vsub.f32 %v3281, %v3285
    %v3290 = vsub.f32 %v3282, %v3288
    %v3291 = vmul.f32 %v3289, 1.442695
    %v3292 = vpow.pop %v3291
    %v3293 = vmul.f32 %v3290, 1.442695
    %v3294 = vpow.pop %v3293
    %v3295 = vsel %vm377, %v3292, 0.0
    %3296 = vadd.xlane.f32.xlu0 %v3295
    %v3297 = vpop.xlane.xlu0 %3296
    %v3298 = vsel %vm377, %v3294, 0.0
    %3299 = vadd.xlane.f32.xlu0 %v3298
    %v3300 = vpop.xlane.xlu0 %3299
    %v3301 = vrcp.pop %v3297
    %v3302 = vmul.f32 %v3292, %v3301
    %v3303 = vrcp.pop %v3300
    %v3304 = vmul.f32 %v3294, %v3303
    %v3305 = vmul.f32 %v3107, %v1148
    %v3306 = vmul.f32 %v3112, %v1148
    %v3307 = vmul.f32 %v3030, %v1152
    %v3308 = vmul.f32 %v3036, %v1152
    %3309 = vmatprep.subr.mxu0 0.0
    %3310 = vmatpush1.xpose.msra.mxu0 %v3032
    %3311 = vmatprep.subr.mxu0 0.0
    %3312 = vmatpush1.xpose.msra.mxu0 %v3038
    %3313 = vmatprep.subr.mxu0 0.0
    %3314 = vmatpush1.xpose.msra.mxu0 0.0
    %3315 = vmatprep.subr.mxu0 0.0
    %3316 = vmatpush1.xpose.msra.mxu0 0.0
    %3317 = vmatprep.subr.mxu0 0.0
    %3318 = vmatpush1.xpose.msra.mxu0 0.0
    %3319 = vmatprep.subr.mxu0 0.0
    %3320 = vmatpush1.xpose.msra.mxu0 0.0
    %3321 = vmatprep.subr.mxu0 0.0
    %3322 = vmatpush1.xpose.msra.mxu0 0.0
    %3323 = vmatprep.subr.mxu0 0.0
    %3324 = vmatpush1.xpose.msra.mxu0 0.0
    %3325 = vmatprep.subr.mxu0 0.0
    %3326 = vmatpush1.xpose.msra.mxu0 0.0
    %3327 = vmatprep.subr.mxu0 0.0
    %3328 = vmatpush1.xpose.msra.mxu0 0.0
    %3329 = vmatprep.subr.mxu0 0.0
    %3330 = vmatpush1.xpose.msra.mxu0 0.0
    %3331 = vmatprep.subr.mxu0 0.0
    %3332 = vmatpush1.xpose.msra.mxu0 0.0
    %3333 = vmatprep.subr.mxu0 0.0
    %3334 = vmatpush1.xpose.msra.mxu0 0.0
    %3335 = vmatprep.subr.mxu0 0.0
    %3336 = vmatpush1.xpose.msra.mxu0 0.0
    %3337 = vmatprep.subr.mxu0 0.0
    %3338 = vmatpush1.xpose.msra.mxu0 0.0
    %3339 = vmatprep.subr.mxu0 0.0
    %3340 = vmatpush1.xpose.msra.mxu0 0.0
    %3341 = vmatprep.subr.mxu0 0.0
    %3342 = vmatpush1.xpose.msra.mxu0 0.0
    %3343 = vmatprep.subr.mxu0 0.0
    %3344 = vmatpush1.xpose.msra.mxu0 0.0
    %3345 = vmatprep.subr.mxu0 0.0
    %3346 = vmatpush1.xpose.msra.mxu0 0.0
    %3347 = vmatprep.subr.mxu0 0.0
    %3348 = vmatpush1.xpose.msra.mxu0 0.0
    %3349 = vmatprep.subr.mxu0 0.0
    %3350 = vmatpush1.xpose.msra.mxu0 0.0
    %3351 = vmatprep.subr.mxu0 0.0
    %3352 = vmatpush1.xpose.msra.mxu0 0.0
    %3353 = vmatprep.subr.mxu0 0.0
    %3354 = vmatpush1.xpose.msra.mxu0 0.0
    %3355 = vmatprep.subr.mxu0 0.0
    %3356 = vmatpush1.xpose.msra.mxu0 0.0
    %3357 = vmatprep.subr.mxu0 0.0
    %3358 = vmatpush1.xpose.msra.mxu0 0.0
    %3359 = vmatprep.subr.mxu0 0.0
    %3360 = vmatpush1.xpose.msra.mxu0 0.0
    %3361 = vmatprep.subr.mxu0 0.0
    %3362 = vmatpush1.xpose.msra.mxu0 0.0
    %3363 = vmatprep.subr.mxu0 0.0
    %3364 = vmatpush1.xpose.msra.mxu0 0.0
    %3365 = vmatprep.subr.mxu0 0.0
    %3366 = vmatpush1.xpose.msra.mxu0 0.0
    %3367 = vmatprep.subr.mxu0 0.0
    %3368 = vmatpush1.xpose.msra.mxu0 0.0
    %3369 = vmatprep.subr.mxu0 0.0
    %3370 = vmatpush1.xpose.msra.mxu0 0.0
    %3371 = vmatprep.subr.mxu0 0.0
    %3372 = vmatpush1.xpose.msra.mxu0 0.0
    %3373 = vmatprep.mubr.f32.mxu0 0.0
    %3374 = vmatmul.mubr.f32.gmra.mrb[0].mxu0 %v3307
    %v3375 = vpop.f32.mrb[0].mxu0
    %v3376 = vadd.f32 0.0, %v3375
    %v3377 = vpop.f32.mrb[0].mxu0
    %3378 = vmatprep.mubr.f32.mxu0 0.0
    %3379 = vmatmul.mubr.f32.gmra.mrb[0].mxu0 %v3308
    %v3380 = vpop.f32.mrb[0].mxu0
    %v3381 = vadd.f32 0.0, %v3380
    %v3382 = vpop.f32.mrb[0].mxu0
    %3383 = vdwg.mxu0
    %v3384 = vmul.f32 %v3376, 0.17677669
    %v3385 = vmul.f32 %v3381, 0.17677669
    %v3386 = vlaneseq
    %v3387 = vshrl.u32 %v3386, 7
    %v3388 = vsub.s32 5, %v3387
    %v3389 = vrot.slane %v1105, %v3388
    %v3390 = vlaneseq
    %v3391 = vshrl.u32 %v3390, 7
    %v3392 = vsub.s32 5, %v3391
    %v3393 = vrot.slane %v1106, %v3392
    %v3394 = vmul.f32 %v1107, %v3389
    %v3395 = vmul.f32 %v1108, %v3393
    %v3396 = vmul.f32 %v1109, %v3389
    %v3397 = vmul.f32 %v1110, %v3393
    %3398 = vmatprep.subr.mxu0 0.0
    %3399 = vmatpush1.msra.mxu0 %v1111
    %3400 = vmatprep.subr.mxu0 0.0
    %3401 = vmatpush1.msra.mxu0 %v1112
    %3402 = vmatprep.subr.mxu0 0.0
    %3403 = vmatpush1.msra.mxu0 %v1113
    %3404 = vmatprep.subr.mxu0 0.0
    %3405 = vmatpush1.msra.mxu0 %v1114
    %3406 = vmatprep.subr.mxu0 0.0
    %3407 = vmatpush1.msra.mxu0 %v1115
    %3408 = vmatprep.subr.mxu0 0.0
    %3409 = vmatpush1.msra.mxu0 %v1116
    %3410 = vmatprep.subr.mxu0 0.0
    %3411 = vmatpush1.msra.mxu0 %v1117
    %3412 = vmatprep.subr.mxu0 0.0
    %3413 = vmatpush1.msra.mxu0 %v1118
    %3414 = vmatprep.subr.mxu0 0.0
    %3415 = vmatpush1.msra.mxu0 %v1119
    %3416 = vmatprep.subr.mxu0 0.0
    %3417 = vmatpush1.msra.mxu0 %v1120
    %3418 = vmatprep.subr.mxu0 0.0
    %3419 = vmatpush1.msra.mxu0 %v1121
    %3420 = vmatprep.subr.mxu0 0.0
    %3421 = vmatpush1.msra.mxu0 %v1122
    %3422 = vmatprep.subr.mxu0 0.0
    %3423 = vmatpush1.msra.mxu0 %v1123
    %3424 = vmatprep.subr.mxu0 0.0
    %3425 = vmatpush1.msra.mxu0 %v1124
    %3426 = vmatprep.subr.mxu0 0.0
    %3427 = vmatpush1.msra.mxu0 %v1125
    %3428 = vmatprep.subr.mxu0 0.0
    %3429 = vmatpush1.msra.mxu0 %v1126
    %3430 = vmatprep.subr.mxu0 0.0
    %3431 = vmatpush1.msra.mxu0 %v1127
    %3432 = vmatprep.subr.mxu0 0.0
    %3433 = vmatpush1.msra.mxu0 %v1128
    %3434 = vmatprep.subr.mxu0 0.0
    %3435 = vmatpush1.msra.mxu0 %v1129
    %3436 = vmatprep.subr.mxu0 0.0
    %3437 = vmatpush1.msra.mxu0 %v1130
    %3438 = vmatprep.subr.mxu0 0.0
    %3439 = vmatpush1.msra.mxu0 %v1131
    %3440 = vmatprep.subr.mxu0 0.0
    %3441 = vmatpush1.msra.mxu0 %v1132
    %3442 = vmatprep.subr.mxu0 0.0
    %3443 = vmatpush1.msra.mxu0 %v1133
    %3444 = vmatprep.subr.mxu0 0.0
    %3445 = vmatpush1.msra.mxu0 %v1134
    %3446 = vmatprep.subr.mxu0 0.0
    %3447 = vmatpush1.msra.mxu0 %v1135
    %3448 = vmatprep.subr.mxu0 0.0
    %3449 = vmatpush1.msra.mxu0 %v1136
    %3450 = vmatprep.subr.mxu0 0.0
    %3451 = vmatpush1.msra.mxu0 %v1137
    %3452 = vmatprep.subr.mxu0 0.0
    %3453 = vmatpush1.msra.mxu0 %v1138
    %3454 = vmatprep.subr.mxu0 0.0
    %3455 = vmatpush1.msra.mxu0 %v1139
    %3456 = vmatprep.subr.mxu0 0.0
    %3457 = vmatpush1.msra.mxu0 %v1140
    %3458 = vmatprep.subr.mxu0 0.0
    %3459 = vmatpush1.msra.mxu0 %v1141
    %3460 = vmatprep.subr.mxu0 0.0
    %3461 = vmatpush1.msra.mxu0 %v1142
    %3462 = vmatprep.mubr.f32.mxu0 %v3395
    %3463 = vmatmul.mubr.f32.gmra.mrb[0].mxu0 %v3394
    %v3464 = vpop.f32.mrb[0].mxu0
    %v3465 = vadd.f32 0.0, %v3464
    %v3466 = vpop.f32.mrb[0].mxu0
    %3467 = vmatprep.mubr.f32.mxu0 %v3397
    %3468 = vmatmul.mubr.f32.gmra.mrb[0].mxu0 %v3396
    %v3469 = vpop.f32.mrb[0].mxu0
    %v3470 = vadd.f32 0.0, %v3469
    %v3471 = vpop.f32.mrb[0].mxu0
    %3472 = vdwg.mxu0
    %v3473 = vadd.f32 %v3384, %v3465
    %v3474 = vadd.f32 %v3385, %v3470
    %v3475 = vsel %vm377, %v3473, -inf
    %3476 = vmax.xlane.f32.xlu0 %v3475
    %v3477 = vpop.xlane.xlu0 %3476
    %v3478 = vsel %vm377, %v3474, -inf
    %3479 = vmax.xlane.f32.xlu0 %v3478
    %v3480 = vpop.xlane.xlu0 %3479
    %v3481 = vsub.f32 %v3473, %v3477
    %v3482 = vsub.f32 %v3474, %v3480
    %v3483 = vmul.f32 %v3481, 1.442695
    %v3484 = vpow.pop %v3483
    %v3485 = vmul.f32 %v3482, 1.442695
    %v3486 = vpow.pop %v3485
    %v3487 = vsel %vm377, %v3484, 0.0
    %3488 = vadd.xlane.f32.xlu0 %v3487
    %v3489 = vpop.xlane.xlu0 %3488
    %v3490 = vsel %vm377, %v3486, 0.0
    %3491 = vadd.xlane.f32.xlu0 %v3490
    %v3492 = vpop.xlane.xlu0 %3491
    %v3493 = vrcp.pop %v3489
    %v3494 = vmul.f32 %v3484, %v3493
    %v3495 = vrcp.pop %v3492
    %v3496 = vmul.f32 %v3486, %v3495
    %v3497 = vmul.f32 %v3107, %v1152
    %v3498 = vmul.f32 %v3112, %v1152
    %v3500 = vsel %vm377, %v3494, 0
    %v3503 = vsel %vm377, %v3496, 0
    %3505 = vmatprep.subr.mxu0 0.0
    %3506 = vmatpush1.msra.mxu0 %v3497
    %3507 = vmatprep.subr.mxu0 0.0
    %3508 = vmatpush1.msra.mxu0 %v3498
    %3509 = vmatprep.subr.mxu0 0.0
    %3510 = vmatpush1.msra.mxu0 0.0
    %3511 = vmatprep.subr.mxu0 0.0
    %3512 = vmatpush1.msra.mxu0 0.0
    %3513 = vmatprep.subr.mxu0 0.0
    %3514 = vmatpush1.msra.mxu0 0.0
    %3515 = vmatprep.subr.mxu0 0.0
    %3516 = vmatpush1.msra.mxu0 0.0
    %3517 = vmatprep.subr.mxu0 0.0
    %3518 = vmatpush1.msra.mxu0 0.0
    %3519 = vmatprep.subr.mxu0 0.0
    %3520 = vmatpush1.msra.mxu0 0.0
    %3521 = vmatprep.subr.mxu0 0.0
    %3522 = vmatpush1.msra.mxu0 0.0
    %3523 = vmatprep.subr.mxu0 0.0
    %3524 = vmatpush1.msra.mxu0 0.0
    %3525 = vmatprep.subr.mxu0 0.0
    %3526 = vmatpush1.msra.mxu0 0.0
    %3527 = vmatprep.subr.mxu0 0.0
    %3528 = vmatpush1.msra.mxu0 0.0
    %3529 = vmatprep.subr.mxu0 0.0
    %3530 = vmatpush1.msra.mxu0 0.0
    %3531 = vmatprep.subr.mxu0 0.0
    %3532 = vmatpush1.msra.mxu0 0.0
    %3533 = vmatprep.subr.mxu0 0.0
    %3534 = vmatpush1.msra.mxu0 0.0
    %3535 = vmatprep.subr.mxu0 0.0
    %3536 = vmatpush1.msra.mxu0 0.0
    %3537 = vmatprep.subr.mxu0 0.0
    %3538 = vmatpush1.msra.mxu0 0.0
    %3539 = vmatprep.subr.mxu0 0.0
    %3540 = vmatpush1.msra.mxu0 0.0
    %3541 = vmatprep.subr.mxu0 0.0
    %3542 = vmatpush1.msra.mxu0 0.0
    %3543 = vmatprep.subr.mxu0 0.0
    %3544 = vmatpush1.msra.mxu0 0.0
    %3545 = vmatprep.subr.mxu0 0.0
    %3546 = vmatpush1.msra.mxu0 0.0
    %3547 = vmatprep.subr.mxu0 0.0
    %3548 = vmatpush1.msra.mxu0 0.0
    %3549 = vmatprep.subr.mxu0 0.0
    %3550 = vmatpush1.msra.mxu0 0.0
    %3551 = vmatprep.subr.mxu0 0.0
    %3552 = vmatpush1.msra.mxu0 0.0
    %3553 = vmatprep.subr.mxu0 0.0
    %3554 = vmatpush1.msra.mxu0 0.0
    %3555 = vmatprep.subr.mxu0 0.0
    %3556 = vmatpush1.msra.mxu0 0.0
    %3557 = vmatprep.subr.mxu0 0.0
    %3558 = vmatpush1.msra.mxu0 0.0
    %3559 = vmatprep.subr.mxu0 0.0
    %3560 = vmatpush1.msra.mxu0 0.0
    %3561 = vmatprep.subr.mxu0 0.0
    %3562 = vmatpush1.msra.mxu0 0.0
    %3563 = vmatprep.subr.mxu0 0.0
    %3564 = vmatpush1.msra.mxu0 0.0
    %3565 = vmatprep.subr.mxu0 0.0
    %3566 = vmatpush1.msra.mxu0 0.0
    %3567 = vmatprep.subr.mxu0 0.0
    %3568 = vmatpush1.msra.mxu0 0.0
    %3569 = vmatprep.mubr.f32.mxu0 0.0
    %3570 = vmatmul.mubr.f32.gmra.mrb[0].mxu0 %v3500
    %v3571 = vpop.f32.mrb[0].mxu0
    %v3572 = vadd.f32 0.0, %v3571
    %v3573 = vpop.f32.mrb[0].mxu0
    %3574 = vmatprep.mubr.f32.mxu0 0.0
    %3575 = vmatmul.mubr.f32.gmra.mrb[0].mxu0 %v3503
    %v3576 = vpop.f32.mrb[0].mxu0
    %v3577 = vadd.f32 0.0, %v3576
    %v3578 = vpop.f32.mrb[0].mxu0
    %3579 = vdwg.mxu0
    %v3581 = vsel %vm377, %v3302, 0
    %v3584 = vsel %vm377, %v3304, 0
    %3586 = vmatprep.subr.mxu0 0.0
    %3587 = vmatpush1.msra.mxu0 %v3305
    %3588 = vmatprep.subr.mxu0 0.0
    %3589 = vmatpush1.msra.mxu0 %v3306
    %3590 = vmatprep.subr.mxu0 0.0
    %3591 = vmatpush1.msra.mxu0 0.0
    %3592 = vmatprep.subr.mxu0 0.0
    %3593 = vmatpush1.msra.mxu0 0.0
    %3594 = vmatprep.subr.mxu0 0.0
    %3595 = vmatpush1.msra.mxu0 0.0
    %3596 = vmatprep.subr.mxu0 0.0
    %3597 = vmatpush1.msra.mxu0 0.0
    %3598 = vmatprep.subr.mxu0 0.0
    %3599 = vmatpush1.msra.mxu0 0.0
    %3600 = vmatprep.subr.mxu0 0.0
    %3601 = vmatpush1.msra.mxu0 0.0
    %3602 = vmatprep.subr.mxu0 0.0
    %3603 = vmatpush1.msra.mxu0 0.0
    %3604 = vmatprep.subr.mxu0 0.0
    %3605 = vmatpush1.msra.mxu0 0.0
    %3606 = vmatprep.subr.mxu0 0.0
    %3607 = vmatpush1.msra.mxu0 0.0
    %3608 = vmatprep.subr.mxu0 0.0
    %3609 = vmatpush1.msra.mxu0 0.0
    %3610 = vmatprep.subr.mxu0 0.0
    %3611 = vmatpush1.msra.mxu0 0.0
    %3612 = vmatprep.subr.mxu0 0.0
    %3613 = vmatpush1.msra.mxu0 0.0
    %3614 = vmatprep.subr.mxu0 0.0
    %3615 = vmatpush1.msra.mxu0 0.0
    %3616 = vmatprep.subr.mxu0 0.0
    %3617 = vmatpush1.msra.mxu0 0.0
    %3618 = vmatprep.subr.mxu0 0.0
    %3619 = vmatpush1.msra.mxu0 0.0
    %3620 = vmatprep.subr.mxu0 0.0
    %3621 = vmatpush1.msra.mxu0 0.0
    %3622 = vmatprep.subr.mxu0 0.0
    %3623 = vmatpush1.msra.mxu0 0.0
    %3624 = vmatprep.subr.mxu0 0.0
    %3625 = vmatpush1.msra.mxu0 0.0
    %3626 = vmatprep.subr.mxu0 0.0
    %3627 = vmatpush1.msra.mxu0 0.0
    %3628 = vmatprep.subr.mxu0 0.0
    %3629 = vmatpush1.msra.mxu0 0.0
    %3630 = vmatprep.subr.mxu0 0.0
    %3631 = vmatpush1.msra.mxu0 0.0
    %3632 = vmatprep.subr.mxu0 0.0
    %3633 = vmatpush1.msra.mxu0 0.0
    %3634 = vmatprep.subr.mxu0 0.0
    %3635 = vmatpush1.msra.mxu0 0.0
    %3636 = vmatprep.subr.mxu0 0.0
    %3637 = vmatpush1.msra.mxu0 0.0
    %3638 = vmatprep.subr.mxu0 0.0
    %3639 = vmatpush1.msra.mxu0 0.0
    %3640 = vmatprep.subr.mxu0 0.0
    %3641 = vmatpush1.msra.mxu0 0.0
    %3642 = vmatprep.subr.mxu0 0.0
    %3643 = vmatpush1.msra.mxu0 0.0
    %3644 = vmatprep.subr.mxu0 0.0
    %3645 = vmatpush1.msra.mxu0 0.0
    %3646 = vmatprep.subr.mxu0 0.0
    %3647 = vmatpush1.msra.mxu0 0.0
    %3648 = vmatprep.subr.mxu0 0.0
    %3649 = vmatpush1.msra.mxu0 0.0
    %3650 = vmatprep.mubr.f32.mxu0 0.0
    %3651 = vmatmul.mubr.f32.gmra.mrb[0].mxu0 %v3581
    %v3652 = vpop.f32.mrb[0].mxu0
    %v3653 = vadd.f32 %v3572, %v3652
    %v3654 = vpop.f32.mrb[0].mxu0
    %3655 = vmatprep.mubr.f32.mxu0 0.0
    %3656 = vmatmul.mubr.f32.gmra.mrb[0].mxu0 %v3584
    %v3657 = vpop.f32.mrb[0].mxu0
    %v3658 = vadd.f32 %v3577, %v3657
    %v3659 = vpop.f32.mrb[0].mxu0
    %3660 = vdwg.mxu0
    %v3661 = vmul.f32 %v3030, %v1156
    %v3662 = vmul.f32 %v3036, %v1156
    %3663 = vmatprep.subr.mxu0 0.0
    %3664 = vmatpush1.xpose.msra.mxu0 %v3032
    %3665 = vmatprep.subr.mxu0 0.0
    %3666 = vmatpush1.xpose.msra.mxu0 %v3038
    %3667 = vmatprep.subr.mxu0 0.0
    %3668 = vmatpush1.xpose.msra.mxu0 0.0
    %3669 = vmatprep.subr.mxu0 0.0
    %3670 = vmatpush1.xpose.msra.mxu0 0.0
    %3671 = vmatprep.subr.mxu0 0.0
    %3672 = vmatpush1.xpose.msra.mxu0 0.0
    %3673 = vmatprep.subr.mxu0 0.0
    %3674 = vmatpush1.xpose.msra.mxu0 0.0
    %3675 = vmatprep.subr.mxu0 0.0
    %3676 = vmatpush1.xpose.msra.mxu0 0.0
    %3677 = vmatprep.subr.mxu0 0.0
    %3678 = vmatpush1.xpose.msra.mxu0 0.0
    %3679 = vmatprep.subr.mxu0 0.0
    %3680 = vmatpush1.xpose.msra.mxu0 0.0
    %3681 = vmatprep.subr.mxu0 0.0
    %3682 = vmatpush1.xpose.msra.mxu0 0.0
    %3683 = vmatprep.subr.mxu0 0.0
    %3684 = vmatpush1.xpose.msra.mxu0 0.0
    %3685 = vmatprep.subr.mxu0 0.0
    %3686 = vmatpush1.xpose.msra.mxu0 0.0
    %3687 = vmatprep.subr.mxu0 0.0
    %3688 = vmatpush1.xpose.msra.mxu0 0.0
    %3689 = vmatprep.subr.mxu0 0.0
    %3690 = vmatpush1.xpose.msra.mxu0 0.0
    %3691 = vmatprep.subr.mxu0 0.0
    %3692 = vmatpush1.xpose.msra.mxu0 0.0
    %3693 = vmatprep.subr.mxu0 0.0
    %3694 = vmatpush1.xpose.msra.mxu0 0.0
    %3695 = vmatprep.subr.mxu0 0.0
    %3696 = vmatpush1.xpose.msra.mxu0 0.0
    %3697 = vmatprep.subr.mxu0 0.0
    %3698 = vmatpush1.xpose.msra.mxu0 0.0
    %3699 = vmatprep.subr.mxu0 0.0
    %3700 = vmatpush1.xpose.msra.mxu0 0.0
    %3701 = vmatprep.subr.mxu0 0.0
    %3702 = vmatpush1.xpose.msra.mxu0 0.0
    %3703 = vmatprep.subr.mxu0 0.0
    %3704 = vmatpush1.xpose.msra.mxu0 0.0
    %3705 = vmatprep.subr.mxu0 0.0
    %3706 = vmatpush1.xpose.msra.mxu0 0.0
    %3707 = vmatprep.subr.mxu0 0.0
    %3708 = vmatpush1.xpose.msra.mxu0 0.0
    %3709 = vmatprep.subr.mxu0 0.0
    %3710 = vmatpush1.xpose.msra.mxu0 0.0
    %3711 = vmatprep.subr.mxu0 0.0
    %3712 = vmatpush1.xpose.msra.mxu0 0.0
    %3713 = vmatprep.subr.mxu0 0.0
    %3714 = vmatpush1.xpose.msra.mxu0 0.0
    %3715 = vmatprep.subr.mxu0 0.0
    %3716 = vmatpush1.xpose.msra.mxu0 0.0
    %3717 = vmatprep.subr.mxu0 0.0
    %3718 = vmatpush1.xpose.msra.mxu0 0.0
    %3719 = vmatprep.subr.mxu0 0.0
    %3720 = vmatpush1.xpose.msra.mxu0 0.0
    %3721 = vmatprep.subr.mxu0 0.0
    %3722 = vmatpush1.xpose.msra.mxu0 0.0
    %3723 = vmatprep.subr.mxu0 0.0
    %3724 = vmatpush1.xpose.msra.mxu0 0.0
    %3725 = vmatprep.subr.mxu0 0.0
    %3726 = vmatpush1.xpose.msra.mxu0 0.0
    %3727 = vmatprep.mubr.f32.mxu0 0.0
    %3728 = vmatmul.mubr.f32.gmra.mrb[0].mxu0 %v3661
    %v3729 = vpop.f32.mrb[0].mxu0
    %v3730 = vadd.f32 0.0, %v3729
    %v3731 = vpop.f32.mrb[0].mxu0
    %3732 = vmatprep.mubr.f32.mxu0 0.0
    %3733 = vmatmul.mubr.f32.gmra.mrb[0].mxu0 %v3662
    %v3734 = vpop.f32.mrb[0].mxu0
    %v3735 = vadd.f32 0.0, %v3734
    %v3736 = vpop.f32.mrb[0].mxu0
    %3737 = vdwg.mxu0
    %v3738 = vmul.f32 %v3730, 0.17677669
    %v3739 = vmul.f32 %v3735, 0.17677669
    %v3740 = vlaneseq
    %v3741 = vshrl.u32 %v3740, 7
    %v3742 = vsub.s32 6, %v3741
    %v3743 = vrot.slane %v1105, %v3742
    %v3744 = vlaneseq
    %v3745 = vshrl.u32 %v3744, 7
    %v3746 = vsub.s32 6, %v3745
    %v3747 = vrot.slane %v1106, %v3746
    %v3748 = vmul.f32 %v1107, %v3743
    %v3749 = vmul.f32 %v1108, %v3747
    %v3750 = vmul.f32 %v1109, %v3743
    %v3751 = vmul.f32 %v1110, %v3747
    %3752 = vmatprep.subr.mxu0 0.0
    %3753 = vmatpush1.msra.mxu0 %v1111
    %3754 = vmatprep.subr.mxu0 0.0
    %3755 = vmatpush1.msra.mxu0 %v1112
    %3756 = vmatprep.subr.mxu0 0.0
    %3757 = vmatpush1.msra.mxu0 %v1113
    %3758 = vmatprep.subr.mxu0 0.0
    %3759 = vmatpush1.msra.mxu0 %v1114
    %3760 = vmatprep.subr.mxu0 0.0
    %3761 = vmatpush1.msra.mxu0 %v1115
    %3762 = vmatprep.subr.mxu0 0.0
    %3763 = vmatpush1.msra.mxu0 %v1116
    %3764 = vmatprep.subr.mxu0 0.0
    %3765 = vmatpush1.msra.mxu0 %v1117
    %3766 = vmatprep.subr.mxu0 0.0
    %3767 = vmatpush1.msra.mxu0 %v1118
    %3768 = vmatprep.subr.mxu0 0.0
    %3769 = vmatpush1.msra.mxu0 %v1119
    %3770 = vmatprep.subr.mxu0 0.0
    %3771 = vmatpush1.msra.mxu0 %v1120
    %3772 = vmatprep.subr.mxu0 0.0
    %3773 = vmatpush1.msra.mxu0 %v1121
    %3774 = vmatprep.subr.mxu0 0.0
    %3775 = vmatpush1.msra.mxu0 %v1122
    %3776 = vmatprep.subr.mxu0 0.0
    %3777 = vmatpush1.msra.mxu0 %v1123
    %3778 = vmatprep.subr.mxu0 0.0
    %3779 = vmatpush1.msra.mxu0 %v1124
    %3780 = vmatprep.subr.mxu0 0.0
    %3781 = vmatpush1.msra.mxu0 %v1125
    %3782 = vmatprep.subr.mxu0 0.0
    %3783 = vmatpush1.msra.mxu0 %v1126
    %3784 = vmatprep.subr.mxu0 0.0
    %3785 = vmatpush1.msra.mxu0 %v1127
    %3786 = vmatprep.subr.mxu0 0.0
    %3787 = vmatpush1.msra.mxu0 %v1128
    %3788 = vmatprep.subr.mxu0 0.0
    %3789 = vmatpush1.msra.mxu0 %v1129
    %3790 = vmatprep.subr.mxu0 0.0
    %3791 = vmatpush1.msra.mxu0 %v1130
    %3792 = vmatprep.subr.mxu0 0.0
    %3793 = vmatpush1.msra.mxu0 %v1131
    %3794 = vmatprep.subr.mxu0 0.0
    %3795 = vmatpush1.msra.mxu0 %v1132
    %3796 = vmatprep.subr.mxu0 0.0
    %3797 = vmatpush1.msra.mxu0 %v1133
    %3798 = vmatprep.subr.mxu0 0.0
    %3799 = vmatpush1.msra.mxu0 %v1134
    %3800 = vmatprep.subr.mxu0 0.0
    %3801 = vmatpush1.msra.mxu0 %v1135
    %3802 = vmatprep.subr.mxu0 0.0
    %3803 = vmatpush1.msra.mxu0 %v1136
    %3804 = vmatprep.subr.mxu0 0.0
    %3805 = vmatpush1.msra.mxu0 %v1137
    %3806 = vmatprep.subr.mxu0 0.0
    %3807 = vmatpush1.msra.mxu0 %v1138
    %3808 = vmatprep.subr.mxu0 0.0
    %3809 = vmatpush1.msra.mxu0 %v1139
    %3810 = vmatprep.subr.mxu0 0.0
    %3811 = vmatpush1.msra.mxu0 %v1140
    %3812 = vmatprep.subr.mxu0 0.0
    %3813 = vmatpush1.msra.mxu0 %v1141
    %3814 = vmatprep.subr.mxu0 0.0
    %3815 = vmatpush1.msra.mxu0 %v1142
    %3816 = vmatprep.mubr.f32.mxu0 %v3749
    %3817 = vmatmul.mubr.f32.gmra.mrb[0].mxu0 %v3748
    %v3818 = vpop.f32.mrb[0].mxu0
    %v3819 = vadd.f32 0.0, %v3818
    %v3820 = vpop.f32.mrb[0].mxu0
    %3821 = vmatprep.mubr.f32.mxu0 %v3751
    %3822 = vmatmul.mubr.f32.gmra.mrb[0].mxu0 %v3750
    %v3823 = vpop.f32.mrb[0].mxu0
    %v3824 = vadd.f32 0.0, %v3823
    %v3825 = vpop.f32.mrb[0].mxu0
    %3826 = vdwg.mxu0
    %v3827 = vadd.f32 %v3738, %v3819
    %v3828 = vadd.f32 %v3739, %v3824
    %v3829 = vsel %vm377, %v3827, -inf
    %3830 = vmax.xlane.f32.xlu0 %v3829
    %v3831 = vpop.xlane.xlu0 %3830
    %v3832 = vsel %vm377, %v3828, -inf
    %3833 = vmax.xlane.f32.xlu0 %v3832
    %v3834 = vpop.xlane.xlu0 %3833
    %v3835 = vsub.f32 %v3827, %v3831
    %v3836 = vsub.f32 %v3828, %v3834
    %v3837 = vmul.f32 %v3835, 1.442695
    %v3838 = vpow.pop %v3837
    %v3839 = vmul.f32 %v3836, 1.442695
    %v3840 = vpow.pop %v3839
    %v3841 = vsel %vm377, %v3838, 0.0
    %3842 = vadd.xlane.f32.xlu0 %v3841
    %v3843 = vpop.xlane.xlu0 %3842
    %v3844 = vsel %vm377, %v3840, 0.0
    %3845 = vadd.xlane.f32.xlu0 %v3844
    %v3846 = vpop.xlane.xlu0 %3845
    %v3847 = vrcp.pop %v3843
    %v3848 = vmul.f32 %v3838, %v3847
    %v3849 = vrcp.pop %v3846
    %v3850 = vmul.f32 %v3840, %v3849
    %v3851 = vmul.f32 %v3107, %v1156
    %v3852 = vmul.f32 %v3112, %v1156
    %v3854 = vsel %vm377, %v3848, 0
    %v3857 = vsel %vm377, %v3850, 0
    %3859 = vmatprep.subr.mxu0 0.0
    %3860 = vmatpush1.msra.mxu0 %v3851
    %3861 = vmatprep.subr.mxu0 0.0
    %3862 = vmatpush1.msra.mxu0 %v3852
    %3863 = vmatprep.subr.mxu0 0.0
    %3864 = vmatpush1.msra.mxu0 0.0
    %3865 = vmatprep.subr.mxu0 0.0
    %3866 = vmatpush1.msra.mxu0 0.0
    %3867 = vmatprep.subr.mxu0 0.0
    %3868 = vmatpush1.msra.mxu0 0.0
    %3869 = vmatprep.subr.mxu0 0.0
    %3870 = vmatpush1.msra.mxu0 0.0
    %3871 = vmatprep.subr.mxu0 0.0
    %3872 = vmatpush1.msra.mxu0 0.0
    %3873 = vmatprep.subr.mxu0 0.0
    %3874 = vmatpush1.msra.mxu0 0.0
    %3875 = vmatprep.subr.mxu0 0.0
    %3876 = vmatpush1.msra.mxu0 0.0
    %3877 = vmatprep.subr.mxu0 0.0
    %3878 = vmatpush1.msra.mxu0 0.0
    %3879 = vmatprep.subr.mxu0 0.0
    %3880 = vmatpush1.msra.mxu0 0.0
    %3881 = vmatprep.subr.mxu0 0.0
    %3882 = vmatpush1.msra.mxu0 0.0
    %3883 = vmatprep.subr.mxu0 0.0
    %3884 = vmatpush1.msra.mxu0 0.0
    %3885 = vmatprep.subr.mxu0 0.0
    %3886 = vmatpush1.msra.mxu0 0.0
    %3887 = vmatprep.subr.mxu0 0.0
    %3888 = vmatpush1.msra.mxu0 0.0
    %3889 = vmatprep.subr.mxu0 0.0
    %3890 = vmatpush1.msra.mxu0 0.0
    %3891 = vmatprep.subr.mxu0 0.0
    %3892 = vmatpush1.msra.mxu0 0.0
    %3893 = vmatprep.subr.mxu0 0.0
    %3894 = vmatpush1.msra.mxu0 0.0
    %3895 = vmatprep.subr.mxu0 0.0
    %3896 = vmatpush1.msra.mxu0 0.0
    %3897 = vmatprep.subr.mxu0 0.0
    %3898 = vmatpush1.msra.mxu0 0.0
    %3899 = vmatprep.subr.mxu0 0.0
    %3900 = vmatpush1.msra.mxu0 0.0
    %3901 = vmatprep.subr.mxu0 0.0
    %3902 = vmatpush1.msra.mxu0 0.0
    %3903 = vmatprep.subr.mxu0 0.0
    %3904 = vmatpush1.msra.mxu0 0.0
    %3905 = vmatprep.subr.mxu0 0.0
    %3906 = vmatpush1.msra.mxu0 0.0
    %3907 = vmatprep.subr.mxu0 0.0
    %3908 = vmatpush1.msra.mxu0 0.0
    %3909 = vmatprep.subr.mxu0 0.0
    %3910 = vmatpush1.msra.mxu0 0.0
    %3911 = vmatprep.subr.mxu0 0.0
    %3912 = vmatpush1.msra.mxu0 0.0
    %3913 = vmatprep.subr.mxu0 0.0
    %3914 = vmatpush1.msra.mxu0 0.0
    %3915 = vmatprep.subr.mxu0 0.0
    %3916 = vmatpush1.msra.mxu0 0.0
    %3917 = vmatprep.subr.mxu0 0.0
    %3918 = vmatpush1.msra.mxu0 0.0
    %3919 = vmatprep.subr.mxu0 0.0
    %3920 = vmatpush1.msra.mxu0 0.0
    %3921 = vmatprep.subr.mxu0 0.0
    %3922 = vmatpush1.msra.mxu0 0.0
    %3923 = vmatprep.mubr.f32.mxu0 0.0
    %3924 = vmatmul.mubr.f32.gmra.mrb[0].mxu0 %v3854
    %v3925 = vpop.f32.mrb[0].mxu0
    %v3926 = vadd.f32 0.0, %v3925
    %v3927 = vpop.f32.mrb[0].mxu0
    %3928 = vmatprep.mubr.f32.mxu0 0.0
    %3929 = vmatmul.mubr.f32.gmra.mrb[0].mxu0 %v3857
    %v3930 = vpop.f32.mrb[0].mxu0
    %v3931 = vadd.f32 0.0, %v3930
    %v3932 = vpop.f32.mrb[0].mxu0
    %3933 = vdwg.mxu0
    %v3934 = vadd.f32 %v3653, %v3926
    %v3935 = vadd.f32 %v3658, %v3931
    %v3936 = vmul.f32 %v3030, %v1160
    %v3937 = vmul.f32 %v3036, %v1160
    %3938 = vmatprep.subr.mxu0 0.0
    %3939 = vmatpush1.xpose.msra.mxu0 %v3032
    %3940 = vmatprep.subr.mxu0 0.0
    %3941 = vmatpush1.xpose.msra.mxu0 %v3038
    %3942 = vmatprep.subr.mxu0 0.0
    %3943 = vmatpush1.xpose.msra.mxu0 0.0
    %3944 = vmatprep.subr.mxu0 0.0
    %3945 = vmatpush1.xpose.msra.mxu0 0.0
    %3946 = vmatprep.subr.mxu0 0.0
    %3947 = vmatpush1.xpose.msra.mxu0 0.0
    %3948 = vmatprep.subr.mxu0 0.0
    %3949 = vmatpush1.xpose.msra.mxu0 0.0
    %3950 = vmatprep.subr.mxu0 0.0
    %3951 = vmatpush1.xpose.msra.mxu0 0.0
    %3952 = vmatprep.subr.mxu0 0.0
    %3953 = vmatpush1.xpose.msra.mxu0 0.0
    %3954 = vmatprep.subr.mxu0 0.0
    %3955 = vmatpush1.xpose.msra.mxu0 0.0
    %3956 = vmatprep.subr.mxu0 0.0
    %3957 = vmatpush1.xpose.msra.mxu0 0.0
    %3958 = vmatprep.subr.mxu0 0.0
    %3959 = vmatpush1.xpose.msra.mxu0 0.0
    %3960 = vmatprep.subr.mxu0 0.0
    %3961 = vmatpush1.xpose.msra.mxu0 0.0
    %3962 = vmatprep.subr.mxu0 0.0
    %3963 = vmatpush1.xpose.msra.mxu0 0.0
    %3964 = vmatprep.subr.mxu0 0.0
    %3965 = vmatpush1.xpose.msra.mxu0 0.0
    %3966 = vmatprep.subr.mxu0 0.0
    %3967 = vmatpush1.xpose.msra.mxu0 0.0
    %3968 = vmatprep.subr.mxu0 0.0
    %3969 = vmatpush1.xpose.msra.mxu0 0.0
    %3970 = vmatprep.subr.mxu0 0.0
    %3971 = vmatpush1.xpose.msra.mxu0 0.0
    %3972 = vmatprep.subr.mxu0 0.0
    %3973 = vmatpush1.xpose.msra.mxu0 0.0
    %3974 = vmatprep.subr.mxu0 0.0
    %3975 = vmatpush1.xpose.msra.mxu0 0.0
    %3976 = vmatprep.subr.mxu0 0.0
    %3977 = vmatpush1.xpose.msra.mxu0 0.0
    %3978 = vmatprep.subr.mxu0 0.0
    %3979 = vmatpush1.xpose.msra.mxu0 0.0
    %3980 = vmatprep.subr.mxu0 0.0
    %3981 = vmatpush1.xpose.msra.mxu0 0.0
    %3982 = vmatprep.subr.mxu0 0.0
    %3983 = vmatpush1.xpose.msra.mxu0 0.0
    %3984 = vmatprep.subr.mxu0 0.0
    %3985 = vmatpush1.xpose.msra.mxu0 0.0
    %3986 = vmatprep.subr.mxu0 0.0
    %3987 = vmatpush1.xpose.msra.mxu0 0.0
    %3988 = vmatprep.subr.mxu0 0.0
    %3989 = vmatpush1.xpose.msra.mxu0 0.0
    %3990 = vmatprep.subr.mxu0 0.0
    %3991 = vmatpush1.xpose.msra.mxu0 0.0
    %3992 = vmatprep.subr.mxu0 0.0
    %3993 = vmatpush1.xpose.msra.mxu0 0.0
    %3994 = vmatprep.subr.mxu0 0.0
    %3995 = vmatpush1.xpose.msra.mxu0 0.0
    %3996 = vmatprep.subr.mxu0 0.0
    %3997 = vmatpush1.xpose.msra.mxu0 0.0
    %3998 = vmatprep.subr.mxu0 0.0
    %3999 = vmatpush1.xpose.msra.mxu0 0.0
    %4000 = vmatprep.subr.mxu0 0.0
    %4001 = vmatpush1.xpose.msra.mxu0 0.0
    %4002 = vmatprep.mubr.f32.mxu0 0.0
    %4003 = vmatmul.mubr.f32.gmra.mrb[0].mxu0 %v3936
    %v4004 = vpop.f32.mrb[0].mxu0
    %v4005 = vadd.f32 0.0, %v4004
    %v4006 = vpop.f32.mrb[0].mxu0
    %4007 = vmatprep.mubr.f32.mxu0 0.0
    %4008 = vmatmul.mubr.f32.gmra.mrb[0].mxu0 %v3937
    %v4009 = vpop.f32.mrb[0].mxu0
    %v4010 = vadd.f32 0.0, %v4009
    %v4011 = vpop.f32.mrb[0].mxu0
    %4012 = vdwg.mxu0
    %v4013 = vmul.f32 %v4005, 0.17677669
    %v4014 = vmul.f32 %v4010, 0.17677669
    %v4015 = vlaneseq
    %v4016 = vshrl.u32 %v4015, 7
    %v4017 = vsub.s32 7, %v4016
    %v4018 = vrot.slane %v1105, %v4017
    %v4019 = vlaneseq
    %v4020 = vshrl.u32 %v4019, 7
    %v4021 = vsub.s32 7, %v4020
    %v4022 = vrot.slane %v1106, %v4021
    %v4023 = vmul.f32 %v1107, %v4018
    %v4024 = vmul.f32 %v1108, %v4022
    %v4025 = vmul.f32 %v1109, %v4018
    %v4026 = vmul.f32 %v1110, %v4022
    %4027 = vmatprep.subr.mxu0 0.0
    %4028 = vmatpush1.msra.mxu0 %v1111
    %4029 = vmatprep.subr.mxu0 0.0
    %4030 = vmatpush1.msra.mxu0 %v1112
    %4031 = vmatprep.subr.mxu0 0.0
    %4032 = vmatpush1.msra.mxu0 %v1113
    %4033 = vmatprep.subr.mxu0 0.0
    %4034 = vmatpush1.msra.mxu0 %v1114
    %4035 = vmatprep.subr.mxu0 0.0
    %4036 = vmatpush1.msra.mxu0 %v1115
    %4037 = vmatprep.subr.mxu0 0.0
    %4038 = vmatpush1.msra.mxu0 %v1116
    %4039 = vmatprep.subr.mxu0 0.0
    %4040 = vmatpush1.msra.mxu0 %v1117
    %4041 = vmatprep.subr.mxu0 0.0
    %4042 = vmatpush1.msra.mxu0 %v1118
    %4043 = vmatprep.subr.mxu0 0.0
    %4044 = vmatpush1.msra.mxu0 %v1119
    %4045 = vmatprep.subr.mxu0 0.0
    %4046 = vmatpush1.msra.mxu0 %v1120
    %4047 = vmatprep.subr.mxu0 0.0
    %4048 = vmatpush1.msra.mxu0 %v1121
    %4049 = vmatprep.subr.mxu0 0.0
    %4050 = vmatpush1.msra.mxu0 %v1122
    %4051 = vmatprep.subr.mxu0 0.0
    %4052 = vmatpush1.msra.mxu0 %v1123
    %4053 = vmatprep.subr.mxu0 0.0
    %4054 = vmatpush1.msra.mxu0 %v1124
    %4055 = vmatprep.subr.mxu0 0.0
    %4056 = vmatpush1.msra.mxu0 %v1125
    %4057 = vmatprep.subr.mxu0 0.0
    %4058 = vmatpush1.msra.mxu0 %v1126
    %4059 = vmatprep.subr.mxu0 0.0
    %4060 = vmatpush1.msra.mxu0 %v1127
    %4061 = vmatprep.subr.mxu0 0.0
    %4062 = vmatpush1.msra.mxu0 %v1128
    %4063 = vmatprep.subr.mxu0 0.0
    %4064 = vmatpush1.msra.mxu0 %v1129
    %4065 = vmatprep.subr.mxu0 0.0
    %4066 = vmatpush1.msra.mxu0 %v1130
    %4067 = vmatprep.subr.mxu0 0.0
    %4068 = vmatpush1.msra.mxu0 %v1131
    %4069 = vmatprep.subr.mxu0 0.0
    %4070 = vmatpush1.msra.mxu0 %v1132
    %4071 = vmatprep.subr.mxu0 0.0
    %4072 = vmatpush1.msra.mxu0 %v1133
    %4073 = vmatprep.subr.mxu0 0.0
    %4074 = vmatpush1.msra.mxu0 %v1134
    %4075 = vmatprep.subr.mxu0 0.0
    %4076 = vmatpush1.msra.mxu0 %v1135
    %4077 = vmatprep.subr.mxu0 0.0
    %4078 = vmatpush1.msra.mxu0 %v1136
    %4079 = vmatprep.subr.mxu0 0.0
    %4080 = vmatpush1.msra.mxu0 %v1137
    %4081 = vmatprep.subr.mxu0 0.0
    %4082 = vmatpush1.msra.mxu0 %v1138
    %4083 = vmatprep.subr.mxu0 0.0
    %4084 = vmatpush1.msra.mxu0 %v1139
    %4085 = vmatprep.subr.mxu0 0.0
    %4086 = vmatpush1.msra.mxu0 %v1140
    %4087 = vmatprep.subr.mxu0 0.0
    %4088 = vmatpush1.msra.mxu0 %v1141
    %4089 = vmatprep.subr.mxu0 0.0
    %4090 = vmatpush1.msra.mxu0 %v1142
    %4091 = vmatprep.mubr.f32.mxu0 %v4024
    %4092 = vmatmul.mubr.f32.gmra.mrb[0].mxu0 %v4023
    %v4093 = vpop.f32.mrb[0].mxu0
    %v4094 = vadd.f32 0.0, %v4093
    %v4095 = vpop.f32.mrb[0].mxu0
    %4096 = vmatprep.mubr.f32.mxu0 %v4026
    %4097 = vmatmul.mubr.f32.gmra.mrb[0].mxu0 %v4025
    %v4098 = vpop.f32.mrb[0].mxu0
    %v4099 = vadd.f32 0.0, %v4098
    %v4100 = vpop.f32.mrb[0].mxu0
    %4101 = vdwg.mxu0
    %v4102 = vadd.f32 %v4013, %v4094
    %v4103 = vadd.f32 %v4014, %v4099
    %v4104 = vsel %vm377, %v4102, -inf
    %4105 = vmax.xlane.f32.xlu0 %v4104
    %v4106 = vpop.xlane.xlu0 %4105
    %v4107 = vsel %vm377, %v4103, -inf
    %4108 = vmax.xlane.f32.xlu0 %v4107
    %v4109 = vpop.xlane.xlu0 %4108
    %v4110 = vsub.f32 %v4102, %v4106
    %v4111 = vsub.f32 %v4103, %v4109
    %v4112 = vmul.f32 %v4110, 1.442695
    %v4113 = vpow.pop %v4112
    %v4114 = vmul.f32 %v4111, 1.442695
    %v4115 = vpow.pop %v4114
    %v4116 = vsel %vm377, %v4113, 0.0
    %4117 = vadd.xlane.f32.xlu0 %v4116
    %v4118 = vpop.xlane.xlu0 %4117
    %v4119 = vsel %vm377, %v4115, 0.0
    %4120 = vadd.xlane.f32.xlu0 %v4119
    %v4121 = vpop.xlane.xlu0 %4120
    %v4122 = vrcp.pop %v4118
    %v4123 = vmul.f32 %v4113, %v4122
    %v4124 = vrcp.pop %v4121
    %v4125 = vmul.f32 %v4115, %v4124
    %v4126 = vmul.f32 %v3107, %v1160
    %v4127 = vmul.f32 %v3112, %v1160
    %v4129 = vsel %vm377, %v4123, 0
    %v4132 = vsel %vm377, %v4125, 0
    %4134 = vmatprep.subr.mxu0 0.0
    %4135 = vmatpush1.msra.mxu0 %v4126
    %4136 = vmatprep.subr.mxu0 0.0
    %4137 = vmatpush1.msra.mxu0 %v4127
    %4138 = vmatprep.subr.mxu0 0.0
    %4139 = vmatpush1.msra.mxu0 0.0
    %4140 = vmatprep.subr.mxu0 0.0
    %4141 = vmatpush1.msra.mxu0 0.0
    %4142 = vmatprep.subr.mxu0 0.0
    %4143 = vmatpush1.msra.mxu0 0.0
    %4144 = vmatprep.subr.mxu0 0.0
    %4145 = vmatpush1.msra.mxu0 0.0
    %4146 = vmatprep.subr.mxu0 0.0
    %4147 = vmatpush1.msra.mxu0 0.0
    %4148 = vmatprep.subr.mxu0 0.0
    %4149 = vmatpush1.msra.mxu0 0.0
    %4150 = vmatprep.subr.mxu0 0.0
    %4151 = vmatpush1.msra.mxu0 0.0
    %4152 = vmatprep.subr.mxu0 0.0
    %4153 = vmatpush1.msra.mxu0 0.0
    %4154 = vmatprep.subr.mxu0 0.0
    %4155 = vmatpush1.msra.mxu0 0.0
    %4156 = vmatprep.subr.mxu0 0.0
    %4157 = vmatpush1.msra.mxu0 0.0
    %4158 = vmatprep.subr.mxu0 0.0
    %4159 = vmatpush1.msra.mxu0 0.0
    %4160 = vmatprep.subr.mxu0 0.0
    %4161 = vmatpush1.msra.mxu0 0.0
    %4162 = vmatprep.subr.mxu0 0.0
    %4163 = vmatpush1.msra.mxu0 0.0
    %4164 = vmatprep.subr.mxu0 0.0
    %4165 = vmatpush1.msra.mxu0 0.0
    %4166 = vmatprep.subr.mxu0 0.0
    %4167 = vmatpush1.msra.mxu0 0.0
    %4168 = vmatprep.subr.mxu0 0.0
    %4169 = vmatpush1.msra.mxu0 0.0
    %4170 = vmatprep.subr.mxu0 0.0
    %4171 = vmatpush1.msra.mxu0 0.0
    %4172 = vmatprep.subr.mxu0 0.0
    %4173 = vmatpush1.msra.mxu0 0.0
    %4174 = vmatprep.subr.mxu0 0.0
    %4175 = vmatpush1.msra.mxu0 0.0
    %4176 = vmatprep.subr.mxu0 0.0
    %4177 = vmatpush1.msra.mxu0 0.0
    %4178 = vmatprep.subr.mxu0 0.0
    %4179 = vmatpush1.msra.mxu0 0.0
    %4180 = vmatprep.subr.mxu0 0.0
    %4181 = vmatpush1.msra.mxu0 0.0
    %4182 = vmatprep.subr.mxu0 0.0
    %4183 = vmatpush1.msra.mxu0 0.0
    %4184 = vmatprep.subr.mxu0 0.0
    %4185 = vmatpush1.msra.mxu0 0.0
    %4186 = vmatprep.subr.mxu0 0.0
    %4187 = vmatpush1.msra.mxu0 0.0
    %4188 = vmatprep.subr.mxu0 0.0
    %4189 = vmatpush1.msra.mxu0 0.0
    %4190 = vmatprep.subr.mxu0 0.0
    %4191 = vmatpush1.msra.mxu0 0.0
    %4192 = vmatprep.subr.mxu0 0.0
    %4193 = vmatpush1.msra.mxu0 0.0
    %4194 = vmatprep.subr.mxu0 0.0
    %4195 = vmatpush1.msra.mxu0 0.0
    %4196 = vmatprep.subr.mxu0 0.0
    %4197 = vmatpush1.msra.mxu0 0.0
    %4198 = vmatprep.mubr.f32.mxu0 0.0
    %4199 = vmatmul.mubr.f32.gmra.mrb[0].mxu0 %v4129
    %v4200 = vpop.f32.mrb[0].mxu0
    %v4201 = vadd.f32 0.0, %v4200
    %v4202 = vpop.f32.mrb[0].mxu0
    %4203 = vmatprep.mubr.f32.mxu0 0.0
    %4204 = vmatmul.mubr.f32.gmra.mrb[0].mxu0 %v4132
    %v4205 = vpop.f32.mrb[0].mxu0
    %v4206 = vadd.f32 0.0, %v4205
    %v4207 = vpop.f32.mrb[0].mxu0
    %4208 = vdwg.mxu0
    %v4209 = vadd.f32 %v3934, %v4201
    %v4210 = vadd.f32 %v3935, %v4206
    %s4211 = scalar_lea.vmem %s15, 128
    %v4212 = vld [vmem:[%s4211] sm:$0xff]
    %v4213 = vld [vmem:[%s4211 + $0x8] sm:$0xff]
    %v4214 = vld [vmem:[%s4211 + $0x10] sm:$0xff]
    %v4215 = vld [vmem:[%s4211 + $0x18] sm:$0xff]
    %v4216 = vld [vmem:[%s4211 + $0x20] sm:$0xff]
    %v4217 = vld [vmem:[%s4211 + $0x28] sm:$0xff]
    %v4218 = vld [vmem:[%s4211 + $0x30] sm:$0xff]
    %v4219 = vld [vmem:[%s4211 + $0x38] sm:$0xff]
    %v4220 = vld [vmem:[%s4211 + $0x40] sm:$0xff]
    %v4221 = vld [vmem:[%s4211 + $0x48] sm:$0xff]
    %v4222 = vld [vmem:[%s4211 + $0x50] sm:$0xff]
    %v4223 = vld [vmem:[%s4211 + $0x58] sm:$0xff]
    %v4224 = vld [vmem:[%s4211 + $0x60] sm:$0xff]
    %v4225 = vld [vmem:[%s4211 + $0x68] sm:$0xff]
    %v4226 = vld [vmem:[%s4211 + $0x70] sm:$0xff]
    %v4227 = vld [vmem:[%s4211 + $0x78] sm:$0xff]
    %v4228 = vlaneseq
    %v4229 = vshrl.u32 %v4228, 7
    %v4230 = vsub.s32 5, %v4229
    %v4231 = vrot.slane %v2887, %v4230
    %4232 = vmatprep.subr.mxu0 0.0
    %4233 = vmatpush1.msra.mxu0 %v4212
    %4234 = vmatprep.subr.mxu0 0.0
    %4235 = vmatpush1.msra.mxu0 %v4213
    %4236 = vmatprep.subr.mxu0 0.0
    %4237 = vmatpush1.msra.mxu0 %v4214
    %4238 = vmatprep.subr.mxu0 0.0
    %4239 = vmatpush1.msra.mxu0 %v4215
    %4240 = vmatprep.subr.mxu0 0.0
    %4241 = vmatpush1.msra.mxu0 %v4216
    %4242 = vmatprep.subr.mxu0 0.0
    %4243 = vmatpush1.msra.mxu0 %v4217
    %4244 = vmatprep.subr.mxu0 0.0
    %4245 = vmatpush1.msra.mxu0 %v4218
    %4246 = vmatprep.subr.mxu0 0.0
    %4247 = vmatpush1.msra.mxu0 %v4219
    %4248 = vmatprep.subr.mxu0 0.0
    %4249 = vmatpush1.msra.mxu0 %v4220
    %4250 = vmatprep.subr.mxu0 0.0
    %4251 = vmatpush1.msra.mxu0 %v4221
    %4252 = vmatprep.subr.mxu0 0.0
    %4253 = vmatpush1.msra.mxu0 %v4222
    %4254 = vmatprep.subr.mxu0 0.0
    %4255 = vmatpush1.msra.mxu0 %v4223
    %4256 = vmatprep.subr.mxu0 0.0
    %4257 = vmatpush1.msra.mxu0 %v4224
    %4258 = vmatprep.subr.mxu0 0.0
    %4259 = vmatpush1.msra.mxu0 %v4225
    %4260 = vmatprep.subr.mxu0 0.0
    %4261 = vmatpush1.msra.mxu0 %v4226
    %4262 = vmatprep.subr.mxu0 0.0
    %4263 = vmatpush1.msra.mxu0 %v4227
    %4264 = vmatprep.subr.mxu0 0.0
    %4265 = vmatpush1.msra.mxu0 0.0
    %4266 = vmatprep.subr.mxu0 0.0
    %4267 = vmatpush1.msra.mxu0 0.0
    %4268 = vmatprep.subr.mxu0 0.0
    %4269 = vmatpush1.msra.mxu0 0.0
    %4270 = vmatprep.subr.mxu0 0.0
    %4271 = vmatpush1.msra.mxu0 0.0
    %4272 = vmatprep.subr.mxu0 0.0
    %4273 = vmatpush1.msra.mxu0 0.0
    %4274 = vmatprep.subr.mxu0 0.0
    %4275 = vmatpush1.msra.mxu0 0.0
    %4276 = vmatprep.subr.mxu0 0.0
    %4277 = vmatpush1.msra.mxu0 0.0
    %4278 = vmatprep.subr.mxu0 0.0
    %4279 = vmatpush1.msra.mxu0 0.0
    %4280 = vmatprep.subr.mxu0 0.0
    %4281 = vmatpush1.msra.mxu0 0.0
    %4282 = vmatprep.subr.mxu0 0.0
    %4283 = vmatpush1.msra.mxu0 0.0
    %4284 = vmatprep.subr.mxu0 0.0
    %4285 = vmatpush1.msra.mxu0 0.0
    %4286 = vmatprep.subr.mxu0 0.0
    %4287 = vmatpush1.msra.mxu0 0.0
    %4288 = vmatprep.subr.mxu0 0.0
    %4289 = vmatpush1.msra.mxu0 0.0
    %4290 = vmatprep.subr.mxu0 0.0
    %4291 = vmatpush1.msra.mxu0 0.0
    %4292 = vmatprep.subr.mxu0 0.0
    %4293 = vmatpush1.msra.mxu0 0.0
    %4294 = vmatprep.subr.mxu0 0.0
    %4295 = vmatpush1.msra.mxu0 0.0
    %4296 = vmatprep.mubr.f32.mxu0 0.0
    %4297 = vmatmul.mubr.f32.gmra.mrb[0].mxu0 %v4209
    %v4298 = vpop.f32.mrb[0].mxu0
    %v4299 = vadd.f32 %v4231, %v4298
    %v4300 = vpop.f32.mrb[0].mxu0
    %4301 = vmatprep.mubr.f32.mxu0 0.0
    %4302 = vmatmul.mubr.f32.gmra.mrb[0].mxu0 %v4210
    %v4303 = vpop.f32.mrb[0].mxu0
    %v4304 = vadd.f32 %v4231, %v4303
    %v4305 = vpop.f32.mrb[0].mxu0
    %4306 = vdwg.mxu0
    %v4307 = vadd.f32 %v4299, %v2884
    %v4308 = vadd.f32 %v4304, %v2885
    %v4309 = vsel %vm1337, %v4307, 0.0
    %4310 = vadd.xlane.f32.xlu0 %v4309
    %v4311 = vpop.xlane.xlu0 %4310
    %v4312 = vsel %vm1337, %v4308, 0.0
    %4313 = vadd.xlane.f32.xlu0 %v4312
    %v4314 = vpop.xlane.xlu0 %4313
    %v4315 = vmul.f32 %v4311, %v1344
    %v4316 = vmul.f32 %v4314, %v1344
    %v4317 = vsub.f32 %v4307, %v4315
    %v4318 = vsub.f32 %v4308, %v4316
    %v4319 = vmul.f32 %v4317, %v4317
    %v4320 = vmul.f32 %v4318, %v4318
    %v4321 = vsel %vm1337, %v4319, 0.0
    %4322 = vadd.xlane.f32.xlu0 %v4321
    %v4323 = vpop.xlane.xlu0 %4322
    %v4324 = vsel %vm1337, %v4320, 0.0
    %4325 = vadd.xlane.f32.xlu0 %v4324
    %v4326 = vpop.xlane.xlu0 %4325
    %v4327 = vmul.f32 %v4323, %v1344
    %v4328 = vmul.f32 %v4326, %v1344
    %v4329 = vadd.f32 %v4327, 1e-05
    %v4330 = vadd.f32 %v4328, 1e-05
    %v4331 = vrsqrt.pop %v4329
    %v4332 = vrsqrt.pop %v4330
    %v4333 = vmul.f32 %v4317, %v4331
    %v4334 = vmul.f32 %v4318, %v4332
    %v4335 = vlaneseq
    %v4336 = vshrl.u32 %v4335, 7
    %v4337 = vsub.s32 2, %v4336
    %v4338 = vrot.slane %v2887, %v4337
    %v4339 = vmul.f32 %v4333, %v4338
    %v4340 = vmul.f32 %v4334, %v4338
    %v4341 = vlaneseq
    %v4342 = vshrl.u32 %v4341, 7
    %v4343 = vsub.s32 3, %v4342
    %v4344 = vrot.slane %v2887, %v4343
    %v4345 = vadd.f32 %v4339, %v4344
    %v4346 = vadd.f32 %v4340, %v4344
    %s4347 = scalar_lea.vmem %s17, 32
    %v4348 = vld [vmem:[%s4347] sm:$0xff]
    %v4349 = vld [vmem:[%s4347 + $0x8] sm:$0xff]
    %v4350 = vld [vmem:[%s4347 + $0x10] sm:$0xff]
    %v4351 = vld [vmem:[%s4347 + $0x18] sm:$0xff]
    %v4352 = vlaneseq
    %v4353 = vshrl.u32 %v4352, 7
    %v4354 = vsub.s32 4, %v4353
    %v4355 = vrot.slane %v2887, %v4354
    %v4357 = vsel %vm1337, %v4345, 0
    %v4360 = vsel %vm1337, %v4346, 0
    %4362 = vmatprep.subr.mxu0 0.0
    %4363 = vmatpush1.msra.mxu0 %v4348
    %4364 = vmatprep.subr.mxu0 0.0
    %4365 = vmatpush1.msra.mxu0 %v4349
    %4366 = vmatprep.subr.mxu0 0.0
    %4367 = vmatpush1.msra.mxu0 %v4350
    %4368 = vmatprep.subr.mxu0 0.0
    %4369 = vmatpush1.msra.mxu0 %v4351
    %4370 = vmatprep.subr.mxu0 0.0
    %4371 = vmatpush1.msra.mxu0 0.0
    %4372 = vmatprep.subr.mxu0 0.0
    %4373 = vmatpush1.msra.mxu0 0.0
    %4374 = vmatprep.subr.mxu0 0.0
    %4375 = vmatpush1.msra.mxu0 0.0
    %4376 = vmatprep.subr.mxu0 0.0
    %4377 = vmatpush1.msra.mxu0 0.0
    %4378 = vmatprep.subr.mxu0 0.0
    %4379 = vmatpush1.msra.mxu0 0.0
    %4380 = vmatprep.subr.mxu0 0.0
    %4381 = vmatpush1.msra.mxu0 0.0
    %4382 = vmatprep.subr.mxu0 0.0
    %4383 = vmatpush1.msra.mxu0 0.0
    %4384 = vmatprep.subr.mxu0 0.0
    %4385 = vmatpush1.msra.mxu0 0.0
    %4386 = vmatprep.subr.mxu0 0.0
    %4387 = vmatpush1.msra.mxu0 0.0
    %4388 = vmatprep.subr.mxu0 0.0
    %4389 = vmatpush1.msra.mxu0 0.0
    %4390 = vmatprep.subr.mxu0 0.0
    %4391 = vmatpush1.msra.mxu0 0.0
    %4392 = vmatprep.subr.mxu0 0.0
    %4393 = vmatpush1.msra.mxu0 0.0
    %4394 = vmatprep.subr.mxu0 0.0
    %4395 = vmatpush1.msra.mxu0 0.0
    %4396 = vmatprep.subr.mxu0 0.0
    %4397 = vmatpush1.msra.mxu0 0.0
    %4398 = vmatprep.subr.mxu0 0.0
    %4399 = vmatpush1.msra.mxu0 0.0
    %4400 = vmatprep.subr.mxu0 0.0
    %4401 = vmatpush1.msra.mxu0 0.0
    %4402 = vmatprep.subr.mxu0 0.0
    %4403 = vmatpush1.msra.mxu0 0.0
    %4404 = vmatprep.subr.mxu0 0.0
    %4405 = vmatpush1.msra.mxu0 0.0
    %4406 = vmatprep.subr.mxu0 0.0
    %4407 = vmatpush1.msra.mxu0 0.0
    %4408 = vmatprep.subr.mxu0 0.0
    %4409 = vmatpush1.msra.mxu0 0.0
    %4410 = vmatprep.subr.mxu0 0.0
    %4411 = vmatpush1.msra.mxu0 0.0
    %4412 = vmatprep.subr.mxu0 0.0
    %4413 = vmatpush1.msra.mxu0 0.0
    %4414 = vmatprep.subr.mxu0 0.0
    %4415 = vmatpush1.msra.mxu0 0.0
    %4416 = vmatprep.subr.mxu0 0.0
    %4417 = vmatpush1.msra.mxu0 0.0
    %4418 = vmatprep.subr.mxu0 0.0
    %4419 = vmatpush1.msra.mxu0 0.0
    %4420 = vmatprep.subr.mxu0 0.0
    %4421 = vmatpush1.msra.mxu0 0.0
    %4422 = vmatprep.subr.mxu0 0.0
    %4423 = vmatpush1.msra.mxu0 0.0
    %4424 = vmatprep.subr.mxu0 0.0
    %4425 = vmatpush1.msra.mxu0 0.0
    %4426 = vmatprep.mubr.f32.mxu0 0.0
    %4427 = vmatmul.mubr.f32.gmra.mrb[0].mxu0 %v4357
    %v4428 = vpop.f32.mrb[0].mxu0
    %v4429 = vadd.f32 %v4355, %v4428
    %v4430 = vpop.f32.mrb[0].mxu0
    %4431 = vmatprep.mubr.f32.mxu0 0.0
    %4432 = vmatmul.mubr.f32.gmra.mrb[0].mxu0 %v4360
    %v4433 = vpop.f32.mrb[0].mxu0
    %v4434 = vadd.f32 %v4355, %v4433
    %v4435 = vpop.f32.mrb[0].mxu0
    %4436 = vdwg.mxu0
    %v4437 = vadd.f32 %v4429, %v4307
    %v4438 = vadd.f32 %v4434, %v4308
    %v4439 = vsel %vm1337, %v4437, 0.0
    %v4440 = vsel %vm1337, %v4438, 0.0
    %v4441 = vadd.f32 %v4439, %v4440
    %v4442 = vrot.slane %v4441, 4
    %v4443 = vadd.f32 %v4441, %v4442
    %v4444 = vrot.slane %v4443, 2
    %v4445 = vadd.f32 %v4443, %v4444
    %v4446 = vrot.slane %v4445, 1
    %v4447 = vadd.f32 %v4445, %v4446
    %v4448 = vrcp.pop 16.0
    %v4449 = vmul.f32 %v4447, %v4448
    %v4450 = vld [vmem:[%s18] sm:$0xff]
    %v4451 = vld [vmem:[%s18 + $0x8] sm:$0xff]
    %v4452 = vld [vmem:[%s18 + $0x10] sm:$0xff]
    %v4453 = vld [vmem:[%s18 + $0x18] sm:$0xff]
    %v4454 = vld [vmem:[%s19] sm:$0x1]
    %v4456 = vsel %vm1337, %v4449, 0
    %4458 = vmatprep.subr.mxu0 0.0
    %4459 = vmatpush1.msra.mxu0 %v4450
    %4460 = vmatprep.subr.mxu0 0.0
    %4461 = vmatpush1.msra.mxu0 %v4451
    %4462 = vmatprep.subr.mxu0 0.0
    %4463 = vmatpush1.msra.mxu0 %v4452
    %4464 = vmatprep.subr.mxu0 0.0
    %4465 = vmatpush1.msra.mxu0 %v4453
    %4466 = vmatprep.subr.mxu0 0.0
    %4467 = vmatpush1.msra.mxu0 0.0
    %4468 = vmatprep.subr.mxu0 0.0
    %4469 = vmatpush1.msra.mxu0 0.0
    %4470 = vmatprep.subr.mxu0 0.0
    %4471 = vmatpush1.msra.mxu0 0.0
    %4472 = vmatprep.subr.mxu0 0.0
    %4473 = vmatpush1.msra.mxu0 0.0
    %4474 = vmatprep.subr.mxu0 0.0
    %4475 = vmatpush1.msra.mxu0 0.0
    %4476 = vmatprep.subr.mxu0 0.0
    %4477 = vmatpush1.msra.mxu0 0.0
    %4478 = vmatprep.subr.mxu0 0.0
    %4479 = vmatpush1.msra.mxu0 0.0
    %4480 = vmatprep.subr.mxu0 0.0
    %4481 = vmatpush1.msra.mxu0 0.0
    %4482 = vmatprep.subr.mxu0 0.0
    %4483 = vmatpush1.msra.mxu0 0.0
    %4484 = vmatprep.subr.mxu0 0.0
    %4485 = vmatpush1.msra.mxu0 0.0
    %4486 = vmatprep.subr.mxu0 0.0
    %4487 = vmatpush1.msra.mxu0 0.0
    %4488 = vmatprep.subr.mxu0 0.0
    %4489 = vmatpush1.msra.mxu0 0.0
    %4490 = vmatprep.subr.mxu0 0.0
    %4491 = vmatpush1.msra.mxu0 0.0
    %4492 = vmatprep.subr.mxu0 0.0
    %4493 = vmatpush1.msra.mxu0 0.0
    %4494 = vmatprep.subr.mxu0 0.0
    %4495 = vmatpush1.msra.mxu0 0.0
    %4496 = vmatprep.subr.mxu0 0.0
    %4497 = vmatpush1.msra.mxu0 0.0
    %4498 = vmatprep.subr.mxu0 0.0
    %4499 = vmatpush1.msra.mxu0 0.0
    %4500 = vmatprep.subr.mxu0 0.0
    %4501 = vmatpush1.msra.mxu0 0.0
    %4502 = vmatprep.subr.mxu0 0.0
    %4503 = vmatpush1.msra.mxu0 0.0
    %4504 = vmatprep.subr.mxu0 0.0
    %4505 = vmatpush1.msra.mxu0 0.0
    %4506 = vmatprep.subr.mxu0 0.0
    %4507 = vmatpush1.msra.mxu0 0.0
    %4508 = vmatprep.subr.mxu0 0.0
    %4509 = vmatpush1.msra.mxu0 0.0
    %4510 = vmatprep.subr.mxu0 0.0
    %4511 = vmatpush1.msra.mxu0 0.0
    %4512 = vmatprep.subr.mxu0 0.0
    %4513 = vmatpush1.msra.mxu0 0.0
    %4514 = vmatprep.subr.mxu0 0.0
    %4515 = vmatpush1.msra.mxu0 0.0
    %4516 = vmatprep.subr.mxu0 0.0
    %4517 = vmatpush1.msra.mxu0 0.0
    %4518 = vmatprep.subr.mxu0 0.0
    %4519 = vmatpush1.msra.mxu0 0.0
    %4520 = vmatprep.subr.mxu0 0.0
    %4521 = vmatpush1.msra.mxu0 0.0
    %4522 = vmatprep.mubr.f32.mxu0 0.0
    %4523 = vmatmul.mubr.f32.gmra.mrb[0].mxu0 %v4456
    %v4524 = vpop.f32.mrb[0].mxu0
    %v4525 = vadd.f32 %v4454, %v4524
    %v4526 = vpop.f32.mrb[0].mxu0
    %4527 = vdwg.mxu0
    %vm4528 = vcmask 57344
    %4529 = vst.msk [vmem:[#allocation7] sm:$0x1] %vm4528, %v4525
    // Predicated region
    $region90: #{graphormer_forward.1} parent=1 // pred_check
      _
    $region91: #{graphormer_forward.1} parent=1 // pred_check_branch
      %4531 = sbr.rel (0) target = $region93
    $region92: #{graphormer_forward.1} parent=1 // pred_region
      %s4533 = ssub.s32 16, 16
      %4534 = vsyncadd [#allocation4], %s4533
      %s4536 = sshll.u32 [#allocation7], 4
      %s4537 = int_to_ptr.vmem [resolvable:$true] %s4536
      %4539 = dma.vmem_to_hbm [thread:$0]  %s4537, 16, %s20, [#allocation4]
    $region93: #{graphormer_forward.1} parent=1 // pred_fallthru
      _
    // Predicated region
    $region94: #{graphormer_forward.1} parent=1 // pred_check
      _
    $region95: #{graphormer_forward.1} parent=1 // pred_check_branch
      %4541 = sbr.rel (0) target = $region97
    $region96: #{graphormer_forward.1} parent=1 // pred_region
      %4542 = dma.done [#allocation4], 16
    $region97: #{graphormer_forward.1} parent=1 // pred_fallthru
      _
    %4543 = vsyncpa [#allocation3], 1
    %4544 = vsyncpa [#allocation6], 1
    %4545 = vsyncpa [#allocation4], 1

</llo_original>
